<compile_context>
chip_gen: v6e
topology: v6e:2x2x1
jax: 0.10.0
libtpu: 0.0.40
codegen_flags: <defaults>
</compile_context>

<pallas_src>
import functools

import numpy as np
import jax
import jax.numpy as jnp
from jax.experimental import pallas as pl
from jax.experimental.pallas import tpu as pltpu

BN_EPS = 1e-5


# ------------------------------ fused Pallas kernel ----------------------------

def _bn_relu_rows(a, gamma, beta, eps):
    """a: (M, C); gamma/beta: (1, C). BatchNorm over all positions (axis 0) + ReLU."""
    inv_m = 1.0 / a.shape[0]
    mean = jnp.sum(a, axis=0, keepdims=True) * inv_m
    var = jnp.maximum(jnp.sum(a * a, axis=0, keepdims=True) * inv_m - mean * mean, 0.0)
    scale = jax.lax.rsqrt(var + eps) * gamma
    shift = beta - mean * scale
    return jnp.maximum(a * scale + shift, 0.0)


def _bn_relu_cols(a, gamma, beta, eps):
    """a: (C, M); gamma/beta: (C, 1). BatchNorm over all positions (axis 1) + ReLU."""
    inv_m = 1.0 / a.shape[1]
    mean = jnp.sum(a, axis=1, keepdims=True) * inv_m
    var = jnp.maximum(jnp.sum(a * a, axis=1, keepdims=True) * inv_m - mean * mean, 0.0)
    scale = jax.lax.rsqrt(var + eps) * gamma
    shift = beta - mean * scale
    return jnp.maximum(a * scale + shift, 0.0)


def _fused_dcgen_kernel(x_ref, w_ref, gbr_ref, gbc_ref, o_ref, *, plan, eps):
    # x_ref:   (M0, Cin)  positions on sublanes, channels on lanes
    # w_ref:   packed per-tap weights, sliced statically per layer
    # gbr_ref: (R, Cmax)  gamma/beta rows for early (position-major) layers
    # gbc_ref: (8, 8)     gamma/beta columns for late layers + final bias
    # o_ref:   (2, M_final/2)  rows = last-layer tap, cols = previous position index
    a = x_ref[...]

    for lyr in plan:
        mode = lyr["mode"]
        cin, cout = lyr["cin"], lyr["cout"]

        if mode == "mc":
            # (M, Cin) @ (Cin, Cout) per tap; fold taps on the sublane (position) axis.
            w0 = w_ref[lyr["w0"]:lyr["w0"] + cin, 0:cout]
            w1 = w_ref[lyr["w1"]:lyr["w1"] + cin, 0:cout]
            y0 = jnp.dot(a, w0, preferred_element_type=jnp.float32)
            y1 = jnp.dot(a, w1, preferred_element_type=jnp.float32)
            a = jnp.concatenate([y0, y1], axis=0)                 # (2M, Cout)
            g = gbr_ref[lyr["grow"]:lyr["grow"] + 1, 0:cout]       # (1, Cout)
            b = gbr_ref[lyr["brow"]:lyr["brow"] + 1, 0:cout]
            a = _bn_relu_rows(a, g, b, eps)

        elif mode == "cm_t":
            # Layout crossover: a is still (M, Cin); contract its lane (channel)
            # axis directly (transposed-RHS matmul) so the result comes out
            # (Cout, M) with positions on lanes — no explicit transpose needed.
            w0 = w_ref[lyr["w0"]:lyr["w0"] + cout, 0:cin]          # (Cout, Cin)
            w1 = w_ref[lyr["w1"]:lyr["w1"] + cout, 0:cin]
            dn = (((1,), (1,)), ((), ()))
            y0 = jax.lax.dot_general(w0, a, dn, preferred_element_type=jnp.float32)
            y1 = jax.lax.dot_general(w1, a, dn, preferred_element_type=jnp.float32)
            a = jnp.concatenate([y0, y1], axis=1)                  # (Cout, 2M), M >= 128
            g = gbc_ref[0:cout, lyr["gcol"]:lyr["gcol"] + 1]       # (Cout, 1)
            b = gbc_ref[0:cout, lyr["bcol"]:lyr["bcol"] + 1]
            a = _bn_relu_cols(a, g, b, eps)

        elif mode == "cm":
            # (Cout, Cin) @ (Cin, M) per tap; fold taps on the lane (position) axis.
            w0 = w_ref[lyr["w0"]:lyr["w0"] + cout, 0:cin]
            w1 = w_ref[lyr["w1"]:lyr["w1"] + cout, 0:cin]
            y0 = jnp.dot(w0, a, preferred_element_type=jnp.float32)
            y1 = jnp.dot(w1, a, preferred_element_type=jnp.float32)
            a = jnp.concatenate([y0, y1], axis=1)                  # (Cout, 2M), halves lane-aligned
            g = gbc_ref[0:cout, lyr["gcol"]:lyr["gcol"] + 1]
            b = gbc_ref[0:cout, lyr["bcol"]:lyr["bcol"] + 1]
            a = _bn_relu_cols(a, g, b, eps)

        else:  # "final": both taps packed on the output-row axis of ONE matmul.
            w = w_ref[lyr["w0"]:lyr["w0"] + 2 * cout, 0:cin]       # (2, Cin)  (cout == 1)
            bias = gbc_ref[0:2, lyr["bcol"]:lyr["bcol"] + 1]       # (2, 1), same value both rows
            y = jnp.dot(w, a, preferred_element_type=jnp.float32)  # (2, M) rows = final tap
            o_ref[...] = jnp.tanh(y + bias)


# ------------------------------ static plan / packing ---------------------------

def _pad8(r):
    return ((r + 7) // 8) * 8


def build_plan(channels, m0):
    """Static per-layer schedule: layouts, packed-weight offsets, param locations."""
    num_layers = len(channels) - 1
    assert channels[-1] == 1, "final ConvTranspose1d must have a single output channel"

    # Crossover: first layer whose input position count is a multiple of 128, so the
    # lane-axis tap fold after it (and after every later layer) is lane-tile aligned.
    m = m0
    crossover = None
    for i in range(num_layers - 1):
        if m % 128 == 0:
            crossover = i
            break
        m *= 2
    if crossover is None:
        crossover = num_layers - 2

    plan = []
    w_off, w_cols = 0, 1
    grow, gbr_cols = 0, 1
    gcol, gbc_rows = 0, 2   # final bias occupies rows 0..1 of its column
    for i in range(num_layers):
        cin, cout = channels[i], channels[i + 1]
        if i == num_layers - 1:
            plan.append(dict(mode="final", cin=cin, cout=cout, w0=w_off, bcol=gcol))
            w_off += _pad8(2 * cout)
            w_cols = max(w_cols, cin)
            gcol += 1
        elif i < crossover:
            plan.append(dict(mode="mc", cin=cin, cout=cout,
                             w0=w_off, w1=w_off + _pad8(cin),
                             grow=grow, brow=grow + 1))
            w_off += 2 * _pad8(cin)
            w_cols = max(w_cols, cout)
            gbr_cols = max(gbr_cols, cout)
            grow += 2
        else:
            mode = "cm_t" if i == crossover else "cm"
            plan.append(dict(mode=mode, cin=cin, cout=cout,
                             w0=w_off, w1=w_off + _pad8(cout),
                             gcol=gcol, bcol=gcol + 1))
            w_off += 2 * _pad8(cout)
            w_cols = max(w_cols, cin)
            gbc_rows = max(gbc_rows, cout)
            gcol += 2

    shapes = dict(
        w=(w_off, max(w_cols, 128)),
        gbr=(_pad8(max(grow, 1)), max(gbr_cols, 128)),
        gbc=(_pad8(gbc_rows), max(_pad8(gcol), 8)),
    )
    return tuple(plan), shapes


def prepare_params(params, plan, shapes):
    """Pack all weights / gamma / beta / final bias into 3 lane-friendly buffers.
    Conv biases of BN layers are dropped (BN mean subtraction cancels them)."""
    wbuf = np.zeros(shapes["w"], np.float32)
    gbr = np.zeros(shapes["gbr"], np.float32)
    gbc = np.zeros(shapes["gbc"], np.float32)

    for lyr, p in zip(plan, params):
        mode = lyr["mode"]
        cin, cout = lyr["cin"], lyr["cout"]
        if mode == "final":
            w, b = (np.asarray(t, np.float32) for t in p)
            packed = np.transpose(w, (2, 1, 0)).reshape(2 * cout, cin)  # row = tap (cout==1)
            wbuf[lyr["w0"]:lyr["w0"] + 2 * cout, :cin] = packed
            gbc[0:2, lyr["bcol"]] = b[0]
        else:
            w, _b, gamma, beta = (np.asarray(t, np.float32) for t in p)
            if mode == "mc":
                wbuf[lyr["w0"]:lyr["w0"] + cin, :cout] = w[:, :, 0]
                wbuf[lyr["w1"]:lyr["w1"] + cin, :cout] = w[:, :, 1]
                gbr[lyr["grow"], :cout] = gamma
                gbr[lyr["brow"], :cout] = beta
            else:  # "cm" / "cm_t": per-tap (Cout, Cin)
                wbuf[lyr["w0"]:lyr["w0"] + cout, :cin] = w[:, :, 0].T
                wbuf[lyr["w1"]:lyr["w1"] + cout, :cin] = w[:, :, 1].T
                gbc[0:cout, lyr["gcol"]] = gamma
                gbc[0:cout, lyr["bcol"]] = beta

    return jnp.asarray(wbuf), jnp.asarray(gbr), jnp.asarray(gbc)


def build_unpermute_index(n, l0, num_layers):
    """Gather index mapping true output (n, l) -> flat kernel position index."""
    m0 = n * l0
    L = num_layers
    l_final = l0 * (1 << L)
    l = np.arange(l_final)
    base = l >> L                          # original l0
    rem = l & ((1 << L) - 1)               # tap bits, layer-1 tap most significant
    col = base.copy()
    for k in range(1, L + 1):
        tap_k = (rem >> (L - k)) & 1
        col = col + tap_k * ((1 << (k - 1)) * m0)
    idx = col[None, :] + (np.arange(n) * l0)[:, None]
    return idx.astype(np.int32)


# ------------------------------ wrapper ------------------------------------------

def make_dc_generator_forward(plan, n, cin, l0, num_layers):
    m0 = n * l0
    m_half = m0 * (1 << (num_layers - 1))      # output columns (positions before last fold)
    l_final = l0 * (1 << num_layers)
    idx = jnp.asarray(build_unpermute_index(n, l0, num_layers))   # (n, l_final)

    kernel = functools.partial(_fused_dcgen_kernel, plan=plan, eps=BN_EPS)
    vspec = pl.BlockSpec(memory_space=pltpu.MemorySpace.VMEM)

    @jax.jit
    def forward(x, wbuf, gb_rows, gb_cols):
        # NCL -> (positions, channels); tiny one-off transform on 16 floats.
        a0 = jnp.transpose(x, (0, 2, 1)).reshape(m0, cin)
        out = pl.pallas_call(
            kernel,
            out_shape=jax.ShapeDtypeStruct((2, m_half), jnp.float32),
            in_specs=[vspec, vspec, vspec, vspec],
            out_specs=vspec,
        )(a0, wbuf, gb_rows, gb_cols)
        # Single precomputed gather maps tap-major position order back to NCL.
        y = jnp.take(out.reshape(-1), idx, axis=0)                # (n, l_final)
        return y[:, None, :].reshape(n, 1, l_final)

    return forward


# ------------------------------ parameters ---------------------------------------

def make_params(channels, key):
    """PyTorch-like parameters: W of shape (Cin, Cout, K=2), per-layer bias,
    plus (gamma, beta) for the 8 hidden BatchNorm layers."""
    params = []
    for i in range(len(channels) - 1):
        cin, cout = channels[i], channels[i + 1]
        key, kw, kb, kg, kbt = jax.random.split(key, 5)
        w = 0.1 * jax.random.normal(kw, (cin, cout, 2), jnp.float32)
        b = 0.05 * jax.random.normal(kb, (cout,), jnp.float32)
        if i < len(channels) - 2:
            gamma = 1.0 + 0.1 * jax.random.normal(kg, (cout,), jnp.float32)
            beta = 0.05 * jax.random.normal(kbt, (cout,), jnp.float32)
            params.append((w, b, gamma, beta))
        else:
            params.append((w, b))
    return params


# ------------------------------ pure-JAX reference --------------------------------

def _ref_layer(x, w, b):
    n, cin, l = x.shape
    cout = w.shape[1]
    y0 = jnp.einsum('ncl,co->nol', x, w[:, :, 0]) + b[None, :, None]
    y1 = jnp.einsum('ncl,co->nol', x, w[:, :, 1]) + b[None, :, None]
    return jnp.stack([y0, y1], axis=-1).reshape(n, cout, 2 * l)


def _ref_bn_relu(y, gamma, beta):
    mean = jnp.mean(y, axis=(0, 2), keepdims=True)
    var = jnp.mean((y - mean) ** 2, axis=(0, 2), keepdims=True)
    yn = (y - mean) / jnp.sqrt(var + BN_EPS)
    return jnp.maximum(yn * gamma[None, :, None] + beta[None, :, None], 0.0)


def reference_forward(x, params):
    for w, b, gamma, beta in params[:-1]:
        x = _ref_bn_relu(_ref_layer(x, w, b), gamma, beta)
    w, b = params[-1]
    return jnp.tanh(_ref_layer(x, w, b))


# ----------------------------------- main -----------------------------------------

if __name__ == "__main__":
    ngf = 2
    noise_dims = 4
    batch, length = 2, 2     # length doubles 9x -> final (2, 1, 1024)

    channels = [noise_dims, 128 * ngf, 64 * ngf, 32 * ngf, 16 * ngf,
                8 * ngf, 4 * ngf, 2 * ngf, 1 * ngf, 1]
    num_layers = len(channels) - 1

    key = jax.random.PRNGKey(0)
    key, kx = jax.random.split(key)
    x = jax.random.normal(kx, (batch, noise_dims, length), jnp.float32)

    params = make_params(channels, key)
    plan, shapes = build_plan(channels, batch * length)
    wbuf, gb_rows, gb_cols = prepare_params(params, plan, shapes)

    forward = make_dc_generator_forward(plan, batch, noise_dims, length, num_layers)
    out = jax.block_until_ready(forward(x, wbuf, gb_rows, gb_cols))
    ref = jax.block_until_ready(reference_forward(x, params))

    assert out.shape == (batch, 1, length * 2 ** num_layers), out.shape
    assert bool(jnp.all(jnp.isfinite(out)))
    max_err = float(jnp.max(jnp.abs(out - ref)))
    assert jnp.allclose(out, ref, rtol=1e-4, atol=1e-4), max_err

    print("KERNEL_OK")
</pallas_src>

<mosaic_0001>
module attributes {stable_mosaic.version = 11 : i64} {
  func.func @_fused_dcgen_kernel(%arg0: memref<4x4xf32, #tpu.memory_space<vmem>>, %arg1: memref<1032x256xf32, #tpu.memory_space<vmem>>, %arg2: memref<16x256xf32, #tpu.memory_space<vmem>>, %arg3: memref<8x8xf32, #tpu.memory_space<vmem>>, %arg4: memref<2x1024xf32, #tpu.memory_space<vmem>>) attributes {dimension_semantics = [], scalar_prefetch = 0 : i64, scratch_operands = 0 : i64, tpu.core_type = #tpu.core_type<tc>} {
    %c0 = arith.constant 0 : index
    %c0_0 = arith.constant 0 : index
    %0 = vector.load %arg0[%c0, %c0_0] : memref<4x4xf32, #tpu.memory_space<vmem>>, vector<4x4xf32>
    %c0_1 = arith.constant 0 : index
    %c0_2 = arith.constant 0 : index
    %1 = vector.load %arg1[%c0_1, %c0_2] : memref<1032x256xf32, #tpu.memory_space<vmem>>, vector<4x256xf32>
    %c8 = arith.constant 8 : index
    %c0_3 = arith.constant 0 : index
    %2 = vector.load %arg1[%c8, %c0_3] : memref<1032x256xf32, #tpu.memory_space<vmem>>, vector<4x256xf32>
    %cst = arith.constant dense<0.000000e+00> : vector<4x256xf32>
    %3 = tpu.matmul %0, %1, %cst {dimension_numbers = #tpu.dot_dimension_numbers<[1], [0], [0], [1], [0, 0, 1, 1], [], []>} : vector<4x4xf32>, vector<4x256xf32>, vector<4x256xf32> -> vector<4x256xf32>
    %cst_4 = arith.constant dense<0.000000e+00> : vector<4x256xf32>
    %4 = tpu.matmul %0, %2, %cst_4 {dimension_numbers = #tpu.dot_dimension_numbers<[1], [0], [0], [1], [0, 0, 1, 1], [], []>} : vector<4x4xf32>, vector<4x256xf32>, vector<4x256xf32> -> vector<4x256xf32>
    %5 = tpu.concatenate %3, %4 in 0 : vector<4x256xf32>, vector<4x256xf32> -> vector<8x256xf32>
    %c0_5 = arith.constant 0 : index
    %c0_6 = arith.constant 0 : index
    %6 = vector.load %arg2[%c0_5, %c0_6] : memref<16x256xf32, #tpu.memory_space<vmem>>, vector<1x256xf32>
    %c1 = arith.constant 1 : index
    %c0_7 = arith.constant 0 : index
    %7 = vector.load %arg2[%c1, %c0_7] : memref<16x256xf32, #tpu.memory_space<vmem>>, vector<1x256xf32>
    %cst_8 = arith.constant dense<0.000000e+00> : vector<256xf32>
    %8 = vector.multi_reduction <add>, %5, %cst_8 [0] : vector<8x256xf32> to vector<256xf32>
    %9 = vector.shape_cast %8 : vector<256xf32> to vector<1x256xf32>
    %cst_9 = arith.constant 1.250000e-01 : f32
    %10 = vector.broadcast %cst_9 : f32 to vector<1x256xf32>
    %11 = arith.mulf %9, %10 : vector<1x256xf32>
    %12 = arith.mulf %5, %5 : vector<8x256xf32>
    %cst_10 = arith.constant dense<0.000000e+00> : vector<256xf32>
    %13 = vector.multi_reduction <add>, %12, %cst_10 [0] : vector<8x256xf32> to vector<256xf32>
    %14 = vector.shape_cast %13 : vector<256xf32> to vector<1x256xf32>
    %cst_11 = arith.constant 1.250000e-01 : f32
    %15 = vector.broadcast %cst_11 : f32 to vector<1x256xf32>
    %16 = arith.mulf %14, %15 : vector<1x256xf32>
    %17 = arith.mulf %11, %11 : vector<1x256xf32>
    %18 = arith.subf %16, %17 : vector<1x256xf32>
    %cst_12 = arith.constant 0.000000e+00 : f32
    %19 = vector.broadcast %cst_12 : f32 to vector<1x256xf32>
    %20 = arith.maximumf %18, %19 : vector<1x256xf32>
    %cst_13 = arith.constant 9.99999974E-6 : f32
    %21 = vector.broadcast %cst_13 : f32 to vector<1x256xf32>
    %22 = arith.addf %20, %21 : vector<1x256xf32>
    %23 = math.rsqrt %22 : vector<1x256xf32>
    %24 = arith.mulf %23, %6 : vector<1x256xf32>
    %25 = arith.mulf %11, %24 : vector<1x256xf32>
    %26 = arith.subf %7, %25 : vector<1x256xf32>
    %27 = vector.broadcast %24 : vector<1x256xf32> to vector<8x256xf32>
    %28 = arith.mulf %5, %27 : vector<8x256xf32>
    %29 = vector.broadcast %26 : vector<1x256xf32> to vector<8x256xf32>
    %30 = arith.addf %28, %29 : vector<8x256xf32>
    %cst_14 = arith.constant 0.000000e+00 : f32
    %31 = vector.broadcast %cst_14 : f32 to vector<8x256xf32>
    %32 = arith.maximumf %30, %31 : vector<8x256xf32>
    %c16 = arith.constant 16 : index
    %c0_15 = arith.constant 0 : index
    %33 = vector.load %arg1[%c16, %c0_15] : memref<1032x256xf32, #tpu.memory_space<vmem>>, vector<256x128xf32>
    %c272 = arith.constant 272 : index
    %c0_16 = arith.constant 0 : index
    %34 = vector.load %arg1[%c272, %c0_16] : memref<1032x256xf32, #tpu.memory_space<vmem>>, vector<256x128xf32>
    %cst_17 = arith.constant dense<0.000000e+00> : vector<8x128xf32>
    %35 = tpu.matmul %32, %33, %cst_17 {dimension_numbers = #tpu.dot_dimension_numbers<[1], [0], [0], [1], [0, 0, 1, 1], [], []>} : vector<8x256xf32>, vector<256x128xf32>, vector<8x128xf32> -> vector<8x128xf32>
    %cst_18 = arith.constant dense<0.000000e+00> : vector<8x128xf32>
    %36 = tpu.matmul %32, %34, %cst_18 {dimension_numbers = #tpu.dot_dimension_numbers<[1], [0], [0], [1], [0, 0, 1, 1], [], []>} : vector<8x256xf32>, vector<256x128xf32>, vector<8x128xf32> -> vector<8x128xf32>
    %37 = tpu.concatenate %35, %36 in 0 : vector<8x128xf32>, vector<8x128xf32> -> vector<16x128xf32>
    %c2 = arith.constant 2 : index
    %c0_19 = arith.constant 0 : index
    %38 = vector.load %arg2[%c2, %c0_19] : memref<16x256xf32, #tpu.memory_space<vmem>>, vector<1x128xf32>
    %c3 = arith.constant 3 : index
    %c0_20 = arith.constant 0 : index
    %39 = vector.load %arg2[%c3, %c0_20] : memref<16x256xf32, #tpu.memory_space<vmem>>, vector<1x128xf32>
    %cst_21 = arith.constant dense<0.000000e+00> : vector<128xf32>
    %40 = vector.multi_reduction <add>, %37, %cst_21 [0] : vector<16x128xf32> to vector<128xf32>
    %41 = vector.shape_cast %40 : vector<128xf32> to vector<1x128xf32>
    %cst_22 = arith.constant 6.250000e-02 : f32
    %42 = vector.broadcast %cst_22 : f32 to vector<1x128xf32>
    %43 = arith.mulf %41, %42 : vector<1x128xf32>
    %44 = arith.mulf %37, %37 : vector<16x128xf32>
    %cst_23 = arith.constant dense<0.000000e+00> : vector<128xf32>
    %45 = vector.multi_reduction <add>, %44, %cst_23 [0] : vector<16x128xf32> to vector<128xf32>
    %46 = vector.shape_cast %45 : vector<128xf32> to vector<1x128xf32>
    %cst_24 = arith.constant 6.250000e-02 : f32
    %47 = vector.broadcast %cst_24 : f32 to vector<1x128xf32>
    %48 = arith.mulf %46, %47 : vector<1x128xf32>
    %49 = arith.mulf %43, %43 : vector<1x128xf32>
    %50 = arith.subf %48, %49 : vector<1x128xf32>
    %cst_25 = arith.constant 0.000000e+00 : f32
    %51 = vector.broadcast %cst_25 : f32 to vector<1x128xf32>
    %52 = arith.maximumf %50, %51 : vector<1x128xf32>
    %cst_26 = arith.constant 9.99999974E-6 : f32
    %53 = vector.broadcast %cst_26 : f32 to vector<1x128xf32>
    %54 = arith.addf %52, %53 : vector<1x128xf32>
    %55 = math.rsqrt %54 : vector<1x128xf32>
    %56 = arith.mulf %55, %38 : vector<1x128xf32>
    %57 = arith.mulf %43, %56 : vector<1x128xf32>
    %58 = arith.subf %39, %57 : vector<1x128xf32>
    %59 = vector.broadcast %56 : vector<1x128xf32> to vector<16x128xf32>
    %60 = arith.mulf %37, %59 : vector<16x128xf32>
    %61 = vector.broadcast %58 : vector<1x128xf32> to vector<16x128xf32>
    %62 = arith.addf %60, %61 : vector<16x128xf32>
    %cst_27 = arith.constant 0.000000e+00 : f32
    %63 = vector.broadcast %cst_27 : f32 to vector<16x128xf32>
    %64 = arith.maximumf %62, %63 : vector<16x128xf32>
    %c528 = arith.constant 528 : index
    %c0_28 = arith.constant 0 : index
    %65 = vector.load %arg1[%c528, %c0_28] : memref<1032x256xf32, #tpu.memory_space<vmem>>, vector<128x64xf32>
    %c656 = arith.constant 656 : index
    %c0_29 = arith.constant 0 : index
    %66 = vector.load %arg1[%c656, %c0_29] : memref<1032x256xf32, #tpu.memory_space<vmem>>, vector<128x64xf32>
    %cst_30 = arith.constant dense<0.000000e+00> : vector<16x64xf32>
    %67 = tpu.matmul %64, %65, %cst_30 {dimension_numbers = #tpu.dot_dimension_numbers<[1], [0], [0], [1], [0, 0, 1, 1], [], []>} : vector<16x128xf32>, vector<128x64xf32>, vector<16x64xf32> -> vector<16x64xf32>
    %cst_31 = arith.constant dense<0.000000e+00> : vector<16x64xf32>
    %68 = tpu.matmul %64, %66, %cst_31 {dimension_numbers = #tpu.dot_dimension_numbers<[1], [0], [0], [1], [0, 0, 1, 1], [], []>} : vector<16x128xf32>, vector<128x64xf32>, vector<16x64xf32> -> vector<16x64xf32>
    %69 = tpu.concatenate %67, %68 in 0 : vector<16x64xf32>, vector<16x64xf32> -> vector<32x64xf32>
    %c4 = arith.constant 4 : index
    %c0_32 = arith.constant 0 : index
    %70 = vector.load %arg2[%c4, %c0_32] : memref<16x256xf32, #tpu.memory_space<vmem>>, vector<1x64xf32>
    %c5 = arith.constant 5 : index
    %c0_33 = arith.constant 0 : index
    %71 = vector.load %arg2[%c5, %c0_33] : memref<16x256xf32, #tpu.memory_space<vmem>>, vector<1x64xf32>
    %cst_34 = arith.constant dense<0.000000e+00> : vector<64xf32>
    %72 = vector.multi_reduction <add>, %69, %cst_34 [0] : vector<32x64xf32> to vector<64xf32>
    %73 = vector.shape_cast %72 : vector<64xf32> to vector<1x64xf32>
    %cst_35 = arith.constant 3.125000e-02 : f32
    %74 = vector.broadcast %cst_35 : f32 to vector<1x64xf32>
    %75 = arith.mulf %73, %74 : vector<1x64xf32>
    %76 = arith.mulf %69, %69 : vector<32x64xf32>
    %cst_36 = arith.constant dense<0.000000e+00> : vector<64xf32>
    %77 = vector.multi_reduction <add>, %76, %cst_36 [0] : vector<32x64xf32> to vector<64xf32>
    %78 = vector.shape_cast %77 : vector<64xf32> to vector<1x64xf32>
    %cst_37 = arith.constant 3.125000e-02 : f32
    %79 = vector.broadcast %cst_37 : f32 to vector<1x64xf32>
    %80 = arith.mulf %78, %79 : vector<1x64xf32>
    %81 = arith.mulf %75, %75 : vector<1x64xf32>
    %82 = arith.subf %80, %81 : vector<1x64xf32>
    %cst_38 = arith.constant 0.000000e+00 : f32
    %83 = vector.broadcast %cst_38 : f32 to vector<1x64xf32>
    %84 = arith.maximumf %82, %83 : vector<1x64xf32>
    %cst_39 = arith.constant 9.99999974E-6 : f32
    %85 = vector.broadcast %cst_39 : f32 to vector<1x64xf32>
    %86 = arith.addf %84, %85 : vector<1x64xf32>
    %87 = math.rsqrt %86 : vector<1x64xf32>
    %88 = arith.mulf %87, %70 : vector<1x64xf32>
    %89 = arith.mulf %75, %88 : vector<1x64xf32>
    %90 = arith.subf %71, %89 : vector<1x64xf32>
    %91 = vector.broadcast %88 : vector<1x64xf32> to vector<32x64xf32>
    %92 = arith.mulf %69, %91 : vector<32x64xf32>
    %93 = vector.broadcast %90 : vector<1x64xf32> to vector<32x64xf32>
    %94 = arith.addf %92, %93 : vector<32x64xf32>
    %cst_40 = arith.constant 0.000000e+00 : f32
    %95 = vector.broadcast %cst_40 : f32 to vector<32x64xf32>
    %96 = arith.maximumf %94, %95 : vector<32x64xf32>
    %c784 = arith.constant 784 : index
    %c0_41 = arith.constant 0 : index
    %97 = vector.load %arg1[%c784, %c0_41] : memref<1032x256xf32, #tpu.memory_space<vmem>>, vector<64x32xf32>
    %c848 = arith.constant 848 : index
    %c0_42 = arith.constant 0 : index
    %98 = vector.load %arg1[%c848, %c0_42] : memref<1032x256xf32, #tpu.memory_space<vmem>>, vector<64x32xf32>
    %cst_43 = arith.constant dense<0.000000e+00> : vector<32x32xf32>
    %99 = tpu.matmul %96, %97, %cst_43 {dimension_numbers = #tpu.dot_dimension_numbers<[1], [0], [0], [1], [0, 0, 1, 1], [], []>} : vector<32x64xf32>, vector<64x32xf32>, vector<32x32xf32> -> vector<32x32xf32>
    %cst_44 = arith.constant dense<0.000000e+00> : vector<32x32xf32>
    %100 = tpu.matmul %96, %98, %cst_44 {dimension_numbers = #tpu.dot_dimension_numbers<[1], [0], [0], [1], [0, 0, 1, 1], [], []>} : vector<32x64xf32>, vector<64x32xf32>, vector<32x32xf32> -> vector<32x32xf32>
    %101 = tpu.concatenate %99, %100 in 0 : vector<32x32xf32>, vector<32x32xf32> -> vector<64x32xf32>
    %c6 = arith.constant 6 : index
    %c0_45 = arith.constant 0 : index
    %102 = vector.load %arg2[%c6, %c0_45] : memref<16x256xf32, #tpu.memory_space<vmem>>, vector<1x32xf32>
    %c7 = arith.constant 7 : index
    %c0_46 = arith.constant 0 : index
    %103 = vector.load %arg2[%c7, %c0_46] : memref<16x256xf32, #tpu.memory_space<vmem>>, vector<1x32xf32>
    %cst_47 = arith.constant dense<0.000000e+00> : vector<32xf32>
    %104 = vector.multi_reduction <add>, %101, %cst_47 [0] : vector<64x32xf32> to vector<32xf32>
    %105 = vector.shape_cast %104 : vector<32xf32> to vector<1x32xf32>
    %cst_48 = arith.constant 1.562500e-02 : f32
    %106 = vector.broadcast %cst_48 : f32 to vector<1x32xf32>
    %107 = arith.mulf %105, %106 : vector<1x32xf32>
    %108 = arith.mulf %101, %101 : vector<64x32xf32>
    %cst_49 = arith.constant dense<0.000000e+00> : vector<32xf32>
    %109 = vector.multi_reduction <add>, %108, %cst_49 [0] : vector<64x32xf32> to vector<32xf32>
    %110 = vector.shape_cast %109 : vector<32xf32> to vector<1x32xf32>
    %cst_50 = arith.constant 1.562500e-02 : f32
    %111 = vector.broadcast %cst_50 : f32 to vector<1x32xf32>
    %112 = arith.mulf %110, %111 : vector<1x32xf32>
    %113 = arith.mulf %107, %107 : vector<1x32xf32>
    %114 = arith.subf %112, %113 : vector<1x32xf32>
    %cst_51 = arith.constant 0.000000e+00 : f32
    %115 = vector.broadcast %cst_51 : f32 to vector<1x32xf32>
    %116 = arith.maximumf %114, %115 : vector<1x32xf32>
    %cst_52 = arith.constant 9.99999974E-6 : f32
    %117 = vector.broadcast %cst_52 : f32 to vector<1x32xf32>
    %118 = arith.addf %116, %117 : vector<1x32xf32>
    %119 = math.rsqrt %118 : vector<1x32xf32>
    %120 = arith.mulf %119, %102 : vector<1x32xf32>
    %121 = arith.mulf %107, %120 : vector<1x32xf32>
    %122 = arith.subf %103, %121 : vector<1x32xf32>
    %123 = vector.broadcast %120 : vector<1x32xf32> to vector<64x32xf32>
    %124 = arith.mulf %101, %123 : vector<64x32xf32>
    %125 = vector.broadcast %122 : vector<1x32xf32> to vector<64x32xf32>
    %126 = arith.addf %124, %125 : vector<64x32xf32>
    %cst_53 = arith.constant 0.000000e+00 : f32
    %127 = vector.broadcast %cst_53 : f32 to vector<64x32xf32>
    %128 = arith.maximumf %126, %127 : vector<64x32xf32>
    %c912 = arith.constant 912 : index
    %c0_54 = arith.constant 0 : index
    %129 = vector.load %arg1[%c912, %c0_54] : memref<1032x256xf32, #tpu.memory_space<vmem>>, vector<32x16xf32>
    %c944 = arith.constant 944 : index
    %c0_55 = arith.constant 0 : index
    %130 = vector.load %arg1[%c944, %c0_55] : memref<1032x256xf32, #tpu.memory_space<vmem>>, vector<32x16xf32>
    %cst_56 = arith.constant dense<0.000000e+00> : vector<64x16xf32>
    %131 = tpu.matmul %128, %129, %cst_56 {dimension_numbers = #tpu.dot_dimension_numbers<[1], [0], [0], [1], [0, 0, 1, 1], [], []>} : vector<64x32xf32>, vector<32x16xf32>, vector<64x16xf32> -> vector<64x16xf32>
    %cst_57 = arith.constant dense<0.000000e+00> : vector<64x16xf32>
    %132 = tpu.matmul %128, %130, %cst_57 {dimension_numbers = #tpu.dot_dimension_numbers<[1], [0], [0], [1], [0, 0, 1, 1], [], []>} : vector<64x32xf32>, vector<32x16xf32>, vector<64x16xf32> -> vector<64x16xf32>
    %133 = tpu.concatenate %131, %132 in 0 : vector<64x16xf32>, vector<64x16xf32> -> vector<128x16xf32>
    %c8_58 = arith.constant 8 : index
    %c0_59 = arith.constant 0 : index
    %134 = vector.load %arg2[%c8_58, %c0_59] : memref<16x256xf32, #tpu.memory_space<vmem>>, vector<1x16xf32>
    %c9 = arith.constant 9 : index
    %c0_60 = arith.constant 0 : index
    %135 = vector.load %arg2[%c9, %c0_60] : memref<16x256xf32, #tpu.memory_space<vmem>>, vector<1x16xf32>
    %cst_61 = arith.constant dense<0.000000e+00> : vector<16xf32>
    %136 = vector.multi_reduction <add>, %133, %cst_61 [0] : vector<128x16xf32> to vector<16xf32>
    %137 = vector.shape_cast %136 : vector<16xf32> to vector<1x16xf32>
    %cst_62 = arith.constant 7.812500e-03 : f32
    %138 = vector.broadcast %cst_62 : f32 to vector<1x16xf32>
    %139 = arith.mulf %137, %138 : vector<1x16xf32>
    %140 = arith.mulf %133, %133 : vector<128x16xf32>
    %cst_63 = arith.constant dense<0.000000e+00> : vector<16xf32>
    %141 = vector.multi_reduction <add>, %140, %cst_63 [0] : vector<128x16xf32> to vector<16xf32>
    %142 = vector.shape_cast %141 : vector<16xf32> to vector<1x16xf32>
    %cst_64 = arith.constant 7.812500e-03 : f32
    %143 = vector.broadcast %cst_64 : f32 to vector<1x16xf32>
    %144 = arith.mulf %142, %143 : vector<1x16xf32>
    %145 = arith.mulf %139, %139 : vector<1x16xf32>
    %146 = arith.subf %144, %145 : vector<1x16xf32>
    %cst_65 = arith.constant 0.000000e+00 : f32
    %147 = vector.broadcast %cst_65 : f32 to vector<1x16xf32>
    %148 = arith.maximumf %146, %147 : vector<1x16xf32>
    %cst_66 = arith.constant 9.99999974E-6 : f32
    %149 = vector.broadcast %cst_66 : f32 to vector<1x16xf32>
    %150 = arith.addf %148, %149 : vector<1x16xf32>
    %151 = math.rsqrt %150 : vector<1x16xf32>
    %152 = arith.mulf %151, %134 : vector<1x16xf32>
    %153 = arith.mulf %139, %152 : vector<1x16xf32>
    %154 = arith.subf %135, %153 : vector<1x16xf32>
    %155 = vector.broadcast %152 : vector<1x16xf32> to vector<128x16xf32>
    %156 = arith.mulf %133, %155 : vector<128x16xf32>
    %157 = vector.broadcast %154 : vector<1x16xf32> to vector<128x16xf32>
    %158 = arith.addf %156, %157 : vector<128x16xf32>
    %cst_67 = arith.constant 0.000000e+00 : f32
    %159 = vector.broadcast %cst_67 : f32 to vector<128x16xf32>
    %160 = arith.maximumf %158, %159 : vector<128x16xf32>
    %c976 = arith.constant 976 : index
    %c0_68 = arith.constant 0 : index
    %161 = vector.load %arg1[%c976, %c0_68] : memref<1032x256xf32, #tpu.memory_space<vmem>>, vector<8x16xf32>
    %c984 = arith.constant 984 : index
    %c0_69 = arith.constant 0 : index
    %162 = vector.load %arg1[%c984, %c0_69] : memref<1032x256xf32, #tpu.memory_space<vmem>>, vector<8x16xf32>
    %cst_70 = arith.constant dense<0.000000e+00> : vector<8x128xf32>
    %163 = tpu.matmul %161, %160, %cst_70 {dimension_numbers = #tpu.dot_dimension_numbers<[1], [1], [0], [0], [0, 0, 1, 0], [], []>} : vector<8x16xf32>, vector<128x16xf32>, vector<8x128xf32> -> vector<8x128xf32>
    %cst_71 = arith.constant dense<0.000000e+00> : vector<8x128xf32>
    %164 = tpu.matmul %162, %160, %cst_71 {dimension_numbers = #tpu.dot_dimension_numbers<[1], [1], [0], [0], [0, 0, 1, 0], [], []>} : vector<8x16xf32>, vector<128x16xf32>, vector<8x128xf32> -> vector<8x128xf32>
    %165 = tpu.concatenate %163, %164 in 1 : vector<8x128xf32>, vector<8x128xf32> -> vector<8x256xf32>
    %c0_72 = arith.constant 0 : index
    %c0_73 = arith.constant 0 : index
    %166 = vector.load %arg3[%c0_72, %c0_73] : memref<8x8xf32, #tpu.memory_space<vmem>>, vector<8x1xf32>
    %c0_74 = arith.constant 0 : index
    %c1_75 = arith.constant 1 : index
    %167 = vector.load %arg3[%c0_74, %c1_75] : memref<8x8xf32, #tpu.memory_space<vmem>>, vector<8x1xf32>
    %cst_76 = arith.constant dense<0.000000e+00> : vector<8xf32>
    %168 = vector.multi_reduction <add>, %165, %cst_76 [1] : vector<8x256xf32> to vector<8xf32>
    %169 = vector.shape_cast %168 : vector<8xf32> to vector<8x1xf32>
    %cst_77 = arith.constant 3.906250e-03 : f32
    %170 = vector.broadcast %cst_77 : f32 to vector<8x1xf32>
    %171 = arith.mulf %169, %170 : vector<8x1xf32>
    %172 = arith.mulf %165, %165 : vector<8x256xf32>
    %cst_78 = arith.constant dense<0.000000e+00> : vector<8xf32>
    %173 = vector.multi_reduction <add>, %172, %cst_78 [1] : vector<8x256xf32> to vector<8xf32>
    %174 = vector.shape_cast %173 : vector<8xf32> to vector<8x1xf32>
    %cst_79 = arith.constant 3.906250e-03 : f32
    %175 = vector.broadcast %cst_79 : f32 to vector<8x1xf32>
    %176 = arith.mulf %174, %175 : vector<8x1xf32>
    %177 = arith.mulf %171, %171 : vector<8x1xf32>
    %178 = arith.subf %176, %177 : vector<8x1xf32>
    %cst_80 = arith.constant 0.000000e+00 : f32
    %179 = vector.broadcast %cst_80 : f32 to vector<8x1xf32>
    %180 = arith.maximumf %178, %179 : vector<8x1xf32>
    %cst_81 = arith.constant 9.99999974E-6 : f32
    %181 = vector.broadcast %cst_81 : f32 to vector<8x1xf32>
    %182 = arith.addf %180, %181 : vector<8x1xf32>
    %183 = math.rsqrt %182 : vector<8x1xf32>
    %184 = arith.mulf %183, %166 : vector<8x1xf32>
    %185 = arith.mulf %171, %184 : vector<8x1xf32>
    %186 = arith.subf %167, %185 : vector<8x1xf32>
    %187 = vector.broadcast %184 : vector<8x1xf32> to vector<8x256xf32>
    %188 = arith.mulf %165, %187 : vector<8x256xf32>
    %189 = vector.broadcast %186 : vector<8x1xf32> to vector<8x256xf32>
    %190 = arith.addf %188, %189 : vector<8x256xf32>
    %cst_82 = arith.constant 0.000000e+00 : f32
    %191 = vector.broadcast %cst_82 : f32 to vector<8x256xf32>
    %192 = arith.maximumf %190, %191 : vector<8x256xf32>
    %c992 = arith.constant 992 : index
    %c0_83 = arith.constant 0 : index
    %193 = vector.load %arg1[%c992, %c0_83] : memref<1032x256xf32, #tpu.memory_space<vmem>>, vector<4x8xf32>
    %c1000 = arith.constant 1000 : index
    %c0_84 = arith.constant 0 : index
    %194 = vector.load %arg1[%c1000, %c0_84] : memref<1032x256xf32, #tpu.memory_space<vmem>>, vector<4x8xf32>
    %cst_85 = arith.constant dense<0.000000e+00> : vector<4x256xf32>
    %195 = tpu.matmul %193, %192, %cst_85 {dimension_numbers = #tpu.dot_dimension_numbers<[1], [0], [0], [1], [0, 0, 1, 1], [], []>} : vector<4x8xf32>, vector<8x256xf32>, vector<4x256xf32> -> vector<4x256xf32>
    %cst_86 = arith.constant dense<0.000000e+00> : vector<4x256xf32>
    %196 = tpu.matmul %194, %192, %cst_86 {dimension_numbers = #tpu.dot_dimension_numbers<[1], [0], [0], [1], [0, 0, 1, 1], [], []>} : vector<4x8xf32>, vector<8x256xf32>, vector<4x256xf32> -> vector<4x256xf32>
    %197 = tpu.concatenate %195, %196 in 1 : vector<4x256xf32>, vector<4x256xf32> -> vector<4x512xf32>
    %c0_87 = arith.constant 0 : index
    %c2_88 = arith.constant 2 : index
    %198 = vector.load %arg3[%c0_87, %c2_88] : memref<8x8xf32, #tpu.memory_space<vmem>>, vector<4x1xf32>
    %c0_89 = arith.constant 0 : index
    %c3_90 = arith.constant 3 : index
    %199 = vector.load %arg3[%c0_89, %c3_90] : memref<8x8xf32, #tpu.memory_space<vmem>>, vector<4x1xf32>
    %cst_91 = arith.constant dense<0.000000e+00> : vector<4xf32>
    %200 = vector.multi_reduction <add>, %197, %cst_91 [1] : vector<4x512xf32> to vector<4xf32>
    %201 = vector.shape_cast %200 : vector<4xf32> to vector<4x1xf32>
    %cst_92 = arith.constant 0.001953125 : f32
    %202 = vector.broadcast %cst_92 : f32 to vector<4x1xf32>
    %203 = arith.mulf %201, %202 : vector<4x1xf32>
    %204 = arith.mulf %197, %197 : vector<4x512xf32>
    %cst_93 = arith.constant dense<0.000000e+00> : vector<4xf32>
    %205 = vector.multi_reduction <add>, %204, %cst_93 [1] : vector<4x512xf32> to vector<4xf32>
    %206 = vector.shape_cast %205 : vector<4xf32> to vector<4x1xf32>
    %cst_94 = arith.constant 0.001953125 : f32
    %207 = vector.broadcast %cst_94 : f32 to vector<4x1xf32>
    %208 = arith.mulf %206, %207 : vector<4x1xf32>
    %209 = arith.mulf %203, %203 : vector<4x1xf32>
    %210 = arith.subf %208, %209 : vector<4x1xf32>
    %cst_95 = arith.constant 0.000000e+00 : f32
    %211 = vector.broadcast %cst_95 : f32 to vector<4x1xf32>
    %212 = arith.maximumf %210, %211 : vector<4x1xf32>
    %cst_96 = arith.constant 9.99999974E-6 : f32
    %213 = vector.broadcast %cst_96 : f32 to vector<4x1xf32>
    %214 = arith.addf %212, %213 : vector<4x1xf32>
    %215 = math.rsqrt %214 : vector<4x1xf32>
    %216 = arith.mulf %215, %198 : vector<4x1xf32>
    %217 = arith.mulf %203, %216 : vector<4x1xf32>
    %218 = arith.subf %199, %217 : vector<4x1xf32>
    %219 = vector.broadcast %216 : vector<4x1xf32> to vector<4x512xf32>
    %220 = arith.mulf %197, %219 : vector<4x512xf32>
    %221 = vector.broadcast %218 : vector<4x1xf32> to vector<4x512xf32>
    %222 = arith.addf %220, %221 : vector<4x512xf32>
    %cst_97 = arith.constant 0.000000e+00 : f32
    %223 = vector.broadcast %cst_97 : f32 to vector<4x512xf32>
    %224 = arith.maximumf %222, %223 : vector<4x512xf32>
    %c1008 = arith.constant 1008 : index
    %c0_98 = arith.constant 0 : index
    %225 = vector.load %arg1[%c1008, %c0_98] : memref<1032x256xf32, #tpu.memory_space<vmem>>, vector<2x4xf32>
    %c1016 = arith.constant 1016 : index
    %c0_99 = arith.constant 0 : index
    %226 = vector.load %arg1[%c1016, %c0_99] : memref<1032x256xf32, #tpu.memory_space<vmem>>, vector<2x4xf32>
    %cst_100 = arith.constant dense<0.000000e+00> : vector<2x512xf32>
    %227 = tpu.matmul %225, %224, %cst_100 {dimension_numbers = #tpu.dot_dimension_numbers<[1], [0], [0], [1], [0, 0, 1, 1], [], []>} : vector<2x4xf32>, vector<4x512xf32>, vector<2x512xf32> -> vector<2x512xf32>
    %cst_101 = arith.constant dense<0.000000e+00> : vector<2x512xf32>
    %228 = tpu.matmul %226, %224, %cst_101 {dimension_numbers = #tpu.dot_dimension_numbers<[1], [0], [0], [1], [0, 0, 1, 1], [], []>} : vector<2x4xf32>, vector<4x512xf32>, vector<2x512xf32> -> vector<2x512xf32>
    %229 = tpu.concatenate %227, %228 in 1 : vector<2x512xf32>, vector<2x512xf32> -> vector<2x1024xf32>
    %c0_102 = arith.constant 0 : index
    %c4_103 = arith.constant 4 : index
    %230 = vector.load %arg3[%c0_102, %c4_103] : memref<8x8xf32, #tpu.memory_space<vmem>>, vector<2x1xf32>
    %c0_104 = arith.constant 0 : index
    %c5_105 = arith.constant 5 : index
    %231 = vector.load %arg3[%c0_104, %c5_105] : memref<8x8xf32, #tpu.memory_space<vmem>>, vector<2x1xf32>
    %cst_106 = arith.constant dense<0.000000e+00> : vector<2xf32>
    %232 = vector.multi_reduction <add>, %229, %cst_106 [1] : vector<2x1024xf32> to vector<2xf32>
    %233 = vector.shape_cast %232 : vector<2xf32> to vector<2x1xf32>
    %cst_107 = arith.constant 9.765625E-4 : f32
    %234 = vector.broadcast %cst_107 : f32 to vector<2x1xf32>
    %235 = arith.mulf %233, %234 : vector<2x1xf32>
    %236 = arith.mulf %229, %229 : vector<2x1024xf32>
    %cst_108 = arith.constant dense<0.000000e+00> : vector<2xf32>
    %237 = vector.multi_reduction <add>, %236, %cst_108 [1] : vector<2x1024xf32> to vector<2xf32>
    %238 = vector.shape_cast %237 : vector<2xf32> to vector<2x1xf32>
    %cst_109 = arith.constant 9.765625E-4 : f32
    %239 = vector.broadcast %cst_109 : f32 to vector<2x1xf32>
    %240 = arith.mulf %238, %239 : vector<2x1xf32>
    %241 = arith.mulf %235, %235 : vector<2x1xf32>
    %242 = arith.subf %240, %241 : vector<2x1xf32>
    %cst_110 = arith.constant 0.000000e+00 : f32
    %243 = vector.broadcast %cst_110 : f32 to vector<2x1xf32>
    %244 = arith.maximumf %242, %243 : vector<2x1xf32>
    %cst_111 = arith.constant 9.99999974E-6 : f32
    %245 = vector.broadcast %cst_111 : f32 to vector<2x1xf32>
    %246 = arith.addf %244, %245 : vector<2x1xf32>
    %247 = math.rsqrt %246 : vector<2x1xf32>
    %248 = arith.mulf %247, %230 : vector<2x1xf32>
    %249 = arith.mulf %235, %248 : vector<2x1xf32>
    %250 = arith.subf %231, %249 : vector<2x1xf32>
    %251 = vector.broadcast %248 : vector<2x1xf32> to vector<2x1024xf32>
    %252 = arith.mulf %229, %251 : vector<2x1024xf32>
    %253 = vector.broadcast %250 : vector<2x1xf32> to vector<2x1024xf32>
    %254 = arith.addf %252, %253 : vector<2x1024xf32>
    %cst_112 = arith.constant 0.000000e+00 : f32
    %255 = vector.broadcast %cst_112 : f32 to vector<2x1024xf32>
    %256 = arith.maximumf %254, %255 : vector<2x1024xf32>
    %c1024 = arith.constant 1024 : index
    %c0_113 = arith.constant 0 : index
    %257 = vector.load %arg1[%c1024, %c0_113] : memref<1032x256xf32, #tpu.memory_space<vmem>>, vector<2x2xf32>
    %c0_114 = arith.constant 0 : index
    %c6_115 = arith.constant 6 : index
    %258 = vector.load %arg3[%c0_114, %c6_115] : memref<8x8xf32, #tpu.memory_space<vmem>>, vector<2x1xf32>
    %cst_116 = arith.constant dense<0.000000e+00> : vector<2x1024xf32>
    %259 = tpu.matmul %257, %256, %cst_116 {dimension_numbers = #tpu.dot_dimension_numbers<[1], [0], [0], [1], [0, 0, 1, 1], [], []>} : vector<2x2xf32>, vector<2x1024xf32>, vector<2x1024xf32> -> vector<2x1024xf32>
    %260 = vector.broadcast %258 : vector<2x1xf32> to vector<2x1024xf32>
    %261 = arith.addf %259, %260 : vector<2x1024xf32>
    %262 = math.tanh %261 : vector<2x1024xf32>
    %c0_117 = arith.constant 0 : index
    %c0_118 = arith.constant 0 : index
    %263 = vector.load %arg4[%c0_117, %c0_118] : memref<2x1024xf32, #tpu.memory_space<vmem>>, vector<2x1024xf32>
    tpu.vector_store %arg4[%c0_117, %c0_118], %262 {strides = array<i32>} : memref<2x1024xf32, #tpu.memory_space<vmem>>, vector<2x1024xf32>,
    return
  }
}

</mosaic_0001>

<llo_original>
// kernel: forward.1
$region0: #{forward.1}
  #allocation0 [shape = 'u32[]', space=smem, size = 0x4, offset = 0x4, fixed_abs, tag = 'smem constant byte address 0x4 - core index']
  #allocation1 [shape = 'u32[144,128]{1,0:T(1,128)}', space=vmem, size = 0x12000, scoped, tag = 'internal scratch']
  %s0 = inlined_call_operand.hbm [shape: f32[4,4], index: 0, kind: input, shape index: {}]
  %s1 = inlined_call_operand.hbm [shape: f32[1032,256], index: 1, kind: input, shape index: {}]
  %s2 = inlined_call_operand.hbm [shape: f32[16,256], index: 2, kind: input, shape index: {}]
  %s3 = inlined_call_operand.hbm [shape: f32[8,8], index: 3, kind: input, shape index: {}]
  %s4 = inlined_call_operand.vmem [shape: f32[2,1024], index: 4, kind: output, shape index: {}]
  %s5 = sld [smem:[#allocation0]]
  $region42: #{forward.1} parent=0
    _
  %s7 = ssub.s32 1, %s5
  %s8 = scalar_select 0, %s7, %s5
  $region1: #{forward.1} parent=0
    #allocation2 [shape = 'u8[2048]{0}', space=vmem, size = 0x800, scoped, tag = 'input window, operand 0, single buffered']
    #allocation3 [shape = 's32[1]{0}', space=sflag, size = 0x4, scoped, tag = 'scoped memory for forward.1']
    #allocation4 [shape = 'u8[1056768]{0}', space=vmem, size = 0x102000, scoped, tag = 'input window, operand 1, single buffered']
    #allocation5 [shape = 's32[1]{0}', space=sflag, size = 0x4, scoped, tag = 'scoped memory for forward.1']
    #allocation6 [shape = 'u8[16384]{0}', space=vmem, size = 0x4000, scoped, tag = 'input window, operand 2, single buffered']
    #allocation7 [shape = 'u8[4096]{0}', space=vmem, size = 0x1000, scoped, tag = 'input window, operand 3, single buffered']
    #allocation8 [shape = 's32[1]{0}', space=sflag, size = 0x4, scoped, tag = 'scoped memory for forward.1']
    %9 = vsyncpa [#allocation3], 0
    %10 = vsyncpa [#allocation5], 0
    %11 = vsyncpa [#allocation8], 0
    // Predicated region
    $region2: #{forward.1} parent=1 // pred_check
      _
    $region3: #{forward.1} parent=1 // pred_check_branch
      %13 = sbr.rel (0) target = $region5
    $region4: #{forward.1} parent=1 // pred_region
      %s15 = ssub.s32 64, 64
      %16 = vsyncadd [#allocation3], %s15
      %s18 = sshll.u32 [#allocation2], 4
      %s19 = int_to_ptr.vmem [resolvable:$true] %s18
      %21 = dma.hbm_to_vmem [thread:$0]  %s0, 64, %s19, [#allocation3]
    $region5: #{forward.1} parent=1 // pred_fallthru
      _
    // Predicated region
    $region6: #{forward.1} parent=1 // pred_check
      _
    $region7: #{forward.1} parent=1 // pred_check_branch
      %23 = sbr.rel (0) target = $region9
    $region8: #{forward.1} parent=1 // pred_region
      %s25 = ssub.s32 33024, 33024
      %26 = vsyncadd [#allocation5], %s25
      %s27 = sshll.u32 [#allocation4], 4
      %s28 = int_to_ptr.vmem [resolvable:$true] %s27
      %33 = dma.hbm_to_vmem [thread:$0]  %s1, 33024, %s28, [#allocation5], 256, 256, 16
    $region9: #{forward.1} parent=1 // pred_fallthru
      _
    // Predicated region
    $region10: #{forward.1} parent=1 // pred_check
      _
    $region11: #{forward.1} parent=1 // pred_check_branch
      %35 = sbr.rel (0) target = $region13
    $region12: #{forward.1} parent=1 // pred_region
      %s37 = ssub.s32 512, 512
      %38 = vsyncadd [#allocation5], %s37
      %s39 = sshll.u32 [#allocation6], 4
      %s40 = int_to_ptr.vmem [resolvable:$true] %s39
      %45 = dma.hbm_to_vmem [thread:$0]  %s2, 512, %s40, [#allocation5], 256, 256, 16
    $region13: #{forward.1} parent=1 // pred_fallthru
      _
    // Predicated region
    $region14: #{forward.1} parent=1 // pred_check
      _
    $region15: #{forward.1} parent=1 // pred_check_branch
      %47 = sbr.rel (0) target = $region17
    $region16: #{forward.1} parent=1 // pred_region
      %s49 = ssub.s32 128, 128
      %50 = vsyncadd [#allocation8], %s49
      %s52 = sshll.u32 [#allocation7], 4
      %s53 = int_to_ptr.vmem [resolvable:$true] %s52
      %55 = dma.hbm_to_vmem [thread:$0]  %s3, 128, %s53, [#allocation8]
    $region17: #{forward.1} parent=1 // pred_fallthru
      _
    // Predicated region
    $region18: #{forward.1} parent=1 // pred_check
      _
    $region19: #{forward.1} parent=1 // pred_check_branch
      %57 = sbr.rel (0) target = $region21
    $region20: #{forward.1} parent=1 // pred_region
      %58 = dma.done [#allocation3], 64
    $region21: #{forward.1} parent=1 // pred_fallthru
      _
    // Predicated region
    $region22: #{forward.1} parent=1 // pred_check
      _
    $region23: #{forward.1} parent=1 // pred_check_branch
      %60 = sbr.rel (0) target = $region25
    $region24: #{forward.1} parent=1 // pred_region
      %61 = dma.done [#allocation5], 33024
    $region25: #{forward.1} parent=1 // pred_fallthru
      _
    // Predicated region
    $region26: #{forward.1} parent=1 // pred_check
      _
    $region27: #{forward.1} parent=1 // pred_check_branch
      %63 = sbr.rel (0) target = $region29
    $region28: #{forward.1} parent=1 // pred_region
      %64 = dma.done [#allocation5], 512
    $region29: #{forward.1} parent=1 // pred_fallthru
      _
    // Predicated region
    $region30: #{forward.1} parent=1 // pred_check
      _
    $region31: #{forward.1} parent=1 // pred_check_branch
      %66 = sbr.rel (0) target = $region33
    $region32: #{forward.1} parent=1 // pred_region
      %67 = dma.done [#allocation8], 128
    $region33: #{forward.1} parent=1 // pred_fallthru
      _
    %v68 = vld [vmem:[#allocation2] sm:$0xf]
    %v69 = vld [vmem:[#allocation4] sm:$0xf]
    %v70 = vld [vmem:[#allocation4 + $0x8] sm:$0xf]
    %v71 = vld [vmem:[#allocation4 + $0x10] sm:$0xf]
    %v72 = vld [vmem:[#allocation4 + $0x18] sm:$0xf]
    %vm73 = vcmask 31744
    %v75 = vsel %vm73, %v68, 0
    %vm77 = vcmask 1043456
    %v79 = vsel %vm77, %v69, 0
    %v82 = vsel %vm77, %v70, 0
    %84 = vmatprep.subr.mxu0 0.0
    %85 = vmatpush1.msra.mxu0 0.0
    %86 = vmatprep.subr.mxu0 0.0
    %87 = vmatpush1.msra.mxu0 0.0
    %88 = vmatprep.subr.mxu0 0.0
    %89 = vmatpush1.msra.mxu0 0.0
    %90 = vmatprep.subr.mxu0 0.0
    %91 = vmatpush1.msra.mxu0 0.0
    %92 = vmatprep.subr.mxu0 0.0
    %93 = vmatpush1.msra.mxu0 0.0
    %94 = vmatprep.subr.mxu0 0.0
    %95 = vmatpush1.msra.mxu0 0.0
    %96 = vmatprep.subr.mxu0 0.0
    %97 = vmatpush1.msra.mxu0 0.0
    %98 = vmatprep.subr.mxu0 0.0
    %99 = vmatpush1.msra.mxu0 0.0
    %100 = vmatprep.subr.mxu0 0.0
    %101 = vmatpush1.msra.mxu0 0.0
    %102 = vmatprep.subr.mxu0 0.0
    %103 = vmatpush1.msra.mxu0 0.0
    %104 = vmatprep.subr.mxu0 0.0
    %105 = vmatpush1.msra.mxu0 0.0
    %106 = vmatprep.subr.mxu0 0.0
    %107 = vmatpush1.msra.mxu0 0.0
    %108 = vmatprep.subr.mxu0 0.0
    %109 = vmatpush1.msra.mxu0 0.0
    %110 = vmatprep.subr.mxu0 0.0
    %111 = vmatpush1.msra.mxu0 0.0
    %112 = vmatprep.subr.mxu0 0.0
    %113 = vmatpush1.msra.mxu0 0.0
    %114 = vmatprep.subr.mxu0 %v82
    %115 = vmatpush1.msra.mxu0 %v79
    %116 = vmatprep.subr.mxu0 0.0
    %117 = vmatpush2.msra.mxu0 0.0
    %118 = vmatprep.subr.mxu0 0.0
    %119 = vmatpush2.msra.mxu0 0.0
    %120 = vmatprep.subr.mxu0 0.0
    %121 = vmatpush2.msra.mxu0 0.0
    %122 = vmatprep.subr.mxu0 0.0
    %123 = vmatpush2.msra.mxu0 0.0
    %124 = vmatprep.subr.mxu0 0.0
    %125 = vmatpush2.msra.mxu0 0.0
    %126 = vmatprep.subr.mxu0 0.0
    %127 = vmatpush2.msra.mxu0 0.0
    %128 = vmatprep.subr.mxu0 0.0
    %129 = vmatpush2.msra.mxu0 0.0
    %130 = vmatprep.subr.mxu0 0.0
    %131 = vmatpush2.msra.mxu0 0.0
    %132 = vmatprep.subr.mxu0 0.0
    %133 = vmatpush2.msra.mxu0 0.0
    %134 = vmatprep.subr.mxu0 0.0
    %135 = vmatpush2.msra.mxu0 0.0
    %136 = vmatprep.subr.mxu0 0.0
    %137 = vmatpush2.msra.mxu0 0.0
    %138 = vmatprep.subr.mxu0 0.0
    %139 = vmatpush2.msra.mxu0 0.0
    %140 = vmatprep.subr.mxu0 0.0
    %141 = vmatpush2.msra.mxu0 0.0
    %142 = vmatprep.subr.mxu0 0.0
    %143 = vmatpush2.msra.mxu0 0.0
    %144 = vmatprep.subr.mxu0 0.0
    %145 = vmatpush2.msra.mxu0 0.0
    %146 = vmatprep.subr.mxu0 0.0
    %147 = vmatpush2.msra.mxu0 0.0
    %148 = vmatprep.mubr.f32.mxu0 0.0
    %149 = vmatmul.mubr.f32.gmra.mxu0 %v75
    %v150 = vpop.f32.mrf.mxu0
    %v151 = vadd.f32 0.0, %v150
    %v152 = vpop.f32.mrf.mxu0
    %v153 = vadd.f32 0.0, %v152
    %154 = vdwg.mxu0
    %v156 = vsel %vm77, %v71, 0
    %v159 = vsel %vm77, %v72, 0
    %161 = vmatprep.subr.mxu0 0.0
    %162 = vmatpush1.msra.mxu0 0.0
    %163 = vmatprep.subr.mxu0 0.0
    %164 = vmatpush1.msra.mxu0 0.0
    %165 = vmatprep.subr.mxu0 0.0
    %166 = vmatpush1.msra.mxu0 0.0
    %167 = vmatprep.subr.mxu0 0.0
    %168 = vmatpush1.msra.mxu0 0.0
    %169 = vmatprep.subr.mxu0 0.0
    %170 = vmatpush1.msra.mxu0 0.0
    %171 = vmatprep.subr.mxu0 0.0
    %172 = vmatpush1.msra.mxu0 0.0
    %173 = vmatprep.subr.mxu0 0.0
    %174 = vmatpush1.msra.mxu0 0.0
    %175 = vmatprep.subr.mxu0 0.0
    %176 = vmatpush1.msra.mxu0 0.0
    %177 = vmatprep.subr.mxu0 0.0
    %178 = vmatpush1.msra.mxu0 0.0
    %179 = vmatprep.subr.mxu0 0.0
    %180 = vmatpush1.msra.mxu0 0.0
    %181 = vmatprep.subr.mxu0 0.0
    %182 = vmatpush1.msra.mxu0 0.0
    %183 = vmatprep.subr.mxu0 0.0
    %184 = vmatpush1.msra.mxu0 0.0
    %185 = vmatprep.subr.mxu0 0.0
    %186 = vmatpush1.msra.mxu0 0.0
    %187 = vmatprep.subr.mxu0 0.0
    %188 = vmatpush1.msra.mxu0 0.0
    %189 = vmatprep.subr.mxu0 0.0
    %190 = vmatpush1.msra.mxu0 0.0
    %191 = vmatprep.subr.mxu0 %v159
    %192 = vmatpush1.msra.mxu0 %v156
    %193 = vmatprep.subr.mxu0 0.0
    %194 = vmatpush2.msra.mxu0 0.0
    %195 = vmatprep.subr.mxu0 0.0
    %196 = vmatpush2.msra.mxu0 0.0
    %197 = vmatprep.subr.mxu0 0.0
    %198 = vmatpush2.msra.mxu0 0.0
    %199 = vmatprep.subr.mxu0 0.0
    %200 = vmatpush2.msra.mxu0 0.0
    %201 = vmatprep.subr.mxu0 0.0
    %202 = vmatpush2.msra.mxu0 0.0
    %203 = vmatprep.subr.mxu0 0.0
    %204 = vmatpush2.msra.mxu0 0.0
    %205 = vmatprep.subr.mxu0 0.0
    %206 = vmatpush2.msra.mxu0 0.0
    %207 = vmatprep.subr.mxu0 0.0
    %208 = vmatpush2.msra.mxu0 0.0
    %209 = vmatprep.subr.mxu0 0.0
    %210 = vmatpush2.msra.mxu0 0.0
    %211 = vmatprep.subr.mxu0 0.0
    %212 = vmatpush2.msra.mxu0 0.0
    %213 = vmatprep.subr.mxu0 0.0
    %214 = vmatpush2.msra.mxu0 0.0
    %215 = vmatprep.subr.mxu0 0.0
    %216 = vmatpush2.msra.mxu0 0.0
    %217 = vmatprep.subr.mxu0 0.0
    %218 = vmatpush2.msra.mxu0 0.0
    %219 = vmatprep.subr.mxu0 0.0
    %220 = vmatpush2.msra.mxu0 0.0
    %221 = vmatprep.subr.mxu0 0.0
    %222 = vmatpush2.msra.mxu0 0.0
    %223 = vmatprep.subr.mxu0 0.0
    %224 = vmatpush2.msra.mxu0 0.0
    %225 = vmatprep.mubr.f32.mxu0 0.0
    %226 = vmatmul.mubr.f32.gmra.mxu0 %v75
    %v227 = vpop.f32.mrf.mxu0
    %v228 = vadd.f32 0.0, %v227
    %v229 = vpop.f32.mrf.mxu0
    %v230 = vadd.f32 0.0, %v229
    %231 = vdwg.mxu0
    %v234 = vrot.slane %v228, 4
    %v235 = vrot.slane %v230, 4
    %v238 = vsel %vm77, %v151, %v234
    %v239 = vsel %vm77, %v153, %v235
    %v240 = vld [vmem:[#allocation6] ss:$8 sm:$0x3]
    %s241 = scalar_lea.vmem [#allocation6], 1
    %v242 = vld [vmem:[%s241] ss:$8 sm:$0x3]
    %v243 = vrot.slane %v238, 4
    %v244 = vadd.f32 %v238, %v243
    %v245 = vrot.slane %v244, 2
    %v246 = vadd.f32 %v244, %v245
    %v247 = vrot.slane %v246, 1
    %v248 = vadd.f32 %v246, %v247
    %v249 = vrot.slane %v239, 4
    %v250 = vadd.f32 %v239, %v249
    %v251 = vrot.slane %v250, 2
    %v252 = vadd.f32 %v250, %v251
    %v253 = vrot.slane %v252, 1
    %v254 = vadd.f32 %v252, %v253
    %v255 = vmul.f32 %v248, 0.125
    %v256 = vmul.f32 %v254, 0.125
    %v257 = vmul.f32 %v238, %v238
    %v258 = vmul.f32 %v239, %v239
    %v259 = vrot.slane %v257, 4
    %v260 = vadd.f32 %v257, %v259
    %v261 = vrot.slane %v260, 2
    %v262 = vadd.f32 %v260, %v261
    %v263 = vrot.slane %v262, 1
    %v264 = vadd.f32 %v262, %v263
    %v265 = vrot.slane %v258, 4
    %v266 = vadd.f32 %v258, %v265
    %v267 = vrot.slane %v266, 2
    %v268 = vadd.f32 %v266, %v267
    %v269 = vrot.slane %v268, 1
    %v270 = vadd.f32 %v268, %v269
    %v271 = vmul.f32 %v264, 0.125
    %v272 = vmul.f32 %v270, 0.125
    %v273 = vmul.f32 %v255, %v255
    %v274 = vmul.f32 %v256, %v256
    %v275 = vsub.f32 %v271, %v273
    %v276 = vsub.f32 %v272, %v274
    %v277 = vmax.f32 %v275, 0.0
    %v278 = vmax.f32 %v276, 0.0
    %v279 = vadd.f32 %v277, 1e-05
    %v280 = vadd.f32 %v278, 1e-05
    %v281 = vrsqrt.pop %v279
    %v282 = vrsqrt.pop %v280
    %v284 = vlaneseq
    %v285 = vshrl.u32 %v284, 7
    %v286 = vsub.s32 0, %v285
    %v287 = vrot.slane %v240, %v286
    %v288 = vlaneseq
    %v289 = vshrl.u32 %v288, 7
    %v290 = vsub.s32 1, %v289
    %v291 = vrot.slane %v240, %v290
    %v294 = vmul.f32 %v281, %v287
    %v295 = vmul.f32 %v282, %v291
    %v296 = vmul.f32 %v255, %v294
    %v297 = vmul.f32 %v256, %v295
    %v300 = vcombine.low %v296, %v297
    %v302 = vunpack.c.l.s4 1966171168
    %v303 = vunpack.c.0.s8 %v302
    %v304 = vlaneseq
    %v305 = vshrl.u32 %v304, 7
    %v306 = vsub.s32 %v303, %v305
    %v307 = vrot.slane %v300, %v306
    %v309 = vunpack.c.l.s4 1966171168
    %v310 = vunpack.c.0.s8 %v309
    %v311 = vlaneseq
    %v312 = vshrl.u32 %v311, 7
    %v313 = vsub.s32 %v310, %v312
    %v314 = vrot.slane %v307, %v313
    %v316 = vsub.f32 %v242, %v314
    %v317 = vlaneseq
    %v318 = vshrl.u32 %v317, 7
    %v319 = vsub.s32 0, %v318
    %v320 = vrot.slane %v294, %v319
    %v321 = vlaneseq
    %v322 = vshrl.u32 %v321, 7
    %v323 = vsub.s32 0, %v322
    %v324 = vrot.slane %v295, %v323
    %v325 = vmul.f32 %v238, %v320
    %v326 = vmul.f32 %v239, %v324
    %v328 = vlaneseq
    %v329 = vshrl.u32 %v328, 7
    %v330 = vsub.s32 0, %v329
    %v331 = vrot.slane %v316, %v330
    %v332 = vlaneseq
    %v333 = vshrl.u32 %v332, 7
    %v334 = vsub.s32 1, %v333
    %v335 = vrot.slane %v316, %v334
    %v338 = vadd.f32 %v325, %v331
    %v339 = vadd.f32 %v326, %v335
    %v340 = vmax.f32 %v338, 0.0
    %v341 = vmax.f32 %v339, 0.0
    %v342 = vld [vmem:[#allocation4 + $0x20] sm:$0xff]
    %v343 = vld [vmem:[#allocation4 + $0x30] sm:$0xff]
    %v344 = vld [vmem:[#allocation4 + $0x40] sm:$0xff]
    %v345 = vld [vmem:[#allocation4 + $0x50] sm:$0xff]
    %v346 = vld [vmem:[#allocation4 + $0x60] sm:$0xff]
    %v347 = vld [vmem:[#allocation4 + $0x70] sm:$0xff]
    %v348 = vld [vmem:[#allocation4 + $0x80] sm:$0xff]
    %v349 = vld [vmem:[#allocation4 + $0x90] sm:$0xff]
    %v350 = vld [vmem:[#allocation4 + $0xa0] sm:$0xff]
    %v351 = vld [vmem:[#allocation4 + $0xb0] sm:$0xff]
    %v352 = vld [vmem:[#allocation4 + $0xc0] sm:$0xff]
    %v353 = vld [vmem:[#allocation4 + $0xd0] sm:$0xff]
    %v354 = vld [vmem:[#allocation4 + $0xe0] sm:$0xff]
    %v355 = vld [vmem:[#allocation4 + $0xf0] sm:$0xff]
    %v356 = vld [vmem:[#allocation4 + $0x100] sm:$0xff]
    %v357 = vld [vmem:[#allocation4 + $0x110] sm:$0xff]
    %v358 = vld [vmem:[#allocation4 + $0x120] sm:$0xff]
    %v359 = vld [vmem:[#allocation4 + $0x130] sm:$0xff]
    %v360 = vld [vmem:[#allocation4 + $0x140] sm:$0xff]
    %v361 = vld [vmem:[#allocation4 + $0x150] sm:$0xff]
    %v362 = vld [vmem:[#allocation4 + $0x160] sm:$0xff]
    %v363 = vld [vmem:[#allocation4 + $0x170] sm:$0xff]
    %v364 = vld [vmem:[#allocation4 + $0x180] sm:$0xff]
    %v365 = vld [vmem:[#allocation4 + $0x190] sm:$0xff]
    %v366 = vld [vmem:[#allocation4 + $0x1a0] sm:$0xff]
    %v367 = vld [vmem:[#allocation4 + $0x1b0] sm:$0xff]
    %v368 = vld [vmem:[#allocation4 + $0x1c0] sm:$0xff]
    %v369 = vld [vmem:[#allocation4 + $0x1d0] sm:$0xff]
    %v370 = vld [vmem:[#allocation4 + $0x1e0] sm:$0xff]
    %v371 = vld [vmem:[#allocation4 + $0x1f0] sm:$0xff]
    %v372 = vld [vmem:[#allocation4 + $0x200] sm:$0xff]
    %v373 = vld [vmem:[#allocation4 + $0x210] sm:$0xff]
    %v374 = vld [vmem:[#allocation4 + $0x220] sm:$0xff]
    %v375 = vld [vmem:[#allocation4 + $0x230] sm:$0xff]
    %v376 = vld [vmem:[#allocation4 + $0x240] sm:$0xff]
    %v377 = vld [vmem:[#allocation4 + $0x250] sm:$0xff]
    %v378 = vld [vmem:[#allocation4 + $0x260] sm:$0xff]
    %v379 = vld [vmem:[#allocation4 + $0x270] sm:$0xff]
    %v380 = vld [vmem:[#allocation4 + $0x280] sm:$0xff]
    %v381 = vld [vmem:[#allocation4 + $0x290] sm:$0xff]
    %v382 = vld [vmem:[#allocation4 + $0x2a0] sm:$0xff]
    %v383 = vld [vmem:[#allocation4 + $0x2b0] sm:$0xff]
    %v384 = vld [vmem:[#allocation4 + $0x2c0] sm:$0xff]
    %v385 = vld [vmem:[#allocation4 + $0x2d0] sm:$0xff]
    %v386 = vld [vmem:[#allocation4 + $0x2e0] sm:$0xff]
    %v387 = vld [vmem:[#allocation4 + $0x2f0] sm:$0xff]
    %v388 = vld [vmem:[#allocation4 + $0x300] sm:$0xff]
    %v389 = vld [vmem:[#allocation4 + $0x310] sm:$0xff]
    %v390 = vld [vmem:[#allocation4 + $0x320] sm:$0xff]
    %v391 = vld [vmem:[#allocation4 + $0x330] sm:$0xff]
    %v392 = vld [vmem:[#allocation4 + $0x340] sm:$0xff]
    %v393 = vld [vmem:[#allocation4 + $0x350] sm:$0xff]
    %v394 = vld [vmem:[#allocation4 + $0x360] sm:$0xff]
    %v395 = vld [vmem:[#allocation4 + $0x370] sm:$0xff]
    %v396 = vld [vmem:[#allocation4 + $0x380] sm:$0xff]
    %v397 = vld [vmem:[#allocation4 + $0x390] sm:$0xff]
    %v398 = vld [vmem:[#allocation4 + $0x3a0] sm:$0xff]
    %v399 = vld [vmem:[#allocation4 + $0x3b0] sm:$0xff]
    %v400 = vld [vmem:[#allocation4 + $0x3c0] sm:$0xff]
    %v401 = vld [vmem:[#allocation4 + $0x3d0] sm:$0xff]
    %v402 = vld [vmem:[#allocation4 + $0x3e0] sm:$0xff]
    %v403 = vld [vmem:[#allocation4 + $0x3f0] sm:$0xff]
    %v404 = vld [vmem:[#allocation4 + $0x400] sm:$0xff]
    %v405 = vld [vmem:[#allocation4 + $0x410] sm:$0xff]
    %406 = vmatprep.subr.mxu0 0.0
    %407 = vmatpush1.msra.mxu0 %v357
    %408 = vmatprep.subr.mxu0 0.0
    %409 = vmatpush1.msra.mxu0 %v356
    %410 = vmatprep.subr.mxu0 0.0
    %411 = vmatpush1.msra.mxu0 %v355
    %412 = vmatprep.subr.mxu0 0.0
    %413 = vmatpush1.msra.mxu0 %v354
    %414 = vmatprep.subr.mxu0 0.0
    %415 = vmatpush1.msra.mxu0 %v353
    %416 = vmatprep.subr.mxu0 0.0
    %417 = vmatpush1.msra.mxu0 %v352
    %418 = vmatprep.subr.mxu0 0.0
    %419 = vmatpush1.msra.mxu0 %v351
    %420 = vmatprep.subr.mxu0 0.0
    %421 = vmatpush1.msra.mxu0 %v350
    %422 = vmatprep.subr.mxu0 0.0
    %423 = vmatpush1.msra.mxu0 %v349
    %424 = vmatprep.subr.mxu0 0.0
    %425 = vmatpush1.msra.mxu0 %v348
    %426 = vmatprep.subr.mxu0 0.0
    %427 = vmatpush1.msra.mxu0 %v347
    %428 = vmatprep.subr.mxu0 0.0
    %429 = vmatpush1.msra.mxu0 %v346
    %430 = vmatprep.subr.mxu0 0.0
    %431 = vmatpush1.msra.mxu0 %v345
    %432 = vmatprep.subr.mxu0 0.0
    %433 = vmatpush1.msra.mxu0 %v344
    %434 = vmatprep.subr.mxu0 0.0
    %435 = vmatpush1.msra.mxu0 %v343
    %436 = vmatprep.subr.mxu0 0.0
    %437 = vmatpush1.msra.mxu0 %v342
    %438 = vmatprep.subr.mxu0 0.0
    %439 = vmatpush2.msra.mxu0 %v373
    %440 = vmatprep.subr.mxu0 0.0
    %441 = vmatpush2.msra.mxu0 %v372
    %442 = vmatprep.subr.mxu0 0.0
    %443 = vmatpush2.msra.mxu0 %v371
    %444 = vmatprep.subr.mxu0 0.0
    %445 = vmatpush2.msra.mxu0 %v370
    %446 = vmatprep.subr.mxu0 0.0
    %447 = vmatpush2.msra.mxu0 %v369
    %448 = vmatprep.subr.mxu0 0.0
    %449 = vmatpush2.msra.mxu0 %v368
    %450 = vmatprep.subr.mxu0 0.0
    %451 = vmatpush2.msra.mxu0 %v367
    %452 = vmatprep.subr.mxu0 0.0
    %453 = vmatpush2.msra.mxu0 %v366
    %454 = vmatprep.subr.mxu0 0.0
    %455 = vmatpush2.msra.mxu0 %v365
    %456 = vmatprep.subr.mxu0 0.0
    %457 = vmatpush2.msra.mxu0 %v364
    %458 = vmatprep.subr.mxu0 0.0
    %459 = vmatpush2.msra.mxu0 %v363
    %460 = vmatprep.subr.mxu0 0.0
    %461 = vmatpush2.msra.mxu0 %v362
    %462 = vmatprep.subr.mxu0 0.0
    %463 = vmatpush2.msra.mxu0 %v361
    %464 = vmatprep.subr.mxu0 0.0
    %465 = vmatpush2.msra.mxu0 %v360
    %466 = vmatprep.subr.mxu0 0.0
    %467 = vmatpush2.msra.mxu0 %v359
    %468 = vmatprep.subr.mxu0 0.0
    %469 = vmatpush2.msra.mxu0 %v358
    %470 = vmatprep.mubr.f32.mxu0 %v341
    %471 = vmatmul.mubr.f32.gmra.mxu0 %v340
    %v472 = vpop.f32.mrf.mxu0
    %v473 = vadd.f32 0.0, %v472
    %v474 = vpop.f32.mrf.mxu0
    %475 = vdwg.mxu0
    %476 = vmatprep.subr.mxu0 0.0
    %477 = vmatpush1.msra.mxu0 %v389
    %478 = vmatprep.subr.mxu0 0.0
    %479 = vmatpush1.msra.mxu0 %v388
    %480 = vmatprep.subr.mxu0 0.0
    %481 = vmatpush1.msra.mxu0 %v387
    %482 = vmatprep.subr.mxu0 0.0
    %483 = vmatpush1.msra.mxu0 %v386
    %484 = vmatprep.subr.mxu0 0.0
    %485 = vmatpush1.msra.mxu0 %v385
    %486 = vmatprep.subr.mxu0 0.0
    %487 = vmatpush1.msra.mxu0 %v384
    %488 = vmatprep.subr.mxu0 0.0
    %489 = vmatpush1.msra.mxu0 %v383
    %490 = vmatprep.subr.mxu0 0.0
    %491 = vmatpush1.msra.mxu0 %v382
    %492 = vmatprep.subr.mxu0 0.0
    %493 = vmatpush1.msra.mxu0 %v381
    %494 = vmatprep.subr.mxu0 0.0
    %495 = vmatpush1.msra.mxu0 %v380
    %496 = vmatprep.subr.mxu0 0.0
    %497 = vmatpush1.msra.mxu0 %v379
    %498 = vmatprep.subr.mxu0 0.0
    %499 = vmatpush1.msra.mxu0 %v378
    %500 = vmatprep.subr.mxu0 0.0
    %501 = vmatpush1.msra.mxu0 %v377
    %502 = vmatprep.subr.mxu0 0.0
    %503 = vmatpush1.msra.mxu0 %v376
    %504 = vmatprep.subr.mxu0 0.0
    %505 = vmatpush1.msra.mxu0 %v375
    %506 = vmatprep.subr.mxu0 0.0
    %507 = vmatpush1.msra.mxu0 %v374
    %508 = vmatprep.subr.mxu0 0.0
    %509 = vmatpush2.msra.mxu0 %v405
    %510 = vmatprep.subr.mxu0 0.0
    %511 = vmatpush2.msra.mxu0 %v404
    %512 = vmatprep.subr.mxu0 0.0
    %513 = vmatpush2.msra.mxu0 %v403
    %514 = vmatprep.subr.mxu0 0.0
    %515 = vmatpush2.msra.mxu0 %v402
    %516 = vmatprep.subr.mxu0 0.0
    %517 = vmatpush2.msra.mxu0 %v401
    %518 = vmatprep.subr.mxu0 0.0
    %519 = vmatpush2.msra.mxu0 %v400
    %520 = vmatprep.subr.mxu0 0.0
    %521 = vmatpush2.msra.mxu0 %v399
    %522 = vmatprep.subr.mxu0 0.0
    %523 = vmatpush2.msra.mxu0 %v398
    %524 = vmatprep.subr.mxu0 0.0
    %525 = vmatpush2.msra.mxu0 %v397
    %526 = vmatprep.subr.mxu0 0.0
    %527 = vmatpush2.msra.mxu0 %v396
    %528 = vmatprep.subr.mxu0 0.0
    %529 = vmatpush2.msra.mxu0 %v395
    %530 = vmatprep.subr.mxu0 0.0
    %531 = vmatpush2.msra.mxu0 %v394
    %532 = vmatprep.subr.mxu0 0.0
    %533 = vmatpush2.msra.mxu0 %v393
    %534 = vmatprep.subr.mxu0 0.0
    %535 = vmatpush2.msra.mxu0 %v392
    %536 = vmatprep.subr.mxu0 0.0
    %537 = vmatpush2.msra.mxu0 %v391
    %538 = vmatprep.subr.mxu0 0.0
    %539 = vmatpush2.msra.mxu0 %v390
    %540 = vmatprep.mubr.f32.mxu0 %v341
    %541 = vmatmul.mubr.f32.gmra.mxu0 %v340
    %v542 = vpop.f32.mrf.mxu0
    %v543 = vadd.f32 0.0, %v542
    %v544 = vpop.f32.mrf.mxu0
    %545 = vdwg.mxu0
    %v546 = vld [vmem:[#allocation6 + $0x2] ss:$0 sm:$0xff]
    %v547 = vld [vmem:[#allocation6 + $0x3] ss:$0 sm:$0xff]
    %v548 = vadd.f32 %v473, %v543
    %v549 = vrot.slane %v548, 4
    %v550 = vadd.f32 %v548, %v549
    %v551 = vrot.slane %v550, 2
    %v552 = vadd.f32 %v550, %v551
    %v553 = vrot.slane %v552, 1
    %v554 = vadd.f32 %v552, %v553
    %v555 = vmul.f32 %v554, 0.0625
    %v556 = vmul.f32 %v473, %v473
    %v557 = vmul.f32 %v543, %v543
    %v558 = vadd.f32 %v556, %v557
    %v559 = vrot.slane %v558, 4
    %v560 = vadd.f32 %v558, %v559
    %v561 = vrot.slane %v560, 2
    %v562 = vadd.f32 %v560, %v561
    %v563 = vrot.slane %v562, 1
    %v564 = vadd.f32 %v562, %v563
    %v565 = vmul.f32 %v564, 0.0625
    %v566 = vmul.f32 %v555, %v555
    %v567 = vsub.f32 %v565, %v566
    %v568 = vmax.f32 %v567, 0.0
    %v569 = vadd.f32 %v568, 1e-05
    %v570 = vrsqrt.pop %v569
    %v571 = vmul.f32 %v570, %v546
    %v572 = vmul.f32 %v555, %v571
    %v573 = vsub.f32 %v547, %v572
    %v574 = vmul.f32 %v473, %v571
    %v575 = vmul.f32 %v543, %v571
    %v576 = vadd.f32 %v574, %v573
    %v577 = vadd.f32 %v575, %v573
    %v578 = vmax.f32 %v576, 0.0
    %v579 = vmax.f32 %v577, 0.0
    %v580 = vld [vmem:[#allocation4 + $0x420] sm:$0xff]
    %v581 = vld [vmem:[#allocation4 + $0x430] sm:$0xff]
    %v582 = vld [vmem:[#allocation4 + $0x440] sm:$0xff]
    %v583 = vld [vmem:[#allocation4 + $0x450] sm:$0xff]
    %v584 = vld [vmem:[#allocation4 + $0x460] sm:$0xff]
    %v585 = vld [vmem:[#allocation4 + $0x470] sm:$0xff]
    %v586 = vld [vmem:[#allocation4 + $0x480] sm:$0xff]
    %v587 = vld [vmem:[#allocation4 + $0x490] sm:$0xff]
    %v588 = vld [vmem:[#allocation4 + $0x4a0] sm:$0xff]
    %v589 = vld [vmem:[#allocation4 + $0x4b0] sm:$0xff]
    %v590 = vld [vmem:[#allocation4 + $0x4c0] sm:$0xff]
    %v591 = vld [vmem:[#allocation4 + $0x4d0] sm:$0xff]
    %v592 = vld [vmem:[#allocation4 + $0x4e0] sm:$0xff]
    %v593 = vld [vmem:[#allocation4 + $0x4f0] sm:$0xff]
    %v594 = vld [vmem:[#allocation4 + $0x500] sm:$0xff]
    %v595 = vld [vmem:[#allocation4 + $0x510] sm:$0xff]
    %v596 = vld [vmem:[#allocation4 + $0x520] sm:$0xff]
    %v597 = vld [vmem:[#allocation4 + $0x530] sm:$0xff]
    %v598 = vld [vmem:[#allocation4 + $0x540] sm:$0xff]
    %v599 = vld [vmem:[#allocation4 + $0x550] sm:$0xff]
    %v600 = vld [vmem:[#allocation4 + $0x560] sm:$0xff]
    %v601 = vld [vmem:[#allocation4 + $0x570] sm:$0xff]
    %v602 = vld [vmem:[#allocation4 + $0x580] sm:$0xff]
    %v603 = vld [vmem:[#allocation4 + $0x590] sm:$0xff]
    %v604 = vld [vmem:[#allocation4 + $0x5a0] sm:$0xff]
    %v605 = vld [vmem:[#allocation4 + $0x5b0] sm:$0xff]
    %v606 = vld [vmem:[#allocation4 + $0x5c0] sm:$0xff]
    %v607 = vld [vmem:[#allocation4 + $0x5d0] sm:$0xff]
    %v608 = vld [vmem:[#allocation4 + $0x5e0] sm:$0xff]
    %v609 = vld [vmem:[#allocation4 + $0x5f0] sm:$0xff]
    %v610 = vld [vmem:[#allocation4 + $0x600] sm:$0xff]
    %v611 = vld [vmem:[#allocation4 + $0x610] sm:$0xff]
    %612 = vmatprep.subr.mxu0 0.0
    %613 = vmatpush1.msra.mxu0 %v595
    %614 = vmatprep.subr.mxu0 0.0
    %615 = vmatpush1.msra.mxu0 %v594
    %616 = vmatprep.subr.mxu0 0.0
    %617 = vmatpush1.msra.mxu0 %v593
    %618 = vmatprep.subr.mxu0 0.0
    %619 = vmatpush1.msra.mxu0 %v592
    %620 = vmatprep.subr.mxu0 0.0
    %621 = vmatpush1.msra.mxu0 %v591
    %622 = vmatprep.subr.mxu0 0.0
    %623 = vmatpush1.msra.mxu0 %v590
    %624 = vmatprep.subr.mxu0 0.0
    %625 = vmatpush1.msra.mxu0 %v589
    %626 = vmatprep.subr.mxu0 0.0
    %627 = vmatpush1.msra.mxu0 %v588
    %628 = vmatprep.subr.mxu0 0.0
    %629 = vmatpush1.msra.mxu0 %v587
    %630 = vmatprep.subr.mxu0 0.0
    %631 = vmatpush1.msra.mxu0 %v586
    %632 = vmatprep.subr.mxu0 0.0
    %633 = vmatpush1.msra.mxu0 %v585
    %634 = vmatprep.subr.mxu0 0.0
    %635 = vmatpush1.msra.mxu0 %v584
    %636 = vmatprep.subr.mxu0 0.0
    %637 = vmatpush1.msra.mxu0 %v583
    %638 = vmatprep.subr.mxu0 0.0
    %639 = vmatpush1.msra.mxu0 %v582
    %640 = vmatprep.subr.mxu0 0.0
    %641 = vmatpush1.msra.mxu0 %v581
    %642 = vmatprep.subr.mxu0 0.0
    %643 = vmatpush1.msra.mxu0 %v580
    %644 = vmatprep.subr.mxu0 0.0
    %645 = vmatpush2.msra.mxu0 0.0
    %646 = vmatprep.subr.mxu0 0.0
    %647 = vmatpush2.msra.mxu0 0.0
    %648 = vmatprep.subr.mxu0 0.0
    %649 = vmatpush2.msra.mxu0 0.0
    %650 = vmatprep.subr.mxu0 0.0
    %651 = vmatpush2.msra.mxu0 0.0
    %652 = vmatprep.subr.mxu0 0.0
    %653 = vmatpush2.msra.mxu0 0.0
    %654 = vmatprep.subr.mxu0 0.0
    %655 = vmatpush2.msra.mxu0 0.0
    %656 = vmatprep.subr.mxu0 0.0
    %657 = vmatpush2.msra.mxu0 0.0
    %658 = vmatprep.subr.mxu0 0.0
    %659 = vmatpush2.msra.mxu0 0.0
    %660 = vmatprep.subr.mxu0 0.0
    %661 = vmatpush2.msra.mxu0 0.0
    %662 = vmatprep.subr.mxu0 0.0
    %663 = vmatpush2.msra.mxu0 0.0
    %664 = vmatprep.subr.mxu0 0.0
    %665 = vmatpush2.msra.mxu0 0.0
    %666 = vmatprep.subr.mxu0 0.0
    %667 = vmatpush2.msra.mxu0 0.0
    %668 = vmatprep.subr.mxu0 0.0
    %669 = vmatpush2.msra.mxu0 0.0
    %670 = vmatprep.subr.mxu0 0.0
    %671 = vmatpush2.msra.mxu0 0.0
    %672 = vmatprep.subr.mxu0 0.0
    %673 = vmatpush2.msra.mxu0 0.0
    %674 = vmatprep.subr.mxu0 0.0
    %675 = vmatpush2.msra.mxu0 0.0
    %676 = vmatprep.mubr.f32.mxu0 0.0
    %677 = vmatmul.mubr.f32.gmra.mxu0 %v578
    %v678 = vpop.f32.mrf.mxu0
    %v679 = vadd.f32 0.0, %v678
    %v680 = vpop.f32.mrf.mxu0
    %681 = vmatprep.mubr.f32.mxu0 0.0
    %682 = vmatmul.mubr.f32.gmra.mxu0 %v579
    %v683 = vpop.f32.mrf.mxu0
    %v684 = vadd.f32 0.0, %v683
    %v685 = vpop.f32.mrf.mxu0
    %686 = vdwg.mxu0
    %687 = vmatprep.subr.mxu0 0.0
    %688 = vmatpush1.msra.mxu0 %v611
    %689 = vmatprep.subr.mxu0 0.0
    %690 = vmatpush1.msra.mxu0 %v610
    %691 = vmatprep.subr.mxu0 0.0
    %692 = vmatpush1.msra.mxu0 %v609
    %693 = vmatprep.subr.mxu0 0.0
    %694 = vmatpush1.msra.mxu0 %v608
    %695 = vmatprep.subr.mxu0 0.0
    %696 = vmatpush1.msra.mxu0 %v607
    %697 = vmatprep.subr.mxu0 0.0
    %698 = vmatpush1.msra.mxu0 %v606
    %699 = vmatprep.subr.mxu0 0.0
    %700 = vmatpush1.msra.mxu0 %v605
    %701 = vmatprep.subr.mxu0 0.0
    %702 = vmatpush1.msra.mxu0 %v604
    %703 = vmatprep.subr.mxu0 0.0
    %704 = vmatpush1.msra.mxu0 %v603
    %705 = vmatprep.subr.mxu0 0.0
    %706 = vmatpush1.msra.mxu0 %v602
    %707 = vmatprep.subr.mxu0 0.0
    %708 = vmatpush1.msra.mxu0 %v601
    %709 = vmatprep.subr.mxu0 0.0
    %710 = vmatpush1.msra.mxu0 %v600
    %711 = vmatprep.subr.mxu0 0.0
    %712 = vmatpush1.msra.mxu0 %v599
    %713 = vmatprep.subr.mxu0 0.0
    %714 = vmatpush1.msra.mxu0 %v598
    %715 = vmatprep.subr.mxu0 0.0
    %716 = vmatpush1.msra.mxu0 %v597
    %717 = vmatprep.subr.mxu0 0.0
    %718 = vmatpush1.msra.mxu0 %v596
    %719 = vmatprep.subr.mxu0 0.0
    %720 = vmatpush2.msra.mxu0 0.0
    %721 = vmatprep.subr.mxu0 0.0
    %722 = vmatpush2.msra.mxu0 0.0
    %723 = vmatprep.subr.mxu0 0.0
    %724 = vmatpush2.msra.mxu0 0.0
    %725 = vmatprep.subr.mxu0 0.0
    %726 = vmatpush2.msra.mxu0 0.0
    %727 = vmatprep.subr.mxu0 0.0
    %728 = vmatpush2.msra.mxu0 0.0
    %729 = vmatprep.subr.mxu0 0.0
    %730 = vmatpush2.msra.mxu0 0.0
    %731 = vmatprep.subr.mxu0 0.0
    %732 = vmatpush2.msra.mxu0 0.0
    %733 = vmatprep.subr.mxu0 0.0
    %734 = vmatpush2.msra.mxu0 0.0
    %735 = vmatprep.subr.mxu0 0.0
    %736 = vmatpush2.msra.mxu0 0.0
    %737 = vmatprep.subr.mxu0 0.0
    %738 = vmatpush2.msra.mxu0 0.0
    %739 = vmatprep.subr.mxu0 0.0
    %740 = vmatpush2.msra.mxu0 0.0
    %741 = vmatprep.subr.mxu0 0.0
    %742 = vmatpush2.msra.mxu0 0.0
    %743 = vmatprep.subr.mxu0 0.0
    %744 = vmatpush2.msra.mxu0 0.0
    %745 = vmatprep.subr.mxu0 0.0
    %746 = vmatpush2.msra.mxu0 0.0
    %747 = vmatprep.subr.mxu0 0.0
    %748 = vmatpush2.msra.mxu0 0.0
    %749 = vmatprep.subr.mxu0 0.0
    %750 = vmatpush2.msra.mxu0 0.0
    %751 = vmatprep.mubr.f32.mxu0 0.0
    %752 = vmatmul.mubr.f32.gmra.mxu0 %v578
    %v753 = vpop.f32.mrf.mxu0
    %v754 = vadd.f32 0.0, %v753
    %v755 = vpop.f32.mrf.mxu0
    %756 = vmatprep.mubr.f32.mxu0 0.0
    %757 = vmatmul.mubr.f32.gmra.mxu0 %v579
    %v758 = vpop.f32.mrf.mxu0
    %v759 = vadd.f32 0.0, %v758
    %v760 = vpop.f32.mrf.mxu0
    %761 = vdwg.mxu0
    %v762 = vld [vmem:[#allocation6 + $0x4] ss:$0 sm:$0xff]
    %v763 = vld [vmem:[#allocation6 + $0x5] ss:$0 sm:$0xff]
    %vm764 = vcmask 523264
    %v765 = vsel %vm764, %v679, 0.0
    %v766 = vsel %vm764, %v684, 0.0
    %v767 = vadd.f32 %v765, %v766
    %v768 = vsel %vm764, %v754, 0.0
    %v769 = vadd.f32 %v767, %v768
    %v770 = vsel %vm764, %v759, 0.0
    %v771 = vadd.f32 %v769, %v770
    %v772 = vrot.slane %v771, 4
    %v773 = vadd.f32 %v771, %v772
    %v774 = vrot.slane %v773, 2
    %v775 = vadd.f32 %v773, %v774
    %v776 = vrot.slane %v775, 1
    %v777 = vadd.f32 %v775, %v776
    %v778 = vmul.f32 %v777, 0.03125
    %v779 = vmul.f32 %v679, %v679
    %v780 = vmul.f32 %v684, %v684
    %v781 = vmul.f32 %v754, %v754
    %v782 = vmul.f32 %v759, %v759
    %v783 = vsel %vm764, %v779, 0.0
    %v784 = vsel %vm764, %v780, 0.0
    %v785 = vadd.f32 %v783, %v784
    %v786 = vsel %vm764, %v781, 0.0
    %v787 = vadd.f32 %v785, %v786
    %v788 = vsel %vm764, %v782, 0.0
    %v789 = vadd.f32 %v787, %v788
    %v790 = vrot.slane %v789, 4
    %v791 = vadd.f32 %v789, %v790
    %v792 = vrot.slane %v791, 2
    %v793 = vadd.f32 %v791, %v792
    %v794 = vrot.slane %v793, 1
    %v795 = vadd.f32 %v793, %v794
    %v796 = vmul.f32 %v795, 0.03125
    %v797 = vmul.f32 %v778, %v778
    %v798 = vsub.f32 %v796, %v797
    %v799 = vmax.f32 %v798, 0.0
    %v800 = vadd.f32 %v799, 1e-05
    %v801 = vrsqrt.pop %v800
    %v802 = vmul.f32 %v801, %v762
    %v803 = vmul.f32 %v778, %v802
    %v804 = vsub.f32 %v763, %v803
    %v805 = vmul.f32 %v679, %v802
    %v806 = vmul.f32 %v684, %v802
    %v807 = vmul.f32 %v754, %v802
    %v808 = vmul.f32 %v759, %v802
    %v809 = vadd.f32 %v805, %v804
    %v810 = vadd.f32 %v806, %v804
    %v811 = vadd.f32 %v807, %v804
    %v812 = vadd.f32 %v808, %v804
    %v813 = vmax.f32 %v809, 0.0
    %v814 = vmax.f32 %v810, 0.0
    %v815 = vmax.f32 %v811, 0.0
    %v816 = vmax.f32 %v812, 0.0
    %v817 = vld [vmem:[#allocation4 + $0x620] sm:$0xff]
    %v818 = vld [vmem:[#allocation4 + $0x630] sm:$0xff]
    %v819 = vld [vmem:[#allocation4 + $0x640] sm:$0xff]
    %v820 = vld [vmem:[#allocation4 + $0x650] sm:$0xff]
    %v821 = vld [vmem:[#allocation4 + $0x660] sm:$0xff]
    %v822 = vld [vmem:[#allocation4 + $0x670] sm:$0xff]
    %v823 = vld [vmem:[#allocation4 + $0x680] sm:$0xff]
    %v824 = vld [vmem:[#allocation4 + $0x690] sm:$0xff]
    %v825 = vld [vmem:[#allocation4 + $0x6a0] sm:$0xff]
    %v826 = vld [vmem:[#allocation4 + $0x6b0] sm:$0xff]
    %v827 = vld [vmem:[#allocation4 + $0x6c0] sm:$0xff]
    %v828 = vld [vmem:[#allocation4 + $0x6d0] sm:$0xff]
    %v829 = vld [vmem:[#allocation4 + $0x6e0] sm:$0xff]
    %v830 = vld [vmem:[#allocation4 + $0x6f0] sm:$0xff]
    %v831 = vld [vmem:[#allocation4 + $0x700] sm:$0xff]
    %v832 = vld [vmem:[#allocation4 + $0x710] sm:$0xff]
    %v834 = vsel %vm764, %v813, 0
    %v837 = vsel %vm764, %v814, 0
    %v840 = vsel %vm764, %v815, 0
    %v843 = vsel %vm764, %v816, 0
    %845 = vmatprep.subr.mxu0 0.0
    %846 = vmatpush1.msra.mxu0 0.0
    %847 = vmatprep.subr.mxu0 0.0
    %848 = vmatpush1.msra.mxu0 0.0
    %849 = vmatprep.subr.mxu0 0.0
    %850 = vmatpush1.msra.mxu0 0.0
    %851 = vmatprep.subr.mxu0 0.0
    %852 = vmatpush1.msra.mxu0 0.0
    %853 = vmatprep.subr.mxu0 0.0
    %854 = vmatpush1.msra.mxu0 0.0
    %855 = vmatprep.subr.mxu0 0.0
    %856 = vmatpush1.msra.mxu0 0.0
    %857 = vmatprep.subr.mxu0 0.0
    %858 = vmatpush1.msra.mxu0 0.0
    %859 = vmatprep.subr.mxu0 0.0
    %860 = vmatpush1.msra.mxu0 0.0
    %861 = vmatprep.subr.mxu0 0.0
    %862 = vmatpush1.msra.mxu0 %v824
    %863 = vmatprep.subr.mxu0 0.0
    %864 = vmatpush1.msra.mxu0 %v823
    %865 = vmatprep.subr.mxu0 0.0
    %866 = vmatpush1.msra.mxu0 %v822
    %867 = vmatprep.subr.mxu0 0.0
    %868 = vmatpush1.msra.mxu0 %v821
    %869 = vmatprep.subr.mxu0 0.0
    %870 = vmatpush1.msra.mxu0 %v820
    %871 = vmatprep.subr.mxu0 0.0
    %872 = vmatpush1.msra.mxu0 %v819
    %873 = vmatprep.subr.mxu0 0.0
    %874 = vmatpush1.msra.mxu0 %v818
    %875 = vmatprep.subr.mxu0 0.0
    %876 = vmatpush1.msra.mxu0 %v817
    %877 = vmatprep.subr.mxu0 0.0
    %878 = vmatpush2.msra.mxu0 0.0
    %879 = vmatprep.subr.mxu0 0.0
    %880 = vmatpush2.msra.mxu0 0.0
    %881 = vmatprep.subr.mxu0 0.0
    %882 = vmatpush2.msra.mxu0 0.0
    %883 = vmatprep.subr.mxu0 0.0
    %884 = vmatpush2.msra.mxu0 0.0
    %885 = vmatprep.subr.mxu0 0.0
    %886 = vmatpush2.msra.mxu0 0.0
    %887 = vmatprep.subr.mxu0 0.0
    %888 = vmatpush2.msra.mxu0 0.0
    %889 = vmatprep.subr.mxu0 0.0
    %890 = vmatpush2.msra.mxu0 0.0
    %891 = vmatprep.subr.mxu0 0.0
    %892 = vmatpush2.msra.mxu0 0.0
    %893 = vmatprep.subr.mxu0 0.0
    %894 = vmatpush2.msra.mxu0 0.0
    %895 = vmatprep.subr.mxu0 0.0
    %896 = vmatpush2.msra.mxu0 0.0
    %897 = vmatprep.subr.mxu0 0.0
    %898 = vmatpush2.msra.mxu0 0.0
    %899 = vmatprep.subr.mxu0 0.0
    %900 = vmatpush2.msra.mxu0 0.0
    %901 = vmatprep.subr.mxu0 0.0
    %902 = vmatpush2.msra.mxu0 0.0
    %903 = vmatprep.subr.mxu0 0.0
    %904 = vmatpush2.msra.mxu0 0.0
    %905 = vmatprep.subr.mxu0 0.0
    %906 = vmatpush2.msra.mxu0 0.0
    %907 = vmatprep.subr.mxu0 0.0
    %908 = vmatpush2.msra.mxu0 0.0
    %909 = vmatprep.mubr.f32.mxu0 0.0
    %910 = vmatmul.mubr.f32.gmra.mxu0 %v834
    %v911 = vpop.f32.mrf.mxu0
    %v912 = vadd.f32 0.0, %v911
    %v913 = vpop.f32.mrf.mxu0
    %914 = vmatprep.mubr.f32.mxu0 0.0
    %915 = vmatmul.mubr.f32.gmra.mxu0 %v837
    %v916 = vpop.f32.mrf.mxu0
    %v917 = vadd.f32 0.0, %v916
    %v918 = vpop.f32.mrf.mxu0
    %919 = vmatprep.mubr.f32.mxu0 0.0
    %920 = vmatmul.mubr.f32.gmra.mxu0 %v840
    %v921 = vpop.f32.mrf.mxu0
    %v922 = vadd.f32 0.0, %v921
    %v923 = vpop.f32.mrf.mxu0
    %924 = vmatprep.mubr.f32.mxu0 0.0
    %925 = vmatmul.mubr.f32.gmra.mxu0 %v843
    %v926 = vpop.f32.mrf.mxu0
    %v927 = vadd.f32 0.0, %v926
    %v928 = vpop.f32.mrf.mxu0
    %929 = vdwg.mxu0
    %930 = vmatprep.subr.mxu0 0.0
    %931 = vmatpush1.msra.mxu0 0.0
    %932 = vmatprep.subr.mxu0 0.0
    %933 = vmatpush1.msra.mxu0 0.0
    %934 = vmatprep.subr.mxu0 0.0
    %935 = vmatpush1.msra.mxu0 0.0
    %936 = vmatprep.subr.mxu0 0.0
    %937 = vmatpush1.msra.mxu0 0.0
    %938 = vmatprep.subr.mxu0 0.0
    %939 = vmatpush1.msra.mxu0 0.0
    %940 = vmatprep.subr.mxu0 0.0
    %941 = vmatpush1.msra.mxu0 0.0
    %942 = vmatprep.subr.mxu0 0.0
    %943 = vmatpush1.msra.mxu0 0.0
    %944 = vmatprep.subr.mxu0 0.0
    %945 = vmatpush1.msra.mxu0 0.0
    %946 = vmatprep.subr.mxu0 0.0
    %947 = vmatpush1.msra.mxu0 %v832
    %948 = vmatprep.subr.mxu0 0.0
    %949 = vmatpush1.msra.mxu0 %v831
    %950 = vmatprep.subr.mxu0 0.0
    %951 = vmatpush1.msra.mxu0 %v830
    %952 = vmatprep.subr.mxu0 0.0
    %953 = vmatpush1.msra.mxu0 %v829
    %954 = vmatprep.subr.mxu0 0.0
    %955 = vmatpush1.msra.mxu0 %v828
    %956 = vmatprep.subr.mxu0 0.0
    %957 = vmatpush1.msra.mxu0 %v827
    %958 = vmatprep.subr.mxu0 0.0
    %959 = vmatpush1.msra.mxu0 %v826
    %960 = vmatprep.subr.mxu0 0.0
    %961 = vmatpush1.msra.mxu0 %v825
    %962 = vmatprep.subr.mxu0 0.0
    %963 = vmatpush2.msra.mxu0 0.0
    %964 = vmatprep.subr.mxu0 0.0
    %965 = vmatpush2.msra.mxu0 0.0
    %966 = vmatprep.subr.mxu0 0.0
    %967 = vmatpush2.msra.mxu0 0.0
    %968 = vmatprep.subr.mxu0 0.0
    %969 = vmatpush2.msra.mxu0 0.0
    %970 = vmatprep.subr.mxu0 0.0
    %971 = vmatpush2.msra.mxu0 0.0
    %972 = vmatprep.subr.mxu0 0.0
    %973 = vmatpush2.msra.mxu0 0.0
    %974 = vmatprep.subr.mxu0 0.0
    %975 = vmatpush2.msra.mxu0 0.0
    %976 = vmatprep.subr.mxu0 0.0
    %977 = vmatpush2.msra.mxu0 0.0
    %978 = vmatprep.subr.mxu0 0.0
    %979 = vmatpush2.msra.mxu0 0.0
    %980 = vmatprep.subr.mxu0 0.0
    %981 = vmatpush2.msra.mxu0 0.0
    %982 = vmatprep.subr.mxu0 0.0
    %983 = vmatpush2.msra.mxu0 0.0
    %984 = vmatprep.subr.mxu0 0.0
    %985 = vmatpush2.msra.mxu0 0.0
    %986 = vmatprep.subr.mxu0 0.0
    %987 = vmatpush2.msra.mxu0 0.0
    %988 = vmatprep.subr.mxu0 0.0
    %989 = vmatpush2.msra.mxu0 0.0
    %990 = vmatprep.subr.mxu0 0.0
    %991 = vmatpush2.msra.mxu0 0.0
    %992 = vmatprep.subr.mxu0 0.0
    %993 = vmatpush2.msra.mxu0 0.0
    %994 = vmatprep.mubr.f32.mxu0 0.0
    %995 = vmatmul.mubr.f32.gmra.mxu0 %v834
    %v996 = vpop.f32.mrf.mxu0
    %v997 = vadd.f32 0.0, %v996
    %v998 = vpop.f32.mrf.mxu0
    %999 = vmatprep.mubr.f32.mxu0 0.0
    %1000 = vmatmul.mubr.f32.gmra.mxu0 %v837
    %v1001 = vpop.f32.mrf.mxu0
    %v1002 = vadd.f32 0.0, %v1001
    %v1003 = vpop.f32.mrf.mxu0
    %1004 = vmatprep.mubr.f32.mxu0 0.0
    %1005 = vmatmul.mubr.f32.gmra.mxu0 %v840
    %v1006 = vpop.f32.mrf.mxu0
    %v1007 = vadd.f32 0.0, %v1006
    %v1008 = vpop.f32.mrf.mxu0
    %1009 = vmatprep.mubr.f32.mxu0 0.0
    %1010 = vmatmul.mubr.f32.gmra.mxu0 %v843
    %v1011 = vpop.f32.mrf.mxu0
    %v1012 = vadd.f32 0.0, %v1011
    %v1013 = vpop.f32.mrf.mxu0
    %1014 = vdwg.mxu0
    %v1015 = vld [vmem:[#allocation6 + $0x6] ss:$0 sm:$0xff]
    %v1016 = vld [vmem:[#allocation6 + $0x7] ss:$0 sm:$0xff]
    %vm1017 = vcmask 261120
    %v1018 = vsel %vm1017, %v912, 0.0
    %v1019 = vsel %vm1017, %v917, 0.0
    %v1020 = vadd.f32 %v1018, %v1019
    %v1021 = vsel %vm1017, %v922, 0.0
    %v1022 = vadd.f32 %v1020, %v1021
    %v1023 = vsel %vm1017, %v927, 0.0
    %v1024 = vadd.f32 %v1022, %v1023
    %v1025 = vsel %vm1017, %v997, 0.0
    %v1026 = vadd.f32 %v1024, %v1025
    %v1027 = vsel %vm1017, %v1002, 0.0
    %v1028 = vadd.f32 %v1026, %v1027
    %v1029 = vsel %vm1017, %v1007, 0.0
    %v1030 = vadd.f32 %v1028, %v1029
    %v1031 = vsel %vm1017, %v1012, 0.0
    %v1032 = vadd.f32 %v1030, %v1031
    %v1033 = vrot.slane %v1032, 4
    %v1034 = vadd.f32 %v1032, %v1033
    %v1035 = vrot.slane %v1034, 2
    %v1036 = vadd.f32 %v1034, %v1035
    %v1037 = vrot.slane %v1036, 1
    %v1038 = vadd.f32 %v1036, %v1037
    %v1039 = vmul.f32 %v1038, 0.015625
    %v1040 = vmul.f32 %v912, %v912
    %v1041 = vmul.f32 %v917, %v917
    %v1042 = vmul.f32 %v922, %v922
    %v1043 = vmul.f32 %v927, %v927
    %v1044 = vmul.f32 %v997, %v997
    %v1045 = vmul.f32 %v1002, %v1002
    %v1046 = vmul.f32 %v1007, %v1007
    %v1047 = vmul.f32 %v1012, %v1012
    %v1048 = vsel %vm1017, %v1040, 0.0
    %v1049 = vsel %vm1017, %v1041, 0.0
    %v1050 = vadd.f32 %v1048, %v1049
    %v1051 = vsel %vm1017, %v1042, 0.0
    %v1052 = vadd.f32 %v1050, %v1051
    %v1053 = vsel %vm1017, %v1043, 0.0
    %v1054 = vadd.f32 %v1052, %v1053
    %v1055 = vsel %vm1017, %v1044, 0.0
    %v1056 = vadd.f32 %v1054, %v1055
    %v1057 = vsel %vm1017, %v1045, 0.0
    %v1058 = vadd.f32 %v1056, %v1057
    %v1059 = vsel %vm1017, %v1046, 0.0
    %v1060 = vadd.f32 %v1058, %v1059
    %v1061 = vsel %vm1017, %v1047, 0.0
    %v1062 = vadd.f32 %v1060, %v1061
    %v1063 = vrot.slane %v1062, 4
    %v1064 = vadd.f32 %v1062, %v1063
    %v1065 = vrot.slane %v1064, 2
    %v1066 = vadd.f32 %v1064, %v1065
    %v1067 = vrot.slane %v1066, 1
    %v1068 = vadd.f32 %v1066, %v1067
    %v1069 = vmul.f32 %v1068, 0.015625
    %v1070 = vmul.f32 %v1039, %v1039
    %v1071 = vsub.f32 %v1069, %v1070
    %v1072 = vmax.f32 %v1071, 0.0
    %v1073 = vadd.f32 %v1072, 1e-05
    %v1074 = vrsqrt.pop %v1073
    %v1075 = vmul.f32 %v1074, %v1015
    %v1076 = vmul.f32 %v1039, %v1075
    %v1077 = vsub.f32 %v1016, %v1076
    %v1078 = vmul.f32 %v912, %v1075
    %v1079 = vmul.f32 %v917, %v1075
    %v1080 = vmul.f32 %v922, %v1075
    %v1081 = vmul.f32 %v927, %v1075
    %v1082 = vmul.f32 %v997, %v1075
    %v1083 = vmul.f32 %v1002, %v1075
    %v1084 = vmul.f32 %v1007, %v1075
    %v1085 = vmul.f32 %v1012, %v1075
    %v1086 = vadd.f32 %v1078, %v1077
    %v1087 = vadd.f32 %v1079, %v1077
    %v1088 = vadd.f32 %v1080, %v1077
    %v1089 = vadd.f32 %v1081, %v1077
    %v1090 = vadd.f32 %v1082, %v1077
    %v1091 = vadd.f32 %v1083, %v1077
    %v1092 = vadd.f32 %v1084, %v1077
    %v1093 = vadd.f32 %v1085, %v1077
    %v1094 = vmax.f32 %v1086, 0.0
    %v1095 = vmax.f32 %v1087, 0.0
    %v1096 = vmax.f32 %v1088, 0.0
    %v1097 = vmax.f32 %v1089, 0.0
    %v1098 = vmax.f32 %v1090, 0.0
    %v1099 = vmax.f32 %v1091, 0.0
    %v1100 = vmax.f32 %v1092, 0.0
    %v1101 = vmax.f32 %v1093, 0.0
    %v1102 = vld [vmem:[#allocation4 + $0x720] sm:$0xff]
    %v1103 = vld [vmem:[#allocation4 + $0x730] sm:$0xff]
    %v1104 = vld [vmem:[#allocation4 + $0x740] sm:$0xff]
    %v1105 = vld [vmem:[#allocation4 + $0x750] sm:$0xff]
    %v1106 = vld [vmem:[#allocation4 + $0x760] sm:$0xff]
    %v1107 = vld [vmem:[#allocation4 + $0x770] sm:$0xff]
    %v1108 = vld [vmem:[#allocation4 + $0x780] sm:$0xff]
    %v1109 = vld [vmem:[#allocation4 + $0x790] sm:$0xff]
    %v1111 = vsel %vm1017, %v1094, 0
    %v1114 = vsel %vm1017, %v1095, 0
    %v1117 = vsel %vm1017, %v1096, 0
    %v1120 = vsel %vm1017, %v1097, 0
    %v1123 = vsel %vm1017, %v1098, 0
    %v1126 = vsel %vm1017, %v1099, 0
    %v1129 = vsel %vm1017, %v1100, 0
    %v1132 = vsel %vm1017, %v1101, 0
    %1134 = vmatprep.subr.mxu0 0.0
    %1135 = vmatpush1.msra.mxu0 0.0
    %1136 = vmatprep.subr.mxu0 0.0
    %1137 = vmatpush1.msra.mxu0 0.0
    %1138 = vmatprep.subr.mxu0 0.0
    %1139 = vmatpush1.msra.mxu0 0.0
    %1140 = vmatprep.subr.mxu0 0.0
    %1141 = vmatpush1.msra.mxu0 0.0
    %1142 = vmatprep.subr.mxu0 0.0
    %1143 = vmatpush1.msra.mxu0 0.0
    %1144 = vmatprep.subr.mxu0 0.0
    %1145 = vmatpush1.msra.mxu0 0.0
    %1146 = vmatprep.subr.mxu0 0.0
    %1147 = vmatpush1.msra.mxu0 0.0
    %1148 = vmatprep.subr.mxu0 0.0
    %1149 = vmatpush1.msra.mxu0 0.0
    %1150 = vmatprep.subr.mxu0 0.0
    %1151 = vmatpush1.msra.mxu0 0.0
    %1152 = vmatprep.subr.mxu0 0.0
    %1153 = vmatpush1.msra.mxu0 0.0
    %1154 = vmatprep.subr.mxu0 0.0
    %1155 = vmatpush1.msra.mxu0 0.0
    %1156 = vmatprep.subr.mxu0 0.0
    %1157 = vmatpush1.msra.mxu0 0.0
    %1158 = vmatprep.subr.mxu0 0.0
    %1159 = vmatpush1.msra.mxu0 %v1105
    %1160 = vmatprep.subr.mxu0 0.0
    %1161 = vmatpush1.msra.mxu0 %v1104
    %1162 = vmatprep.subr.mxu0 0.0
    %1163 = vmatpush1.msra.mxu0 %v1103
    %1164 = vmatprep.subr.mxu0 0.0
    %1165 = vmatpush1.msra.mxu0 %v1102
    %1166 = vmatprep.subr.mxu0 0.0
    %1167 = vmatpush2.msra.mxu0 0.0
    %1168 = vmatprep.subr.mxu0 0.0
    %1169 = vmatpush2.msra.mxu0 0.0
    %1170 = vmatprep.subr.mxu0 0.0
    %1171 = vmatpush2.msra.mxu0 0.0
    %1172 = vmatprep.subr.mxu0 0.0
    %1173 = vmatpush2.msra.mxu0 0.0
    %1174 = vmatprep.subr.mxu0 0.0
    %1175 = vmatpush2.msra.mxu0 0.0
    %1176 = vmatprep.subr.mxu0 0.0
    %1177 = vmatpush2.msra.mxu0 0.0
    %1178 = vmatprep.subr.mxu0 0.0
    %1179 = vmatpush2.msra.mxu0 0.0
    %1180 = vmatprep.subr.mxu0 0.0
    %1181 = vmatpush2.msra.mxu0 0.0
    %1182 = vmatprep.subr.mxu0 0.0
    %1183 = vmatpush2.msra.mxu0 0.0
    %1184 = vmatprep.subr.mxu0 0.0
    %1185 = vmatpush2.msra.mxu0 0.0
    %1186 = vmatprep.subr.mxu0 0.0
    %1187 = vmatpush2.msra.mxu0 0.0
    %1188 = vmatprep.subr.mxu0 0.0
    %1189 = vmatpush2.msra.mxu0 0.0
    %1190 = vmatprep.subr.mxu0 0.0
    %1191 = vmatpush2.msra.mxu0 0.0
    %1192 = vmatprep.subr.mxu0 0.0
    %1193 = vmatpush2.msra.mxu0 0.0
    %1194 = vmatprep.subr.mxu0 0.0
    %1195 = vmatpush2.msra.mxu0 0.0
    %1196 = vmatprep.subr.mxu0 0.0
    %1197 = vmatpush2.msra.mxu0 0.0
    %1198 = vmatprep.mubr.f32.mxu0 0.0
    %1199 = vmatmul.mubr.f32.gmra.mxu0 %v1111
    %v1200 = vpop.f32.mrf.mxu0
    %v1201 = vadd.f32 0.0, %v1200
    %v1202 = vpop.f32.mrf.mxu0
    %1203 = vmatprep.mubr.f32.mxu0 0.0
    %1204 = vmatmul.mubr.f32.gmra.mxu0 %v1114
    %v1205 = vpop.f32.mrf.mxu0
    %v1206 = vadd.f32 0.0, %v1205
    %v1207 = vpop.f32.mrf.mxu0
    %1208 = vmatprep.mubr.f32.mxu0 0.0
    %1209 = vmatmul.mubr.f32.gmra.mxu0 %v1117
    %v1210 = vpop.f32.mrf.mxu0
    %v1211 = vadd.f32 0.0, %v1210
    %v1212 = vpop.f32.mrf.mxu0
    %1213 = vmatprep.mubr.f32.mxu0 0.0
    %1214 = vmatmul.mubr.f32.gmra.mxu0 %v1120
    %v1215 = vpop.f32.mrf.mxu0
    %v1216 = vadd.f32 0.0, %v1215
    %v1217 = vpop.f32.mrf.mxu0
    %1218 = vmatprep.mubr.f32.mxu0 0.0
    %1219 = vmatmul.mubr.f32.gmra.mxu0 %v1123
    %v1220 = vpop.f32.mrf.mxu0
    %v1221 = vadd.f32 0.0, %v1220
    %v1222 = vpop.f32.mrf.mxu0
    %1223 = vmatprep.mubr.f32.mxu0 0.0
    %1224 = vmatmul.mubr.f32.gmra.mxu0 %v1126
    %v1225 = vpop.f32.mrf.mxu0
    %v1226 = vadd.f32 0.0, %v1225
    %v1227 = vpop.f32.mrf.mxu0
    %1228 = vmatprep.mubr.f32.mxu0 0.0
    %1229 = vmatmul.mubr.f32.gmra.mxu0 %v1129
    %v1230 = vpop.f32.mrf.mxu0
    %v1231 = vadd.f32 0.0, %v1230
    %v1232 = vpop.f32.mrf.mxu0
    %1233 = vmatprep.mubr.f32.mxu0 0.0
    %1234 = vmatmul.mubr.f32.gmra.mxu0 %v1132
    %v1235 = vpop.f32.mrf.mxu0
    %v1236 = vadd.f32 0.0, %v1235
    %v1237 = vpop.f32.mrf.mxu0
    %1238 = vdwg.mxu0
    %1239 = vmatprep.subr.mxu0 0.0
    %1240 = vmatpush1.msra.mxu0 0.0
    %1241 = vmatprep.subr.mxu0 0.0
    %1242 = vmatpush1.msra.mxu0 0.0
    %1243 = vmatprep.subr.mxu0 0.0
    %1244 = vmatpush1.msra.mxu0 0.0
    %1245 = vmatprep.subr.mxu0 0.0
    %1246 = vmatpush1.msra.mxu0 0.0
    %1247 = vmatprep.subr.mxu0 0.0
    %1248 = vmatpush1.msra.mxu0 0.0
    %1249 = vmatprep.subr.mxu0 0.0
    %1250 = vmatpush1.msra.mxu0 0.0
    %1251 = vmatprep.subr.mxu0 0.0
    %1252 = vmatpush1.msra.mxu0 0.0
    %1253 = vmatprep.subr.mxu0 0.0
    %1254 = vmatpush1.msra.mxu0 0.0
    %1255 = vmatprep.subr.mxu0 0.0
    %1256 = vmatpush1.msra.mxu0 0.0
    %1257 = vmatprep.subr.mxu0 0.0
    %1258 = vmatpush1.msra.mxu0 0.0
    %1259 = vmatprep.subr.mxu0 0.0
    %1260 = vmatpush1.msra.mxu0 0.0
    %1261 = vmatprep.subr.mxu0 0.0
    %1262 = vmatpush1.msra.mxu0 0.0
    %1263 = vmatprep.subr.mxu0 0.0
    %1264 = vmatpush1.msra.mxu0 %v1109
    %1265 = vmatprep.subr.mxu0 0.0
    %1266 = vmatpush1.msra.mxu0 %v1108
    %1267 = vmatprep.subr.mxu0 0.0
    %1268 = vmatpush1.msra.mxu0 %v1107
    %1269 = vmatprep.subr.mxu0 0.0
    %1270 = vmatpush1.msra.mxu0 %v1106
    %1271 = vmatprep.subr.mxu0 0.0
    %1272 = vmatpush2.msra.mxu0 0.0
    %1273 = vmatprep.subr.mxu0 0.0
    %1274 = vmatpush2.msra.mxu0 0.0
    %1275 = vmatprep.subr.mxu0 0.0
    %1276 = vmatpush2.msra.mxu0 0.0
    %1277 = vmatprep.subr.mxu0 0.0
    %1278 = vmatpush2.msra.mxu0 0.0
    %1279 = vmatprep.subr.mxu0 0.0
    %1280 = vmatpush2.msra.mxu0 0.0
    %1281 = vmatprep.subr.mxu0 0.0
    %1282 = vmatpush2.msra.mxu0 0.0
    %1283 = vmatprep.subr.mxu0 0.0
    %1284 = vmatpush2.msra.mxu0 0.0
    %1285 = vmatprep.subr.mxu0 0.0
    %1286 = vmatpush2.msra.mxu0 0.0
    %1287 = vmatprep.subr.mxu0 0.0
    %1288 = vmatpush2.msra.mxu0 0.0
    %1289 = vmatprep.subr.mxu0 0.0
    %1290 = vmatpush2.msra.mxu0 0.0
    %1291 = vmatprep.subr.mxu0 0.0
    %1292 = vmatpush2.msra.mxu0 0.0
    %1293 = vmatprep.subr.mxu0 0.0
    %1294 = vmatpush2.msra.mxu0 0.0
    %1295 = vmatprep.subr.mxu0 0.0
    %1296 = vmatpush2.msra.mxu0 0.0
    %1297 = vmatprep.subr.mxu0 0.0
    %1298 = vmatpush2.msra.mxu0 0.0
    %1299 = vmatprep.subr.mxu0 0.0
    %1300 = vmatpush2.msra.mxu0 0.0
    %1301 = vmatprep.subr.mxu0 0.0
    %1302 = vmatpush2.msra.mxu0 0.0
    %1303 = vmatprep.mubr.f32.mxu0 0.0
    %1304 = vmatmul.mubr.f32.gmra.mxu0 %v1111
    %v1305 = vpop.f32.mrf.mxu0
    %v1306 = vadd.f32 0.0, %v1305
    %v1307 = vpop.f32.mrf.mxu0
    %1308 = vmatprep.mubr.f32.mxu0 0.0
    %1309 = vmatmul.mubr.f32.gmra.mxu0 %v1114
    %v1310 = vpop.f32.mrf.mxu0
    %v1311 = vadd.f32 0.0, %v1310
    %v1312 = vpop.f32.mrf.mxu0
    %1313 = vmatprep.mubr.f32.mxu0 0.0
    %1314 = vmatmul.mubr.f32.gmra.mxu0 %v1117
    %v1315 = vpop.f32.mrf.mxu0
    %v1316 = vadd.f32 0.0, %v1315
    %v1317 = vpop.f32.mrf.mxu0
    %1318 = vmatprep.mubr.f32.mxu0 0.0
    %1319 = vmatmul.mubr.f32.gmra.mxu0 %v1120
    %v1320 = vpop.f32.mrf.mxu0
    %v1321 = vadd.f32 0.0, %v1320
    %v1322 = vpop.f32.mrf.mxu0
    %1323 = vmatprep.mubr.f32.mxu0 0.0
    %1324 = vmatmul.mubr.f32.gmra.mxu0 %v1123
    %v1325 = vpop.f32.mrf.mxu0
    %v1326 = vadd.f32 0.0, %v1325
    %v1327 = vpop.f32.mrf.mxu0
    %1328 = vmatprep.mubr.f32.mxu0 0.0
    %1329 = vmatmul.mubr.f32.gmra.mxu0 %v1126
    %v1330 = vpop.f32.mrf.mxu0
    %v1331 = vadd.f32 0.0, %v1330
    %v1332 = vpop.f32.mrf.mxu0
    %1333 = vmatprep.mubr.f32.mxu0 0.0
    %1334 = vmatmul.mubr.f32.gmra.mxu0 %v1129
    %v1335 = vpop.f32.mrf.mxu0
    %v1336 = vadd.f32 0.0, %v1335
    %v1337 = vpop.f32.mrf.mxu0
    %1338 = vmatprep.mubr.f32.mxu0 0.0
    %1339 = vmatmul.mubr.f32.gmra.mxu0 %v1132
    %v1340 = vpop.f32.mrf.mxu0
    %v1341 = vadd.f32 0.0, %v1340
    %v1342 = vpop.f32.mrf.mxu0
    %1343 = vdwg.mxu0
    %v1344 = vld [vmem:[#allocation6 + $0x10] ss:$0 sm:$0xff]
    %v1345 = vld [vmem:[#allocation6 + $0x11] ss:$0 sm:$0xff]
    %vm1346 = vcmask 130048
    %v1347 = vsel %vm1346, %v1201, 0.0
    %v1348 = vsel %vm1346, %v1206, 0.0
    %v1349 = vadd.f32 %v1347, %v1348
    %v1350 = vsel %vm1346, %v1211, 0.0
    %v1351 = vadd.f32 %v1349, %v1350
    %v1352 = vsel %vm1346, %v1216, 0.0
    %v1353 = vadd.f32 %v1351, %v1352
    %v1354 = vsel %vm1346, %v1221, 0.0
    %v1355 = vadd.f32 %v1353, %v1354
    %v1356 = vsel %vm1346, %v1226, 0.0
    %v1357 = vadd.f32 %v1355, %v1356
    %v1358 = vsel %vm1346, %v1231, 0.0
    %v1359 = vadd.f32 %v1357, %v1358
    %v1360 = vsel %vm1346, %v1236, 0.0
    %v1361 = vadd.f32 %v1359, %v1360
    %v1362 = vsel %vm1346, %v1306, 0.0
    %v1363 = vadd.f32 %v1361, %v1362
    %v1364 = vsel %vm1346, %v1311, 0.0
    %v1365 = vadd.f32 %v1363, %v1364
    %v1366 = vsel %vm1346, %v1316, 0.0
    %v1367 = vadd.f32 %v1365, %v1366
    %v1368 = vsel %vm1346, %v1321, 0.0
    %v1369 = vadd.f32 %v1367, %v1368
    %v1370 = vsel %vm1346, %v1326, 0.0
    %v1371 = vadd.f32 %v1369, %v1370
    %v1372 = vsel %vm1346, %v1331, 0.0
    %v1373 = vadd.f32 %v1371, %v1372
    %v1374 = vsel %vm1346, %v1336, 0.0
    %v1375 = vadd.f32 %v1373, %v1374
    %v1376 = vsel %vm1346, %v1341, 0.0
    %v1377 = vadd.f32 %v1375, %v1376
    %v1378 = vrot.slane %v1377, 4
    %v1379 = vadd.f32 %v1377, %v1378
    %v1380 = vrot.slane %v1379, 2
    %v1381 = vadd.f32 %v1379, %v1380
    %v1382 = vrot.slane %v1381, 1
    %v1383 = vadd.f32 %v1381, %v1382
    %v1384 = vmul.f32 %v1383, 0.0078125
    %v1385 = vmul.f32 %v1201, %v1201
    %v1386 = vmul.f32 %v1206, %v1206
    %v1387 = vmul.f32 %v1211, %v1211
    %v1388 = vmul.f32 %v1216, %v1216
    %v1389 = vmul.f32 %v1221, %v1221
    %v1390 = vmul.f32 %v1226, %v1226
    %v1391 = vmul.f32 %v1231, %v1231
    %v1392 = vmul.f32 %v1236, %v1236
    %v1393 = vmul.f32 %v1306, %v1306
    %v1394 = vmul.f32 %v1311, %v1311
    %v1395 = vmul.f32 %v1316, %v1316
    %v1396 = vmul.f32 %v1321, %v1321
    %v1397 = vmul.f32 %v1326, %v1326
    %v1398 = vmul.f32 %v1331, %v1331
    %v1399 = vmul.f32 %v1336, %v1336
    %v1400 = vmul.f32 %v1341, %v1341
    %v1401 = vsel %vm1346, %v1385, 0.0
    %v1402 = vsel %vm1346, %v1386, 0.0
    %v1403 = vadd.f32 %v1401, %v1402
    %v1404 = vsel %vm1346, %v1387, 0.0
    %v1405 = vadd.f32 %v1403, %v1404
    %v1406 = vsel %vm1346, %v1388, 0.0
    %v1407 = vadd.f32 %v1405, %v1406
    %v1408 = vsel %vm1346, %v1389, 0.0
    %v1409 = vadd.f32 %v1407, %v1408
    %v1410 = vsel %vm1346, %v1390, 0.0
    %v1411 = vadd.f32 %v1409, %v1410
    %v1412 = vsel %vm1346, %v1391, 0.0
    %v1413 = vadd.f32 %v1411, %v1412
    %v1414 = vsel %vm1346, %v1392, 0.0
    %v1415 = vadd.f32 %v1413, %v1414
    %v1416 = vsel %vm1346, %v1393, 0.0
    %v1417 = vadd.f32 %v1415, %v1416
    %v1418 = vsel %vm1346, %v1394, 0.0
    %v1419 = vadd.f32 %v1417, %v1418
    %v1420 = vsel %vm1346, %v1395, 0.0
    %v1421 = vadd.f32 %v1419, %v1420
    %v1422 = vsel %vm1346, %v1396, 0.0
    %v1423 = vadd.f32 %v1421, %v1422
    %v1424 = vsel %vm1346, %v1397, 0.0
    %v1425 = vadd.f32 %v1423, %v1424
    %v1426 = vsel %vm1346, %v1398, 0.0
    %v1427 = vadd.f32 %v1425, %v1426
    %v1428 = vsel %vm1346, %v1399, 0.0
    %v1429 = vadd.f32 %v1427, %v1428
    %v1430 = vsel %vm1346, %v1400, 0.0
    %v1431 = vadd.f32 %v1429, %v1430
    %v1432 = vrot.slane %v1431, 4
    %v1433 = vadd.f32 %v1431, %v1432
    %v1434 = vrot.slane %v1433, 2
    %v1435 = vadd.f32 %v1433, %v1434
    %v1436 = vrot.slane %v1435, 1
    %v1437 = vadd.f32 %v1435, %v1436
    %v1438 = vmul.f32 %v1437, 0.0078125
    %v1439 = vmul.f32 %v1384, %v1384
    %v1440 = vsub.f32 %v1438, %v1439
    %v1441 = vmax.f32 %v1440, 0.0
    %v1442 = vadd.f32 %v1441, 1e-05
    %v1443 = vrsqrt.pop %v1442
    %v1444 = vmul.f32 %v1443, %v1344
    %v1445 = vmul.f32 %v1384, %v1444
    %v1446 = vsub.f32 %v1345, %v1445
    %v1447 = vmul.f32 %v1201, %v1444
    %v1448 = vmul.f32 %v1206, %v1444
    %v1449 = vmul.f32 %v1211, %v1444
    %v1450 = vmul.f32 %v1216, %v1444
    %v1451 = vmul.f32 %v1221, %v1444
    %v1452 = vmul.f32 %v1226, %v1444
    %v1453 = vmul.f32 %v1231, %v1444
    %v1454 = vmul.f32 %v1236, %v1444
    %v1455 = vmul.f32 %v1306, %v1444
    %v1456 = vmul.f32 %v1311, %v1444
    %v1457 = vmul.f32 %v1316, %v1444
    %v1458 = vmul.f32 %v1321, %v1444
    %v1459 = vmul.f32 %v1326, %v1444
    %v1460 = vmul.f32 %v1331, %v1444
    %v1461 = vmul.f32 %v1336, %v1444
    %v1462 = vmul.f32 %v1341, %v1444
    %v1463 = vadd.f32 %v1447, %v1446
    %v1464 = vadd.f32 %v1448, %v1446
    %v1465 = vadd.f32 %v1449, %v1446
    %v1466 = vadd.f32 %v1450, %v1446
    %v1467 = vadd.f32 %v1451, %v1446
    %v1468 = vadd.f32 %v1452, %v1446
    %v1469 = vadd.f32 %v1453, %v1446
    %v1470 = vadd.f32 %v1454, %v1446
    %v1471 = vadd.f32 %v1455, %v1446
    %v1472 = vadd.f32 %v1456, %v1446
    %v1473 = vadd.f32 %v1457, %v1446
    %v1474 = vadd.f32 %v1458, %v1446
    %v1475 = vadd.f32 %v1459, %v1446
    %v1476 = vadd.f32 %v1460, %v1446
    %v1477 = vadd.f32 %v1461, %v1446
    %v1478 = vadd.f32 %v1462, %v1446
    %v1479 = vmax.f32 %v1463, 0.0
    %v1480 = vmax.f32 %v1464, 0.0
    %v1481 = vmax.f32 %v1465, 0.0
    %v1482 = vmax.f32 %v1466, 0.0
    %v1483 = vmax.f32 %v1467, 0.0
    %v1484 = vmax.f32 %v1468, 0.0
    %v1485 = vmax.f32 %v1469, 0.0
    %v1486 = vmax.f32 %v1470, 0.0
    %v1487 = vmax.f32 %v1471, 0.0
    %v1488 = vmax.f32 %v1472, 0.0
    %v1489 = vmax.f32 %v1473, 0.0
    %v1490 = vmax.f32 %v1474, 0.0
    %v1491 = vmax.f32 %v1475, 0.0
    %v1492 = vmax.f32 %v1476, 0.0
    %v1493 = vmax.f32 %v1477, 0.0
    %v1494 = vmax.f32 %v1478, 0.0
    %v1495 = vld [vmem:[#allocation4 + $0x7a0] sm:$0xff]
    %v1496 = vld [vmem:[#allocation4 + $0x7b0] sm:$0xff]
    %v1498 = vsel %vm1346, %v1495, 0
    %v1501 = vsel %vm1346, %v1479, 0
    %v1504 = vsel %vm1346, %v1480, 0
    %v1507 = vsel %vm1346, %v1481, 0
    %v1510 = vsel %vm1346, %v1482, 0
    %v1513 = vsel %vm1346, %v1483, 0
    %v1516 = vsel %vm1346, %v1484, 0
    %v1519 = vsel %vm1346, %v1485, 0
    %v1522 = vsel %vm1346, %v1486, 0
    %v1525 = vsel %vm1346, %v1487, 0
    %v1528 = vsel %vm1346, %v1488, 0
    %v1531 = vsel %vm1346, %v1489, 0
    %v1534 = vsel %vm1346, %v1490, 0
    %v1537 = vsel %vm1346, %v1491, 0
    %v1540 = vsel %vm1346, %v1492, 0
    %v1543 = vsel %vm1346, %v1493, 0
    %v1546 = vsel %vm1346, %v1494, 0
    %1548 = vmatprep.subr.mxu0 0.0
    %1549 = vmatpush1.xpose.msra.mxu0 %v1546
    %1550 = vmatprep.subr.mxu0 0.0
    %1551 = vmatpush1.xpose.msra.mxu0 %v1543
    %1552 = vmatprep.subr.mxu0 0.0
    %1553 = vmatpush1.xpose.msra.mxu0 %v1540
    %1554 = vmatprep.subr.mxu0 0.0
    %1555 = vmatpush1.xpose.msra.mxu0 %v1537
    %1556 = vmatprep.subr.mxu0 0.0
    %1557 = vmatpush1.xpose.msra.mxu0 %v1534
    %1558 = vmatprep.subr.mxu0 0.0
    %1559 = vmatpush1.xpose.msra.mxu0 %v1531
    %1560 = vmatprep.subr.mxu0 0.0
    %1561 = vmatpush1.xpose.msra.mxu0 %v1528
    %1562 = vmatprep.subr.mxu0 0.0
    %1563 = vmatpush1.xpose.msra.mxu0 %v1525
    %1564 = vmatprep.subr.mxu0 0.0
    %1565 = vmatpush1.xpose.msra.mxu0 %v1522
    %1566 = vmatprep.subr.mxu0 0.0
    %1567 = vmatpush1.xpose.msra.mxu0 %v1519
    %1568 = vmatprep.subr.mxu0 0.0
    %1569 = vmatpush1.xpose.msra.mxu0 %v1516
    %1570 = vmatprep.subr.mxu0 0.0
    %1571 = vmatpush1.xpose.msra.mxu0 %v1513
    %1572 = vmatprep.subr.mxu0 0.0
    %1573 = vmatpush1.xpose.msra.mxu0 %v1510
    %1574 = vmatprep.subr.mxu0 0.0
    %1575 = vmatpush1.xpose.msra.mxu0 %v1507
    %1576 = vmatprep.subr.mxu0 0.0
    %1577 = vmatpush1.xpose.msra.mxu0 %v1504
    %1578 = vmatprep.subr.mxu0 0.0
    %1579 = vmatpush1.xpose.msra.mxu0 %v1501
    %1580 = vmatprep.subr.mxu0 0.0
    %1581 = vmatpush2.xpose.msra.mxu0 0.0
    %1582 = vmatprep.subr.mxu0 0.0
    %1583 = vmatpush2.xpose.msra.mxu0 0.0
    %1584 = vmatprep.subr.mxu0 0.0
    %1585 = vmatpush2.xpose.msra.mxu0 0.0
    %1586 = vmatprep.subr.mxu0 0.0
    %1587 = vmatpush2.xpose.msra.mxu0 0.0
    %1588 = vmatprep.subr.mxu0 0.0
    %1589 = vmatpush2.xpose.msra.mxu0 0.0
    %1590 = vmatprep.subr.mxu0 0.0
    %1591 = vmatpush2.xpose.msra.mxu0 0.0
    %1592 = vmatprep.subr.mxu0 0.0
    %1593 = vmatpush2.xpose.msra.mxu0 0.0
    %1594 = vmatprep.subr.mxu0 0.0
    %1595 = vmatpush2.xpose.msra.mxu0 0.0
    %1596 = vmatprep.subr.mxu0 0.0
    %1597 = vmatpush2.xpose.msra.mxu0 0.0
    %1598 = vmatprep.subr.mxu0 0.0
    %1599 = vmatpush2.xpose.msra.mxu0 0.0
    %1600 = vmatprep.subr.mxu0 0.0
    %1601 = vmatpush2.xpose.msra.mxu0 0.0
    %1602 = vmatprep.subr.mxu0 0.0
    %1603 = vmatpush2.xpose.msra.mxu0 0.0
    %1604 = vmatprep.subr.mxu0 0.0
    %1605 = vmatpush2.xpose.msra.mxu0 0.0
    %1606 = vmatprep.subr.mxu0 0.0
    %1607 = vmatpush2.xpose.msra.mxu0 0.0
    %1608 = vmatprep.subr.mxu0 0.0
    %1609 = vmatpush2.xpose.msra.mxu0 0.0
    %1610 = vmatprep.subr.mxu0 0.0
    %1611 = vmatpush2.xpose.msra.mxu0 0.0
    %1612 = vmatprep.mubr.f32.mxu0 0.0
    %1613 = vmatmul.mubr.f32.gmra.mxu0 %v1498
    %v1614 = vpop.f32.mrf.mxu0
    %v1615 = vadd.f32 0.0, %v1614
    %v1616 = vpop.f32.mrf.mxu0
    %1617 = vdwg.mxu0
    %v1619 = vsel %vm1346, %v1496, 0
    %1621 = vmatprep.subr.mxu0 0.0
    %1622 = vmatpush1.xpose.msra.mxu0 %v1546
    %1623 = vmatprep.subr.mxu0 0.0
    %1624 = vmatpush1.xpose.msra.mxu0 %v1543
    %1625 = vmatprep.subr.mxu0 0.0
    %1626 = vmatpush1.xpose.msra.mxu0 %v1540
    %1627 = vmatprep.subr.mxu0 0.0
    %1628 = vmatpush1.xpose.msra.mxu0 %v1537
    %1629 = vmatprep.subr.mxu0 0.0
    %1630 = vmatpush1.xpose.msra.mxu0 %v1534
    %1631 = vmatprep.subr.mxu0 0.0
    %1632 = vmatpush1.xpose.msra.mxu0 %v1531
    %1633 = vmatprep.subr.mxu0 0.0
    %1634 = vmatpush1.xpose.msra.mxu0 %v1528
    %1635 = vmatprep.subr.mxu0 0.0
    %1636 = vmatpush1.xpose.msra.mxu0 %v1525
    %1637 = vmatprep.subr.mxu0 0.0
    %1638 = vmatpush1.xpose.msra.mxu0 %v1522
    %1639 = vmatprep.subr.mxu0 0.0
    %1640 = vmatpush1.xpose.msra.mxu0 %v1519
    %1641 = vmatprep.subr.mxu0 0.0
    %1642 = vmatpush1.xpose.msra.mxu0 %v1516
    %1643 = vmatprep.subr.mxu0 0.0
    %1644 = vmatpush1.xpose.msra.mxu0 %v1513
    %1645 = vmatprep.subr.mxu0 0.0
    %1646 = vmatpush1.xpose.msra.mxu0 %v1510
    %1647 = vmatprep.subr.mxu0 0.0
    %1648 = vmatpush1.xpose.msra.mxu0 %v1507
    %1649 = vmatprep.subr.mxu0 0.0
    %1650 = vmatpush1.xpose.msra.mxu0 %v1504
    %1651 = vmatprep.subr.mxu0 0.0
    %1652 = vmatpush1.xpose.msra.mxu0 %v1501
    %1653 = vmatprep.subr.mxu0 0.0
    %1654 = vmatpush2.xpose.msra.mxu0 0.0
    %1655 = vmatprep.subr.mxu0 0.0
    %1656 = vmatpush2.xpose.msra.mxu0 0.0
    %1657 = vmatprep.subr.mxu0 0.0
    %1658 = vmatpush2.xpose.msra.mxu0 0.0
    %1659 = vmatprep.subr.mxu0 0.0
    %1660 = vmatpush2.xpose.msra.mxu0 0.0
    %1661 = vmatprep.subr.mxu0 0.0
    %1662 = vmatpush2.xpose.msra.mxu0 0.0
    %1663 = vmatprep.subr.mxu0 0.0
    %1664 = vmatpush2.xpose.msra.mxu0 0.0
    %1665 = vmatprep.subr.mxu0 0.0
    %1666 = vmatpush2.xpose.msra.mxu0 0.0
    %1667 = vmatprep.subr.mxu0 0.0
    %1668 = vmatpush2.xpose.msra.mxu0 0.0
    %1669 = vmatprep.subr.mxu0 0.0
    %1670 = vmatpush2.xpose.msra.mxu0 0.0
    %1671 = vmatprep.subr.mxu0 0.0
    %1672 = vmatpush2.xpose.msra.mxu0 0.0
    %1673 = vmatprep.subr.mxu0 0.0
    %1674 = vmatpush2.xpose.msra.mxu0 0.0
    %1675 = vmatprep.subr.mxu0 0.0
    %1676 = vmatpush2.xpose.msra.mxu0 0.0
    %1677 = vmatprep.subr.mxu0 0.0
    %1678 = vmatpush2.xpose.msra.mxu0 0.0
    %1679 = vmatprep.subr.mxu0 0.0
    %1680 = vmatpush2.xpose.msra.mxu0 0.0
    %1681 = vmatprep.subr.mxu0 0.0
    %1682 = vmatpush2.xpose.msra.mxu0 0.0
    %1683 = vmatprep.subr.mxu0 0.0
    %1684 = vmatpush2.xpose.msra.mxu0 0.0
    %1685 = vmatprep.mubr.f32.mxu0 0.0
    %1686 = vmatmul.mubr.f32.gmra.mxu0 %v1619
    %v1687 = vpop.f32.mrf.mxu0
    %v1688 = vadd.f32 0.0, %v1687
    %v1689 = vpop.f32.mrf.mxu0
    %1690 = vdwg.mxu0
    %v1691 = vld [vmem:[#allocation7] sm:$0xff]
    %v1692 = vadd.f32 %v1615, %v1688
    %1693 = vadd.xlane.f32.xlu0 %v1692
    %v1694 = vpop.xlane.xlu0 %1693
    %v1695 = vmul.f32 %v1694, 0.00390625
    %v1696 = vmul.f32 %v1615, %v1615
    %v1697 = vmul.f32 %v1688, %v1688
    %v1698 = vadd.f32 %v1696, %v1697
    %1699 = vadd.xlane.f32.xlu0 %v1698
    %v1700 = vpop.xlane.xlu0 %1699
    %v1701 = vmul.f32 %v1700, 0.00390625
    %v1702 = vmul.f32 %v1695, %v1695
    %v1703 = vsub.f32 %v1701, %v1702
    %v1704 = vmax.f32 %v1703, 0.0
    %v1705 = vadd.f32 %v1704, 1e-05
    %v1706 = vrsqrt.pop %v1705
    %v1707 = vmul.f32 %v1706, %v1691
    %v1708 = vmul.f32 %v1695, %v1707
    %1710 = vrot.lane.b32.xlu0 %v1708, 1
    %v1711 = vpop.permute.xlu0 %1710
    %v1713 = vsub.f32 %v1691, %v1711
    %1715 = vset.pattern.permute.xlu0 0
    %1716 = vperm.xlu0 %1715, %v1707
    %v1717 = vpop.permute.xlu0 %1716
    %v1719 = vmul.f32 %v1615, %v1717
    %v1720 = vmul.f32 %v1688, %v1717
    %1722 = vset.pattern.permute.xlu0 1
    %1723 = vperm.xlu0 %1722, %v1713
    %v1724 = vpop.permute.xlu0 %1723
    %v1726 = vadd.f32 %v1719, %v1724
    %v1727 = vadd.f32 %v1720, %v1724
    %v1728 = vmax.f32 %v1726, 0.0
    %v1729 = vmax.f32 %v1727, 0.0
    %v1730 = vld [vmem:[#allocation4 + $0x7c0] sm:$0xf]
    %v1731 = vld [vmem:[#allocation4 + $0x7d0] sm:$0xf]
    %vm1732 = vcmask 64512
    %v1734 = vsel %vm1732, %v1730, 0
    %1736 = vmatprep.subr.mxu0 0.0
    %1737 = vmatpush1.msra.mxu0 0.0
    %1738 = vmatprep.subr.mxu0 0.0
    %1739 = vmatpush1.msra.mxu0 0.0
    %1740 = vmatprep.subr.mxu0 0.0
    %1741 = vmatpush1.msra.mxu0 0.0
    %1742 = vmatprep.subr.mxu0 0.0
    %1743 = vmatpush1.msra.mxu0 0.0
    %1744 = vmatprep.subr.mxu0 0.0
    %1745 = vmatpush1.msra.mxu0 0.0
    %1746 = vmatprep.subr.mxu0 0.0
    %1747 = vmatpush1.msra.mxu0 0.0
    %1748 = vmatprep.subr.mxu0 0.0
    %1749 = vmatpush1.msra.mxu0 0.0
    %1750 = vmatprep.subr.mxu0 0.0
    %1751 = vmatpush1.msra.mxu0 0.0
    %1752 = vmatprep.subr.mxu0 0.0
    %1753 = vmatpush1.msra.mxu0 0.0
    %1754 = vmatprep.subr.mxu0 0.0
    %1755 = vmatpush1.msra.mxu0 0.0
    %1756 = vmatprep.subr.mxu0 0.0
    %1757 = vmatpush1.msra.mxu0 0.0
    %1758 = vmatprep.subr.mxu0 0.0
    %1759 = vmatpush1.msra.mxu0 0.0
    %1760 = vmatprep.subr.mxu0 0.0
    %1761 = vmatpush1.msra.mxu0 0.0
    %1762 = vmatprep.subr.mxu0 0.0
    %1763 = vmatpush1.msra.mxu0 0.0
    %1764 = vmatprep.subr.mxu0 0.0
    %1765 = vmatpush1.msra.mxu0 0.0
    %1766 = vmatprep.subr.mxu0 %v1729
    %1767 = vmatpush1.msra.mxu0 %v1728
    %1768 = vmatprep.subr.mxu0 0.0
    %1769 = vmatpush2.msra.mxu0 0.0
    %1770 = vmatprep.subr.mxu0 0.0
    %1771 = vmatpush2.msra.mxu0 0.0
    %1772 = vmatprep.subr.mxu0 0.0
    %1773 = vmatpush2.msra.mxu0 0.0
    %1774 = vmatprep.subr.mxu0 0.0
    %1775 = vmatpush2.msra.mxu0 0.0
    %1776 = vmatprep.subr.mxu0 0.0
    %1777 = vmatpush2.msra.mxu0 0.0
    %1778 = vmatprep.subr.mxu0 0.0
    %1779 = vmatpush2.msra.mxu0 0.0
    %1780 = vmatprep.subr.mxu0 0.0
    %1781 = vmatpush2.msra.mxu0 0.0
    %1782 = vmatprep.subr.mxu0 0.0
    %1783 = vmatpush2.msra.mxu0 0.0
    %1784 = vmatprep.subr.mxu0 0.0
    %1785 = vmatpush2.msra.mxu0 0.0
    %1786 = vmatprep.subr.mxu0 0.0
    %1787 = vmatpush2.msra.mxu0 0.0
    %1788 = vmatprep.subr.mxu0 0.0
    %1789 = vmatpush2.msra.mxu0 0.0
    %1790 = vmatprep.subr.mxu0 0.0
    %1791 = vmatpush2.msra.mxu0 0.0
    %1792 = vmatprep.subr.mxu0 0.0
    %1793 = vmatpush2.msra.mxu0 0.0
    %1794 = vmatprep.subr.mxu0 0.0
    %1795 = vmatpush2.msra.mxu0 0.0
    %1796 = vmatprep.subr.mxu0 0.0
    %1797 = vmatpush2.msra.mxu0 0.0
    %1798 = vmatprep.subr.mxu0 0.0
    %1799 = vmatpush2.msra.mxu0 0.0
    %1800 = vmatprep.mubr.f32.mxu0 0.0
    %1801 = vmatmul.mubr.f32.gmra.mxu0 %v1734
    %v1802 = vpop.f32.mrf.mxu0
    %v1803 = vadd.f32 0.0, %v1802
    %v1804 = vpop.f32.mrf.mxu0
    %v1805 = vadd.f32 0.0, %v1804
    %1806 = vdwg.mxu0
    %v1808 = vsel %vm1732, %v1731, 0
    %1810 = vmatprep.subr.mxu0 0.0
    %1811 = vmatpush1.msra.mxu0 0.0
    %1812 = vmatprep.subr.mxu0 0.0
    %1813 = vmatpush1.msra.mxu0 0.0
    %1814 = vmatprep.subr.mxu0 0.0
    %1815 = vmatpush1.msra.mxu0 0.0
    %1816 = vmatprep.subr.mxu0 0.0
    %1817 = vmatpush1.msra.mxu0 0.0
    %1818 = vmatprep.subr.mxu0 0.0
    %1819 = vmatpush1.msra.mxu0 0.0
    %1820 = vmatprep.subr.mxu0 0.0
    %1821 = vmatpush1.msra.mxu0 0.0
    %1822 = vmatprep.subr.mxu0 0.0
    %1823 = vmatpush1.msra.mxu0 0.0
    %1824 = vmatprep.subr.mxu0 0.0
    %1825 = vmatpush1.msra.mxu0 0.0
    %1826 = vmatprep.subr.mxu0 0.0
    %1827 = vmatpush1.msra.mxu0 0.0
    %1828 = vmatprep.subr.mxu0 0.0
    %1829 = vmatpush1.msra.mxu0 0.0
    %1830 = vmatprep.subr.mxu0 0.0
    %1831 = vmatpush1.msra.mxu0 0.0
    %1832 = vmatprep.subr.mxu0 0.0
    %1833 = vmatpush1.msra.mxu0 0.0
    %1834 = vmatprep.subr.mxu0 0.0
    %1835 = vmatpush1.msra.mxu0 0.0
    %1836 = vmatprep.subr.mxu0 0.0
    %1837 = vmatpush1.msra.mxu0 0.0
    %1838 = vmatprep.subr.mxu0 0.0
    %1839 = vmatpush1.msra.mxu0 0.0
    %1840 = vmatprep.subr.mxu0 %v1729
    %1841 = vmatpush1.msra.mxu0 %v1728
    %1842 = vmatprep.subr.mxu0 0.0
    %1843 = vmatpush2.msra.mxu0 0.0
    %1844 = vmatprep.subr.mxu0 0.0
    %1845 = vmatpush2.msra.mxu0 0.0
    %1846 = vmatprep.subr.mxu0 0.0
    %1847 = vmatpush2.msra.mxu0 0.0
    %1848 = vmatprep.subr.mxu0 0.0
    %1849 = vmatpush2.msra.mxu0 0.0
    %1850 = vmatprep.subr.mxu0 0.0
    %1851 = vmatpush2.msra.mxu0 0.0
    %1852 = vmatprep.subr.mxu0 0.0
    %1853 = vmatpush2.msra.mxu0 0.0
    %1854 = vmatprep.subr.mxu0 0.0
    %1855 = vmatpush2.msra.mxu0 0.0
    %1856 = vmatprep.subr.mxu0 0.0
    %1857 = vmatpush2.msra.mxu0 0.0
    %1858 = vmatprep.subr.mxu0 0.0
    %1859 = vmatpush2.msra.mxu0 0.0
    %1860 = vmatprep.subr.mxu0 0.0
    %1861 = vmatpush2.msra.mxu0 0.0
    %1862 = vmatprep.subr.mxu0 0.0
    %1863 = vmatpush2.msra.mxu0 0.0
    %1864 = vmatprep.subr.mxu0 0.0
    %1865 = vmatpush2.msra.mxu0 0.0
    %1866 = vmatprep.subr.mxu0 0.0
    %1867 = vmatpush2.msra.mxu0 0.0
    %1868 = vmatprep.subr.mxu0 0.0
    %1869 = vmatpush2.msra.mxu0 0.0
    %1870 = vmatprep.subr.mxu0 0.0
    %1871 = vmatpush2.msra.mxu0 0.0
    %1872 = vmatprep.subr.mxu0 0.0
    %1873 = vmatpush2.msra.mxu0 0.0
    %1874 = vmatprep.mubr.f32.mxu0 0.0
    %1875 = vmatmul.mubr.f32.gmra.mxu0 %v1808
    %v1876 = vpop.f32.mrf.mxu0
    %v1877 = vadd.f32 0.0, %v1876
    %v1878 = vpop.f32.mrf.mxu0
    %v1879 = vadd.f32 0.0, %v1878
    %1880 = vdwg.mxu0
    %v1881 = vld [vmem:[#allocation7] sm:$0xf]
    %v1882 = vsel %vm77, %v1803, 0.0
    %v1883 = vsel %vm77, %v1805, 0.0
    %v1884 = vadd.f32 %v1882, %v1883
    %v1885 = vsel %vm77, %v1877, 0.0
    %v1886 = vadd.f32 %v1884, %v1885
    %v1887 = vsel %vm77, %v1879, 0.0
    %v1888 = vadd.f32 %v1886, %v1887
    %1889 = vadd.xlane.f32.xlu0 %v1888
    %v1890 = vpop.xlane.xlu0 %1889
    %v1891 = vmul.f32 %v1890, 0.001953125
    %v1892 = vmul.f32 %v1803, %v1803
    %v1893 = vmul.f32 %v1805, %v1805
    %v1894 = vmul.f32 %v1877, %v1877
    %v1895 = vmul.f32 %v1879, %v1879
    %v1896 = vsel %vm77, %v1892, 0.0
    %v1897 = vsel %vm77, %v1893, 0.0
    %v1898 = vadd.f32 %v1896, %v1897
    %v1899 = vsel %vm77, %v1894, 0.0
    %v1900 = vadd.f32 %v1898, %v1899
    %v1901 = vsel %vm77, %v1895, 0.0
    %v1902 = vadd.f32 %v1900, %v1901
    %1903 = vadd.xlane.f32.xlu0 %v1902
    %v1904 = vpop.xlane.xlu0 %1903
    %v1905 = vmul.f32 %v1904, 0.001953125
    %v1906 = vmul.f32 %v1891, %v1891
    %v1907 = vsub.f32 %v1905, %v1906
    %v1908 = vmax.f32 %v1907, 0.0
    %v1909 = vadd.f32 %v1908, 1e-05
    %v1910 = vrsqrt.pop %v1909
    %v1911 = vmul.f32 %v1910, %v1881
    %v1912 = vmul.f32 %v1891, %v1911
    %1914 = vrot.lane.b32.xlu0 %v1912, 1
    %v1915 = vpop.permute.xlu0 %1914
    %v1917 = vsub.f32 %v1881, %v1915
    %1919 = vset.pattern.permute.xlu0 2
    %1920 = vperm.xlu0 %1919, %v1911
    %v1921 = vpop.permute.xlu0 %1920
    %v1923 = vmul.f32 %v1803, %v1921
    %v1924 = vmul.f32 %v1805, %v1921
    %v1925 = vmul.f32 %v1877, %v1921
    %v1926 = vmul.f32 %v1879, %v1921
    %1928 = vset.pattern.permute.xlu0 3
    %1929 = vperm.xlu0 %1928, %v1917
    %v1930 = vpop.permute.xlu0 %1929
    %v1932 = vadd.f32 %v1923, %v1930
    %v1933 = vadd.f32 %v1924, %v1930
    %v1934 = vadd.f32 %v1925, %v1930
    %v1935 = vadd.f32 %v1926, %v1930
    %v1936 = vmax.f32 %v1932, 0.0
    %v1937 = vmax.f32 %v1933, 0.0
    %v1938 = vmax.f32 %v1934, 0.0
    %v1939 = vmax.f32 %v1935, 0.0
    %v1940 = vld [vmem:[#allocation4 + $0x7e0] sm:$0x3]
    %v1941 = vld [vmem:[#allocation4 + $0x7f0] sm:$0x3]
    %v1943 = vsel %vm73, %v1940, 0
    %v1946 = vsel %vm77, %v1936, 0
    %v1949 = vsel %vm77, %v1937, 0
    %v1952 = vsel %vm77, %v1938, 0
    %v1955 = vsel %vm77, %v1939, 0
    %1957 = vmatprep.subr.mxu0 0.0
    %1958 = vmatpush1.msra.mxu0 0.0
    %1959 = vmatprep.subr.mxu0 0.0
    %1960 = vmatpush1.msra.mxu0 0.0
    %1961 = vmatprep.subr.mxu0 0.0
    %1962 = vmatpush1.msra.mxu0 0.0
    %1963 = vmatprep.subr.mxu0 0.0
    %1964 = vmatpush1.msra.mxu0 0.0
    %1965 = vmatprep.subr.mxu0 0.0
    %1966 = vmatpush1.msra.mxu0 0.0
    %1967 = vmatprep.subr.mxu0 0.0
    %1968 = vmatpush1.msra.mxu0 0.0
    %1969 = vmatprep.subr.mxu0 0.0
    %1970 = vmatpush1.msra.mxu0 0.0
    %1971 = vmatprep.subr.mxu0 0.0
    %1972 = vmatpush1.msra.mxu0 0.0
    %1973 = vmatprep.subr.mxu0 0.0
    %1974 = vmatpush1.msra.mxu0 0.0
    %1975 = vmatprep.subr.mxu0 0.0
    %1976 = vmatpush1.msra.mxu0 0.0
    %1977 = vmatprep.subr.mxu0 0.0
    %1978 = vmatpush1.msra.mxu0 0.0
    %1979 = vmatprep.subr.mxu0 0.0
    %1980 = vmatpush1.msra.mxu0 0.0
    %1981 = vmatprep.subr.mxu0 0.0
    %1982 = vmatpush1.msra.mxu0 0.0
    %1983 = vmatprep.subr.mxu0 0.0
    %1984 = vmatpush1.msra.mxu0 0.0
    %1985 = vmatprep.subr.mxu0 0.0
    %1986 = vmatpush1.msra.mxu0 0.0
    %1987 = vmatprep.subr.mxu0 %v1949
    %1988 = vmatpush1.msra.mxu0 %v1946
    %1989 = vmatprep.subr.mxu0 0.0
    %1990 = vmatpush2.msra.mxu0 0.0
    %1991 = vmatprep.subr.mxu0 0.0
    %1992 = vmatpush2.msra.mxu0 0.0
    %1993 = vmatprep.subr.mxu0 0.0
    %1994 = vmatpush2.msra.mxu0 0.0
    %1995 = vmatprep.subr.mxu0 0.0
    %1996 = vmatpush2.msra.mxu0 0.0
    %1997 = vmatprep.subr.mxu0 0.0
    %1998 = vmatpush2.msra.mxu0 0.0
    %1999 = vmatprep.subr.mxu0 0.0
    %2000 = vmatpush2.msra.mxu0 0.0
    %2001 = vmatprep.subr.mxu0 0.0
    %2002 = vmatpush2.msra.mxu0 0.0
    %2003 = vmatprep.subr.mxu0 0.0
    %2004 = vmatpush2.msra.mxu0 0.0
    %2005 = vmatprep.subr.mxu0 0.0
    %2006 = vmatpush2.msra.mxu0 0.0
    %2007 = vmatprep.subr.mxu0 0.0
    %2008 = vmatpush2.msra.mxu0 0.0
    %2009 = vmatprep.subr.mxu0 0.0
    %2010 = vmatpush2.msra.mxu0 0.0
    %2011 = vmatprep.subr.mxu0 0.0
    %2012 = vmatpush2.msra.mxu0 0.0
    %2013 = vmatprep.subr.mxu0 0.0
    %2014 = vmatpush2.msra.mxu0 0.0
    %2015 = vmatprep.subr.mxu0 0.0
    %2016 = vmatpush2.msra.mxu0 0.0
    %2017 = vmatprep.subr.mxu0 0.0
    %2018 = vmatpush2.msra.mxu0 0.0
    %2019 = vmatprep.subr.mxu0 0.0
    %2020 = vmatpush2.msra.mxu0 0.0
    %2021 = vmatprep.mubr.f32.mxu0 0.0
    %2022 = vmatmul.mubr.f32.gmra.mxu0 %v1943
    %v2023 = vpop.f32.mrf.mxu0
    %v2024 = vadd.f32 0.0, %v2023
    %v2025 = vpop.f32.mrf.mxu0
    %v2026 = vadd.f32 0.0, %v2025
    %2027 = vdwg.mxu0
    %2028 = vmatprep.subr.mxu0 0.0
    %2029 = vmatpush1.msra.mxu0 0.0
    %2030 = vmatprep.subr.mxu0 0.0
    %2031 = vmatpush1.msra.mxu0 0.0
    %2032 = vmatprep.subr.mxu0 0.0
    %2033 = vmatpush1.msra.mxu0 0.0
    %2034 = vmatprep.subr.mxu0 0.0
    %2035 = vmatpush1.msra.mxu0 0.0
    %2036 = vmatprep.subr.mxu0 0.0
    %2037 = vmatpush1.msra.mxu0 0.0
    %2038 = vmatprep.subr.mxu0 0.0
    %2039 = vmatpush1.msra.mxu0 0.0
    %2040 = vmatprep.subr.mxu0 0.0
    %2041 = vmatpush1.msra.mxu0 0.0
    %2042 = vmatprep.subr.mxu0 0.0
    %2043 = vmatpush1.msra.mxu0 0.0
    %2044 = vmatprep.subr.mxu0 0.0
    %2045 = vmatpush1.msra.mxu0 0.0
    %2046 = vmatprep.subr.mxu0 0.0
    %2047 = vmatpush1.msra.mxu0 0.0
    %2048 = vmatprep.subr.mxu0 0.0
    %2049 = vmatpush1.msra.mxu0 0.0
    %2050 = vmatprep.subr.mxu0 0.0
    %2051 = vmatpush1.msra.mxu0 0.0
    %2052 = vmatprep.subr.mxu0 0.0
    %2053 = vmatpush1.msra.mxu0 0.0
    %2054 = vmatprep.subr.mxu0 0.0
    %2055 = vmatpush1.msra.mxu0 0.0
    %2056 = vmatprep.subr.mxu0 0.0
    %2057 = vmatpush1.msra.mxu0 0.0
    %2058 = vmatprep.subr.mxu0 %v1955
    %2059 = vmatpush1.msra.mxu0 %v1952
    %2060 = vmatprep.subr.mxu0 0.0
    %2061 = vmatpush2.msra.mxu0 0.0
    %2062 = vmatprep.subr.mxu0 0.0
    %2063 = vmatpush2.msra.mxu0 0.0
    %2064 = vmatprep.subr.mxu0 0.0
    %2065 = vmatpush2.msra.mxu0 0.0
    %2066 = vmatprep.subr.mxu0 0.0
    %2067 = vmatpush2.msra.mxu0 0.0
    %2068 = vmatprep.subr.mxu0 0.0
    %2069 = vmatpush2.msra.mxu0 0.0
    %2070 = vmatprep.subr.mxu0 0.0
    %2071 = vmatpush2.msra.mxu0 0.0
    %2072 = vmatprep.subr.mxu0 0.0
    %2073 = vmatpush2.msra.mxu0 0.0
    %2074 = vmatprep.subr.mxu0 0.0
    %2075 = vmatpush2.msra.mxu0 0.0
    %2076 = vmatprep.subr.mxu0 0.0
    %2077 = vmatpush2.msra.mxu0 0.0
    %2078 = vmatprep.subr.mxu0 0.0
    %2079 = vmatpush2.msra.mxu0 0.0
    %2080 = vmatprep.subr.mxu0 0.0
    %2081 = vmatpush2.msra.mxu0 0.0
    %2082 = vmatprep.subr.mxu0 0.0
    %2083 = vmatpush2.msra.mxu0 0.0
    %2084 = vmatprep.subr.mxu0 0.0
    %2085 = vmatpush2.msra.mxu0 0.0
    %2086 = vmatprep.subr.mxu0 0.0
    %2087 = vmatpush2.msra.mxu0 0.0
    %2088 = vmatprep.subr.mxu0 0.0
    %2089 = vmatpush2.msra.mxu0 0.0
    %2090 = vmatprep.subr.mxu0 0.0
    %2091 = vmatpush2.msra.mxu0 0.0
    %2092 = vmatprep.mubr.f32.mxu0 0.0
    %2093 = vmatmul.mubr.f32.gmra.mxu0 %v1943
    %v2094 = vpop.f32.mrf.mxu0
    %v2095 = vadd.f32 0.0, %v2094
    %v2096 = vpop.f32.mrf.mxu0
    %v2097 = vadd.f32 0.0, %v2096
    %2098 = vdwg.mxu0
    %v2100 = vsel %vm73, %v1941, 0
    %2102 = vmatprep.subr.mxu0 0.0
    %2103 = vmatpush1.msra.mxu0 0.0
    %2104 = vmatprep.subr.mxu0 0.0
    %2105 = vmatpush1.msra.mxu0 0.0
    %2106 = vmatprep.subr.mxu0 0.0
    %2107 = vmatpush1.msra.mxu0 0.0
    %2108 = vmatprep.subr.mxu0 0.0
    %2109 = vmatpush1.msra.mxu0 0.0
    %2110 = vmatprep.subr.mxu0 0.0
    %2111 = vmatpush1.msra.mxu0 0.0
    %2112 = vmatprep.subr.mxu0 0.0
    %2113 = vmatpush1.msra.mxu0 0.0
    %2114 = vmatprep.subr.mxu0 0.0
    %2115 = vmatpush1.msra.mxu0 0.0
    %2116 = vmatprep.subr.mxu0 0.0
    %2117 = vmatpush1.msra.mxu0 0.0
    %2118 = vmatprep.subr.mxu0 0.0
    %2119 = vmatpush1.msra.mxu0 0.0
    %2120 = vmatprep.subr.mxu0 0.0
    %2121 = vmatpush1.msra.mxu0 0.0
    %2122 = vmatprep.subr.mxu0 0.0
    %2123 = vmatpush1.msra.mxu0 0.0
    %2124 = vmatprep.subr.mxu0 0.0
    %2125 = vmatpush1.msra.mxu0 0.0
    %2126 = vmatprep.subr.mxu0 0.0
    %2127 = vmatpush1.msra.mxu0 0.0
    %2128 = vmatprep.subr.mxu0 0.0
    %2129 = vmatpush1.msra.mxu0 0.0
    %2130 = vmatprep.subr.mxu0 0.0
    %2131 = vmatpush1.msra.mxu0 0.0
    %2132 = vmatprep.subr.mxu0 %v1949
    %2133 = vmatpush1.msra.mxu0 %v1946
    %2134 = vmatprep.subr.mxu0 0.0
    %2135 = vmatpush2.msra.mxu0 0.0
    %2136 = vmatprep.subr.mxu0 0.0
    %2137 = vmatpush2.msra.mxu0 0.0
    %2138 = vmatprep.subr.mxu0 0.0
    %2139 = vmatpush2.msra.mxu0 0.0
    %2140 = vmatprep.subr.mxu0 0.0
    %2141 = vmatpush2.msra.mxu0 0.0
    %2142 = vmatprep.subr.mxu0 0.0
    %2143 = vmatpush2.msra.mxu0 0.0
    %2144 = vmatprep.subr.mxu0 0.0
    %2145 = vmatpush2.msra.mxu0 0.0
    %2146 = vmatprep.subr.mxu0 0.0
    %2147 = vmatpush2.msra.mxu0 0.0
    %2148 = vmatprep.subr.mxu0 0.0
    %2149 = vmatpush2.msra.mxu0 0.0
    %2150 = vmatprep.subr.mxu0 0.0
    %2151 = vmatpush2.msra.mxu0 0.0
    %2152 = vmatprep.subr.mxu0 0.0
    %2153 = vmatpush2.msra.mxu0 0.0
    %2154 = vmatprep.subr.mxu0 0.0
    %2155 = vmatpush2.msra.mxu0 0.0
    %2156 = vmatprep.subr.mxu0 0.0
    %2157 = vmatpush2.msra.mxu0 0.0
    %2158 = vmatprep.subr.mxu0 0.0
    %2159 = vmatpush2.msra.mxu0 0.0
    %2160 = vmatprep.subr.mxu0 0.0
    %2161 = vmatpush2.msra.mxu0 0.0
    %2162 = vmatprep.subr.mxu0 0.0
    %2163 = vmatpush2.msra.mxu0 0.0
    %2164 = vmatprep.subr.mxu0 0.0
    %2165 = vmatpush2.msra.mxu0 0.0
    %2166 = vmatprep.mubr.f32.mxu0 0.0
    %2167 = vmatmul.mubr.f32.gmra.mxu0 %v2100
    %v2168 = vpop.f32.mrf.mxu0
    %v2169 = vadd.f32 0.0, %v2168
    %v2170 = vpop.f32.mrf.mxu0
    %v2171 = vadd.f32 0.0, %v2170
    %2172 = vdwg.mxu0
    %2173 = vmatprep.subr.mxu0 0.0
    %2174 = vmatpush1.msra.mxu0 0.0
    %2175 = vmatprep.subr.mxu0 0.0
    %2176 = vmatpush1.msra.mxu0 0.0
    %2177 = vmatprep.subr.mxu0 0.0
    %2178 = vmatpush1.msra.mxu0 0.0
    %2179 = vmatprep.subr.mxu0 0.0
    %2180 = vmatpush1.msra.mxu0 0.0
    %2181 = vmatprep.subr.mxu0 0.0
    %2182 = vmatpush1.msra.mxu0 0.0
    %2183 = vmatprep.subr.mxu0 0.0
    %2184 = vmatpush1.msra.mxu0 0.0
    %2185 = vmatprep.subr.mxu0 0.0
    %2186 = vmatpush1.msra.mxu0 0.0
    %2187 = vmatprep.subr.mxu0 0.0
    %2188 = vmatpush1.msra.mxu0 0.0
    %2189 = vmatprep.subr.mxu0 0.0
    %2190 = vmatpush1.msra.mxu0 0.0
    %2191 = vmatprep.subr.mxu0 0.0
    %2192 = vmatpush1.msra.mxu0 0.0
    %2193 = vmatprep.subr.mxu0 0.0
    %2194 = vmatpush1.msra.mxu0 0.0
    %2195 = vmatprep.subr.mxu0 0.0
    %2196 = vmatpush1.msra.mxu0 0.0
    %2197 = vmatprep.subr.mxu0 0.0
    %2198 = vmatpush1.msra.mxu0 0.0
    %2199 = vmatprep.subr.mxu0 0.0
    %2200 = vmatpush1.msra.mxu0 0.0
    %2201 = vmatprep.subr.mxu0 0.0
    %2202 = vmatpush1.msra.mxu0 0.0
    %2203 = vmatprep.subr.mxu0 %v1955
    %2204 = vmatpush1.msra.mxu0 %v1952
    %2205 = vmatprep.subr.mxu0 0.0
    %2206 = vmatpush2.msra.mxu0 0.0
    %2207 = vmatprep.subr.mxu0 0.0
    %2208 = vmatpush2.msra.mxu0 0.0
    %2209 = vmatprep.subr.mxu0 0.0
    %2210 = vmatpush2.msra.mxu0 0.0
    %2211 = vmatprep.subr.mxu0 0.0
    %2212 = vmatpush2.msra.mxu0 0.0
    %2213 = vmatprep.subr.mxu0 0.0
    %2214 = vmatpush2.msra.mxu0 0.0
    %2215 = vmatprep.subr.mxu0 0.0
    %2216 = vmatpush2.msra.mxu0 0.0
    %2217 = vmatprep.subr.mxu0 0.0
    %2218 = vmatpush2.msra.mxu0 0.0
    %2219 = vmatprep.subr.mxu0 0.0
    %2220 = vmatpush2.msra.mxu0 0.0
    %2221 = vmatprep.subr.mxu0 0.0
    %2222 = vmatpush2.msra.mxu0 0.0
    %2223 = vmatprep.subr.mxu0 0.0
    %2224 = vmatpush2.msra.mxu0 0.0
    %2225 = vmatprep.subr.mxu0 0.0
    %2226 = vmatpush2.msra.mxu0 0.0
    %2227 = vmatprep.subr.mxu0 0.0
    %2228 = vmatpush2.msra.mxu0 0.0
    %2229 = vmatprep.subr.mxu0 0.0
    %2230 = vmatpush2.msra.mxu0 0.0
    %2231 = vmatprep.subr.mxu0 0.0
    %2232 = vmatpush2.msra.mxu0 0.0
    %2233 = vmatprep.subr.mxu0 0.0
    %2234 = vmatpush2.msra.mxu0 0.0
    %2235 = vmatprep.subr.mxu0 0.0
    %2236 = vmatpush2.msra.mxu0 0.0
    %2237 = vmatprep.mubr.f32.mxu0 0.0
    %2238 = vmatmul.mubr.f32.gmra.mxu0 %v2100
    %v2239 = vpop.f32.mrf.mxu0
    %v2240 = vadd.f32 0.0, %v2239
    %v2241 = vpop.f32.mrf.mxu0
    %v2242 = vadd.f32 0.0, %v2241
    %2243 = vdwg.mxu0
    %v2244 = vld [vmem:[#allocation7] sm:$0x3]
    %vm2245 = vcmask 1041408
    %v2246 = vsel %vm2245, %v2024, 0.0
    %v2247 = vsel %vm2245, %v2026, 0.0
    %v2248 = vadd.f32 %v2246, %v2247
    %v2249 = vsel %vm2245, %v2095, 0.0
    %v2250 = vadd.f32 %v2248, %v2249
    %v2251 = vsel %vm2245, %v2097, 0.0
    %v2252 = vadd.f32 %v2250, %v2251
    %v2253 = vsel %vm2245, %v2169, 0.0
    %v2254 = vadd.f32 %v2252, %v2253
    %v2255 = vsel %vm2245, %v2171, 0.0
    %v2256 = vadd.f32 %v2254, %v2255
    %v2257 = vsel %vm2245, %v2240, 0.0
    %v2258 = vadd.f32 %v2256, %v2257
    %v2259 = vsel %vm2245, %v2242, 0.0
    %v2260 = vadd.f32 %v2258, %v2259
    %2261 = vadd.xlane.f32.xlu0 %v2260
    %v2262 = vpop.xlane.xlu0 %2261
    %v2263 = vmul.f32 %v2262, 0.0009765625
    %v2264 = vmul.f32 %v2024, %v2024
    %v2265 = vmul.f32 %v2026, %v2026
    %v2266 = vmul.f32 %v2095, %v2095
    %v2267 = vmul.f32 %v2097, %v2097
    %v2268 = vmul.f32 %v2169, %v2169
    %v2269 = vmul.f32 %v2171, %v2171
    %v2270 = vmul.f32 %v2240, %v2240
    %v2271 = vmul.f32 %v2242, %v2242
    %v2272 = vsel %vm2245, %v2264, 0.0
    %v2273 = vsel %vm2245, %v2265, 0.0
    %v2274 = vadd.f32 %v2272, %v2273
    %v2275 = vsel %vm2245, %v2266, 0.0
    %v2276 = vadd.f32 %v2274, %v2275
    %v2277 = vsel %vm2245, %v2267, 0.0
    %v2278 = vadd.f32 %v2276, %v2277
    %v2279 = vsel %vm2245, %v2268, 0.0
    %v2280 = vadd.f32 %v2278, %v2279
    %v2281 = vsel %vm2245, %v2269, 0.0
    %v2282 = vadd.f32 %v2280, %v2281
    %v2283 = vsel %vm2245, %v2270, 0.0
    %v2284 = vadd.f32 %v2282, %v2283
    %v2285 = vsel %vm2245, %v2271, 0.0
    %v2286 = vadd.f32 %v2284, %v2285
    %2287 = vadd.xlane.f32.xlu0 %v2286
    %v2288 = vpop.xlane.xlu0 %2287
    %v2289 = vmul.f32 %v2288, 0.0009765625
    %v2290 = vmul.f32 %v2263, %v2263
    %v2291 = vsub.f32 %v2289, %v2290
    %v2292 = vmax.f32 %v2291, 0.0
    %v2293 = vadd.f32 %v2292, 1e-05
    %v2294 = vrsqrt.pop %v2293
    %v2295 = vmul.f32 %v2294, %v2244
    %v2296 = vmul.f32 %v2263, %v2295
    %2298 = vrot.lane.b32.xlu0 %v2296, 1
    %v2299 = vpop.permute.xlu0 %2298
    %v2301 = vsub.f32 %v2244, %v2299
    %2303 = vset.pattern.permute.xlu0 4
    %2304 = vperm.xlu0 %2303, %v2295
    %v2305 = vpop.permute.xlu0 %2304
    %v2307 = vmul.f32 %v2024, %v2305
    %v2308 = vmul.f32 %v2026, %v2305
    %v2309 = vmul.f32 %v2095, %v2305
    %v2310 = vmul.f32 %v2097, %v2305
    %v2311 = vmul.f32 %v2169, %v2305
    %v2312 = vmul.f32 %v2171, %v2305
    %v2313 = vmul.f32 %v2240, %v2305
    %v2314 = vmul.f32 %v2242, %v2305
    %2316 = vset.pattern.permute.xlu0 5
    %2317 = vperm.xlu0 %2316, %v2301
    %v2318 = vpop.permute.xlu0 %2317
    %v2320 = vadd.f32 %v2307, %v2318
    %v2321 = vadd.f32 %v2308, %v2318
    %v2322 = vadd.f32 %v2309, %v2318
    %v2323 = vadd.f32 %v2310, %v2318
    %v2324 = vadd.f32 %v2311, %v2318
    %v2325 = vadd.f32 %v2312, %v2318
    %v2326 = vadd.f32 %v2313, %v2318
    %v2327 = vadd.f32 %v2314, %v2318
    %v2328 = vmax.f32 %v2320, 0.0
    %v2329 = vmax.f32 %v2321, 0.0
    %v2330 = vmax.f32 %v2322, 0.0
    %v2331 = vmax.f32 %v2323, 0.0
    %v2332 = vmax.f32 %v2324, 0.0
    %v2333 = vmax.f32 %v2325, 0.0
    %v2334 = vmax.f32 %v2326, 0.0
    %v2335 = vmax.f32 %v2327, 0.0
    %v2336 = vld [vmem:[#allocation4 + $0x800] sm:$0x3]
    %2338 = vset.pattern.permute.xlu0 6
    %2339 = vperm.xlu0 %2338, %v2244
    %v2340 = vpop.permute.xlu0 %2339
    %vm2342 = vcmask 15360
    %v2344 = vsel %vm2342, %v2336, 0
    %v2347 = vsel %vm2245, %v2328, 0
    %v2350 = vsel %vm2245, %v2329, 0
    %v2353 = vsel %vm2245, %v2330, 0
    %v2356 = vsel %vm2245, %v2331, 0
    %v2359 = vsel %vm2245, %v2332, 0
    %v2362 = vsel %vm2245, %v2333, 0
    %v2365 = vsel %vm2245, %v2334, 0
    %v2368 = vsel %vm2245, %v2335, 0
    %2370 = vmatprep.subr.mxu0 0.0
    %2371 = vmatpush1.msra.mxu0 0.0
    %2372 = vmatprep.subr.mxu0 0.0
    %2373 = vmatpush1.msra.mxu0 0.0
    %2374 = vmatprep.subr.mxu0 0.0
    %2375 = vmatpush1.msra.mxu0 0.0
    %2376 = vmatprep.subr.mxu0 0.0
    %2377 = vmatpush1.msra.mxu0 0.0
    %2378 = vmatprep.subr.mxu0 0.0
    %2379 = vmatpush1.msra.mxu0 0.0
    %2380 = vmatprep.subr.mxu0 0.0
    %2381 = vmatpush1.msra.mxu0 0.0
    %2382 = vmatprep.subr.mxu0 0.0
    %2383 = vmatpush1.msra.mxu0 0.0
    %2384 = vmatprep.subr.mxu0 0.0
    %2385 = vmatpush1.msra.mxu0 0.0
    %2386 = vmatprep.subr.mxu0 0.0
    %2387 = vmatpush1.msra.mxu0 0.0
    %2388 = vmatprep.subr.mxu0 0.0
    %2389 = vmatpush1.msra.mxu0 0.0
    %2390 = vmatprep.subr.mxu0 0.0
    %2391 = vmatpush1.msra.mxu0 0.0
    %2392 = vmatprep.subr.mxu0 0.0
    %2393 = vmatpush1.msra.mxu0 0.0
    %2394 = vmatprep.subr.mxu0 0.0
    %2395 = vmatpush1.msra.mxu0 0.0
    %2396 = vmatprep.subr.mxu0 0.0
    %2397 = vmatpush1.msra.mxu0 0.0
    %2398 = vmatprep.subr.mxu0 0.0
    %2399 = vmatpush1.msra.mxu0 0.0
    %2400 = vmatprep.subr.mxu0 %v2350
    %2401 = vmatpush1.msra.mxu0 %v2347
    %2402 = vmatprep.subr.mxu0 0.0
    %2403 = vmatpush2.msra.mxu0 0.0
    %2404 = vmatprep.subr.mxu0 0.0
    %2405 = vmatpush2.msra.mxu0 0.0
    %2406 = vmatprep.subr.mxu0 0.0
    %2407 = vmatpush2.msra.mxu0 0.0
    %2408 = vmatprep.subr.mxu0 0.0
    %2409 = vmatpush2.msra.mxu0 0.0
    %2410 = vmatprep.subr.mxu0 0.0
    %2411 = vmatpush2.msra.mxu0 0.0
    %2412 = vmatprep.subr.mxu0 0.0
    %2413 = vmatpush2.msra.mxu0 0.0
    %2414 = vmatprep.subr.mxu0 0.0
    %2415 = vmatpush2.msra.mxu0 0.0
    %2416 = vmatprep.subr.mxu0 0.0
    %2417 = vmatpush2.msra.mxu0 0.0
    %2418 = vmatprep.subr.mxu0 0.0
    %2419 = vmatpush2.msra.mxu0 0.0
    %2420 = vmatprep.subr.mxu0 0.0
    %2421 = vmatpush2.msra.mxu0 0.0
    %2422 = vmatprep.subr.mxu0 0.0
    %2423 = vmatpush2.msra.mxu0 0.0
    %2424 = vmatprep.subr.mxu0 0.0
    %2425 = vmatpush2.msra.mxu0 0.0
    %2426 = vmatprep.subr.mxu0 0.0
    %2427 = vmatpush2.msra.mxu0 0.0
    %2428 = vmatprep.subr.mxu0 0.0
    %2429 = vmatpush2.msra.mxu0 0.0
    %2430 = vmatprep.subr.mxu0 0.0
    %2431 = vmatpush2.msra.mxu0 0.0
    %2432 = vmatprep.subr.mxu0 0.0
    %2433 = vmatpush2.msra.mxu0 0.0
    %2434 = vmatprep.mubr.f32.mxu0 0.0
    %2435 = vmatmul.mubr.f32.gmra.mxu0 %v2344
    %v2436 = vpop.f32.mrf.mxu0
    %v2437 = vadd.f32 %v2340, %v2436
    %v2438 = vpop.f32.mrf.mxu0
    %v2439 = vadd.f32 %v2340, %v2438
    %2440 = vdwg.mxu0
    %2441 = vmatprep.subr.mxu0 0.0
    %2442 = vmatpush1.msra.mxu0 0.0
    %2443 = vmatprep.subr.mxu0 0.0
    %2444 = vmatpush1.msra.mxu0 0.0
    %2445 = vmatprep.subr.mxu0 0.0
    %2446 = vmatpush1.msra.mxu0 0.0
    %2447 = vmatprep.subr.mxu0 0.0
    %2448 = vmatpush1.msra.mxu0 0.0
    %2449 = vmatprep.subr.mxu0 0.0
    %2450 = vmatpush1.msra.mxu0 0.0
    %2451 = vmatprep.subr.mxu0 0.0
    %2452 = vmatpush1.msra.mxu0 0.0
    %2453 = vmatprep.subr.mxu0 0.0
    %2454 = vmatpush1.msra.mxu0 0.0
    %2455 = vmatprep.subr.mxu0 0.0
    %2456 = vmatpush1.msra.mxu0 0.0
    %2457 = vmatprep.subr.mxu0 0.0
    %2458 = vmatpush1.msra.mxu0 0.0
    %2459 = vmatprep.subr.mxu0 0.0
    %2460 = vmatpush1.msra.mxu0 0.0
    %2461 = vmatprep.subr.mxu0 0.0
    %2462 = vmatpush1.msra.mxu0 0.0
    %2463 = vmatprep.subr.mxu0 0.0
    %2464 = vmatpush1.msra.mxu0 0.0
    %2465 = vmatprep.subr.mxu0 0.0
    %2466 = vmatpush1.msra.mxu0 0.0
    %2467 = vmatprep.subr.mxu0 0.0
    %2468 = vmatpush1.msra.mxu0 0.0
    %2469 = vmatprep.subr.mxu0 0.0
    %2470 = vmatpush1.msra.mxu0 0.0
    %2471 = vmatprep.subr.mxu0 %v2356
    %2472 = vmatpush1.msra.mxu0 %v2353
    %2473 = vmatprep.subr.mxu0 0.0
    %2474 = vmatpush2.msra.mxu0 0.0
    %2475 = vmatprep.subr.mxu0 0.0
    %2476 = vmatpush2.msra.mxu0 0.0
    %2477 = vmatprep.subr.mxu0 0.0
    %2478 = vmatpush2.msra.mxu0 0.0
    %2479 = vmatprep.subr.mxu0 0.0
    %2480 = vmatpush2.msra.mxu0 0.0
    %2481 = vmatprep.subr.mxu0 0.0
    %2482 = vmatpush2.msra.mxu0 0.0
    %2483 = vmatprep.subr.mxu0 0.0
    %2484 = vmatpush2.msra.mxu0 0.0
    %2485 = vmatprep.subr.mxu0 0.0
    %2486 = vmatpush2.msra.mxu0 0.0
    %2487 = vmatprep.subr.mxu0 0.0
    %2488 = vmatpush2.msra.mxu0 0.0
    %2489 = vmatprep.subr.mxu0 0.0
    %2490 = vmatpush2.msra.mxu0 0.0
    %2491 = vmatprep.subr.mxu0 0.0
    %2492 = vmatpush2.msra.mxu0 0.0
    %2493 = vmatprep.subr.mxu0 0.0
    %2494 = vmatpush2.msra.mxu0 0.0
    %2495 = vmatprep.subr.mxu0 0.0
    %2496 = vmatpush2.msra.mxu0 0.0
    %2497 = vmatprep.subr.mxu0 0.0
    %2498 = vmatpush2.msra.mxu0 0.0
    %2499 = vmatprep.subr.mxu0 0.0
    %2500 = vmatpush2.msra.mxu0 0.0
    %2501 = vmatprep.subr.mxu0 0.0
    %2502 = vmatpush2.msra.mxu0 0.0
    %2503 = vmatprep.subr.mxu0 0.0
    %2504 = vmatpush2.msra.mxu0 0.0
    %2505 = vmatprep.mubr.f32.mxu0 0.0
    %2506 = vmatmul.mubr.f32.gmra.mxu0 %v2344
    %v2507 = vpop.f32.mrf.mxu0
    %v2508 = vadd.f32 %v2340, %v2507
    %v2509 = vpop.f32.mrf.mxu0
    %v2510 = vadd.f32 %v2340, %v2509
    %2511 = vdwg.mxu0
    %2512 = vmatprep.subr.mxu0 0.0
    %2513 = vmatpush1.msra.mxu0 0.0
    %2514 = vmatprep.subr.mxu0 0.0
    %2515 = vmatpush1.msra.mxu0 0.0
    %2516 = vmatprep.subr.mxu0 0.0
    %2517 = vmatpush1.msra.mxu0 0.0
    %2518 = vmatprep.subr.mxu0 0.0
    %2519 = vmatpush1.msra.mxu0 0.0
    %2520 = vmatprep.subr.mxu0 0.0
    %2521 = vmatpush1.msra.mxu0 0.0
    %2522 = vmatprep.subr.mxu0 0.0
    %2523 = vmatpush1.msra.mxu0 0.0
    %2524 = vmatprep.subr.mxu0 0.0
    %2525 = vmatpush1.msra.mxu0 0.0
    %2526 = vmatprep.subr.mxu0 0.0
    %2527 = vmatpush1.msra.mxu0 0.0
    %2528 = vmatprep.subr.mxu0 0.0
    %2529 = vmatpush1.msra.mxu0 0.0
    %2530 = vmatprep.subr.mxu0 0.0
    %2531 = vmatpush1.msra.mxu0 0.0
    %2532 = vmatprep.subr.mxu0 0.0
    %2533 = vmatpush1.msra.mxu0 0.0
    %2534 = vmatprep.subr.mxu0 0.0
    %2535 = vmatpush1.msra.mxu0 0.0
    %2536 = vmatprep.subr.mxu0 0.0
    %2537 = vmatpush1.msra.mxu0 0.0
    %2538 = vmatprep.subr.mxu0 0.0
    %2539 = vmatpush1.msra.mxu0 0.0
    %2540 = vmatprep.subr.mxu0 0.0
    %2541 = vmatpush1.msra.mxu0 0.0
    %2542 = vmatprep.subr.mxu0 %v2362
    %2543 = vmatpush1.msra.mxu0 %v2359
    %2544 = vmatprep.subr.mxu0 0.0
    %2545 = vmatpush2.msra.mxu0 0.0
    %2546 = vmatprep.subr.mxu0 0.0
    %2547 = vmatpush2.msra.mxu0 0.0
    %2548 = vmatprep.subr.mxu0 0.0
    %2549 = vmatpush2.msra.mxu0 0.0
    %2550 = vmatprep.subr.mxu0 0.0
    %2551 = vmatpush2.msra.mxu0 0.0
    %2552 = vmatprep.subr.mxu0 0.0
    %2553 = vmatpush2.msra.mxu0 0.0
    %2554 = vmatprep.subr.mxu0 0.0
    %2555 = vmatpush2.msra.mxu0 0.0
    %2556 = vmatprep.subr.mxu0 0.0
    %2557 = vmatpush2.msra.mxu0 0.0
    %2558 = vmatprep.subr.mxu0 0.0
    %2559 = vmatpush2.msra.mxu0 0.0
    %2560 = vmatprep.subr.mxu0 0.0
    %2561 = vmatpush2.msra.mxu0 0.0
    %2562 = vmatprep.subr.mxu0 0.0
    %2563 = vmatpush2.msra.mxu0 0.0
    %2564 = vmatprep.subr.mxu0 0.0
    %2565 = vmatpush2.msra.mxu0 0.0
    %2566 = vmatprep.subr.mxu0 0.0
    %2567 = vmatpush2.msra.mxu0 0.0
    %2568 = vmatprep.subr.mxu0 0.0
    %2569 = vmatpush2.msra.mxu0 0.0
    %2570 = vmatprep.subr.mxu0 0.0
    %2571 = vmatpush2.msra.mxu0 0.0
    %2572 = vmatprep.subr.mxu0 0.0
    %2573 = vmatpush2.msra.mxu0 0.0
    %2574 = vmatprep.subr.mxu0 0.0
    %2575 = vmatpush2.msra.mxu0 0.0
    %2576 = vmatprep.mubr.f32.mxu0 0.0
    %2577 = vmatmul.mubr.f32.gmra.mxu0 %v2344
    %v2578 = vpop.f32.mrf.mxu0
    %v2579 = vadd.f32 %v2340, %v2578
    %v2580 = vpop.f32.mrf.mxu0
    %v2581 = vadd.f32 %v2340, %v2580
    %2582 = vdwg.mxu0
    %2583 = vmatprep.subr.mxu0 0.0
    %2584 = vmatpush1.msra.mxu0 0.0
    %2585 = vmatprep.subr.mxu0 0.0
    %2586 = vmatpush1.msra.mxu0 0.0
    %2587 = vmatprep.subr.mxu0 0.0
    %2588 = vmatpush1.msra.mxu0 0.0
    %2589 = vmatprep.subr.mxu0 0.0
    %2590 = vmatpush1.msra.mxu0 0.0
    %2591 = vmatprep.subr.mxu0 0.0
    %2592 = vmatpush1.msra.mxu0 0.0
    %2593 = vmatprep.subr.mxu0 0.0
    %2594 = vmatpush1.msra.mxu0 0.0
    %2595 = vmatprep.subr.mxu0 0.0
    %2596 = vmatpush1.msra.mxu0 0.0
    %2597 = vmatprep.subr.mxu0 0.0
    %2598 = vmatpush1.msra.mxu0 0.0
    %2599 = vmatprep.subr.mxu0 0.0
    %2600 = vmatpush1.msra.mxu0 0.0
    %2601 = vmatprep.subr.mxu0 0.0
    %2602 = vmatpush1.msra.mxu0 0.0
    %2603 = vmatprep.subr.mxu0 0.0
    %2604 = vmatpush1.msra.mxu0 0.0
    %2605 = vmatprep.subr.mxu0 0.0
    %2606 = vmatpush1.msra.mxu0 0.0
    %2607 = vmatprep.subr.mxu0 0.0
    %2608 = vmatpush1.msra.mxu0 0.0
    %2609 = vmatprep.subr.mxu0 0.0
    %2610 = vmatpush1.msra.mxu0 0.0
    %2611 = vmatprep.subr.mxu0 0.0
    %2612 = vmatpush1.msra.mxu0 0.0
    %2613 = vmatprep.subr.mxu0 %v2368
    %2614 = vmatpush1.msra.mxu0 %v2365
    %2615 = vmatprep.subr.mxu0 0.0
    %2616 = vmatpush2.msra.mxu0 0.0
    %2617 = vmatprep.subr.mxu0 0.0
    %2618 = vmatpush2.msra.mxu0 0.0
    %2619 = vmatprep.subr.mxu0 0.0
    %2620 = vmatpush2.msra.mxu0 0.0
    %2621 = vmatprep.subr.mxu0 0.0
    %2622 = vmatpush2.msra.mxu0 0.0
    %2623 = vmatprep.subr.mxu0 0.0
    %2624 = vmatpush2.msra.mxu0 0.0
    %2625 = vmatprep.subr.mxu0 0.0
    %2626 = vmatpush2.msra.mxu0 0.0
    %2627 = vmatprep.subr.mxu0 0.0
    %2628 = vmatpush2.msra.mxu0 0.0
    %2629 = vmatprep.subr.mxu0 0.0
    %2630 = vmatpush2.msra.mxu0 0.0
    %2631 = vmatprep.subr.mxu0 0.0
    %2632 = vmatpush2.msra.mxu0 0.0
    %2633 = vmatprep.subr.mxu0 0.0
    %2634 = vmatpush2.msra.mxu0 0.0
    %2635 = vmatprep.subr.mxu0 0.0
    %2636 = vmatpush2.msra.mxu0 0.0
    %2637 = vmatprep.subr.mxu0 0.0
    %2638 = vmatpush2.msra.mxu0 0.0
    %2639 = vmatprep.subr.mxu0 0.0
    %2640 = vmatpush2.msra.mxu0 0.0
    %2641 = vmatprep.subr.mxu0 0.0
    %2642 = vmatpush2.msra.mxu0 0.0
    %2643 = vmatprep.subr.mxu0 0.0
    %2644 = vmatpush2.msra.mxu0 0.0
    %2645 = vmatprep.subr.mxu0 0.0
    %2646 = vmatpush2.msra.mxu0 0.0
    %2647 = vmatprep.mubr.f32.mxu0 0.0
    %2648 = vmatmul.mubr.f32.gmra.mxu0 %v2344
    %v2649 = vpop.f32.mrf.mxu0
    %v2650 = vadd.f32 %v2340, %v2649
    %v2651 = vpop.f32.mrf.mxu0
    %v2652 = vadd.f32 %v2340, %v2651
    %2653 = vdwg.mxu0
    %v2654 = vtanh.pop %v2437
    %v2655 = vtanh.pop %v2439
    %v2656 = vtanh.pop %v2508
    %v2657 = vtanh.pop %v2510
    %v2658 = vtanh.pop %v2579
    %v2659 = vtanh.pop %v2581
    %v2660 = vtanh.pop %v2650
    %v2661 = vtanh.pop %v2652
    %v2670 = vcombine.low %v2654, %v2655
    %v2671 = vcombine.low %v2656, %v2657
    %v2673 = vunpack.c.l.s4 1983009808
    %v2674 = vunpack.c.0.s8 %v2673
    %v2675 = vlaneseq
    %v2676 = vshrl.u32 %v2675, 7
    %v2677 = vsub.s32 %v2674, %v2676
    %v2678 = vrot.slane %v2670, %v2677
    %v2680 = vunpack.c.l.s4 1983009808
    %v2681 = vunpack.c.0.s8 %v2680
    %v2682 = vlaneseq
    %v2683 = vshrl.u32 %v2682, 7
    %v2684 = vsub.s32 %v2681, %v2683
    %v2685 = vrot.slane %v2671, %v2684
    %v2686 = vcombine.low %v2678, %v2685
    %v2687 = vcombine.low %v2658, %v2659
    %v2688 = vcombine.low %v2660, %v2661
    %v2690 = vunpack.c.l.s4 1983009808
    %v2691 = vunpack.c.0.s8 %v2690
    %v2692 = vlaneseq
    %v2693 = vshrl.u32 %v2692, 7
    %v2694 = vsub.s32 %v2691, %v2693
    %v2695 = vrot.slane %v2687, %v2694
    %v2697 = vunpack.c.l.s4 1983009808
    %v2698 = vunpack.c.0.s8 %v2697
    %v2699 = vlaneseq
    %v2700 = vshrl.u32 %v2699, 7
    %v2701 = vsub.s32 %v2698, %v2700
    %v2702 = vrot.slane %v2688, %v2701
    %v2703 = vcombine.low %v2695, %v2702
    %2706 = vst [vmem:[%s4] sm:$0xff] %v2686
    %2707 = vst [vmem:[%s4 + $0x8] sm:$0xff] %v2703
    // Predicated region
    $region34: #{forward.1} parent=1 // pred_check
      _
    $region35: #{forward.1} parent=1 // pred_check_branch
      %2709 = sbr.rel (0) target = $region37
    $region36: #{forward.1} parent=1 // pred_region
      _
    $region37: #{forward.1} parent=1 // pred_fallthru
      _
    // Predicated region
    $region38: #{forward.1} parent=1 // pred_check
      _
    $region39: #{forward.1} parent=1 // pred_check_branch
      %2711 = sbr.rel (0) target = $region41
    $region40: #{forward.1} parent=1 // pred_region
      _
    $region41: #{forward.1} parent=1 // pred_fallthru
      _
    %2712 = vsyncpa [#allocation3], 1
    %2713 = vsyncpa [#allocation5], 1
    %2714 = vsyncpa [#allocation8], 1

</llo_original>
